<compile_context>
chip_gen: v7x
topology: tpu7x:2x2x1
jax: 0.10.0
libtpu: 0.0.40
codegen_flags: <defaults>
</compile_context>

<pallas_src>
import functools

import jax
import jax.numpy as jnp
import numpy as np
from jax.experimental import pallas as pl
from jax.experimental.pallas import tpu as pltpu

HUMAN_SIZE = 54


def _round_up(x, m):
    return -(-x // m) * m


# ---------------------------------------------------------------------------
# Weight-slab layout (pure function of static dims) and host-side packing
# ---------------------------------------------------------------------------
def _slab_layout(num_layers: int, hidden_size: int, input_size: int):
    """Row layout of the single packed f32 weight slab (lane width = 3*H)."""
    H, I = hidden_size, input_size
    layout = {}
    row = 0

    def add(name, r, c):
        nonlocal row
        layout[name] = (row, r, c)
        row += _round_up(r, 8)          # every block starts sublane(8)-aligned

    for layer in range(num_layers):
        in_dim = I if layer == 0 else H
        add(f"wih{layer}", in_dim, 3 * H)   # (in, 3H), gate order r|z|n
        add(f"whh{layer}", H, 3 * H)        # (H, 3H)
        add(f"bgi{layer}", 1, 3 * H)        # [bih_r+bhh_r | bih_z+bhh_z | bih_n]
        add(f"bgh{layer}", 1, 3 * H)        # [0 | 0 | bhh_n]
    add("w1x", H, H)                        # dense1 weight, gru-output part
    add("w1a", I, H)                        # dense1 weight, action part
    add("b1", 1, H)
    add("w2", 1, H)                         # dense2 weight as a row (lane reduction)
    add("b2", 1, 1)
    return layout, row


def pack_params(params, *, num_layers: int, hidden_size: int, input_size: int):
    """One-time host-side packing of all weights/biases into a single f32 slab."""
    H, I = hidden_size, input_size
    layout, rows = _slab_layout(num_layers, H, I)
    slab = np.zeros((rows, 3 * H), np.float32)

    def put(name, arr):
        r0, r, c = layout[name]
        slab[r0:r0 + r, 0:c] = np.asarray(arr, np.float32).reshape(r, c)

    for layer in range(num_layers):
        bih = np.asarray(params[f"bih_l{layer}"], np.float32)
        bhh = np.asarray(params[f"bhh_l{layer}"], np.float32)
        b_gi = bih.copy()
        b_gi[:, :2 * H] += bhh[:, :2 * H]          # fold r/z hidden biases
        b_gh = np.zeros_like(bhh)
        b_gh[:, 2 * H:] = bhh[:, 2 * H:]           # bhh_n stays on the hidden projection
        put(f"wih{layer}", params[f"wih_l{layer}"])
        put(f"whh{layer}", params[f"whh_l{layer}"])
        put(f"bgi{layer}", b_gi)
        put(f"bgh{layer}", b_gh)
    w1 = np.asarray(params["w1"], np.float32)
    put("w1x", w1[:H, :])
    put("w1a", w1[H:, :])
    put("b1", params["b1"])
    put("w2", np.asarray(params["w2"], np.float32).reshape(1, H))
    put("b2", params["b2"])
    return jnp.asarray(slab)


# ---------------------------------------------------------------------------
# Kernel
# ---------------------------------------------------------------------------
def _sigmoid(x):
    # sigmoid(x) = 0.5 * tanh(0.5 * x) + 0.5  -> single EUP op
    return 0.5 * jnp.tanh(0.5 * x) + 0.5


def make_discriminator_kernel(num_layers: int, hidden_size: int, T: int, Bp: int, I: int,
                              layout):
    H = hidden_size
    M = T * Bp

    def kernel(s_ref, a_ref, w_ref, out_ref, xs_ref):
        def rd(name):
            r0, r, c = layout[name]
            return w_ref[r0:r0 + r, 0:c]

        for layer in range(num_layers):
            wih = rd(f"wih{layer}")                     # (in_dim, 3H)
            whh = rd(f"whh{layer}")                     # (H, 3H)
            bgi = rd(f"bgi{layer}")                     # (1, 3H)
            bgh = jnp.broadcast_to(rd(f"bgh{layer}"), (Bp, 3 * H))  # hoisted broadcast

            # Layer input: raw states for layer 0, previous layer's output (VMEM scratch)
            # afterwards.  Input projections for ALL timesteps in one fused MXU pass.
            x_in = s_ref[...].reshape(M, I) if layer == 0 else xs_ref[...]
            gi = jnp.dot(x_in, wih, preferred_element_type=jnp.float32) + bgi  # (M, 3H)

            # Time recurrence (h=None in PyTorch forward -> zero init). Fully unrolled;
            # only one (Bp,H) x (H,3H) recurrent dot per step remains on the serial chain.
            h = jnp.zeros((Bp, H), jnp.float32)
            for t in range(T):
                lo, hi = t * Bp, (t + 1) * Bp           # static, sublane-aligned rows
                gh = jnp.dot(h, whh, preferred_element_type=jnp.float32) + bgh
                rz = _sigmoid(gi[lo:hi, 0:2 * H] + gh[:, 0:2 * H])   # fused r|z sigmoid
                r = rz[:, 0:H]
                z = rz[:, H:2 * H]
                n = jnp.tanh(gi[lo:hi, 2 * H:3 * H] + r * gh[:, 2 * H:3 * H])
                h = (1.0 - z) * n + z * h
                xs_ref[lo:hi, :] = h                    # bound live range via VMEM scratch

        # Dense head, batched over all T*Bp rows; concat eliminated by splitting dense1.
        a_flat = a_ref[...].reshape(M, I)
        gru_out = xs_ref[...]                           # (M, H)
        d1 = (jnp.dot(gru_out, rd("w1x"), preferred_element_type=jnp.float32)
              + jnp.dot(a_flat, rd("w1a"), preferred_element_type=jnp.float32)
              + rd("b1"))
        d1 = jnp.maximum(d1, 0.0)                       # ReLU
        # dense2 has out_features = 1 -> lane reduction instead of an N=1 MXU pass.
        logits = jnp.sum(d1 * rd("w2"), axis=-1, keepdims=True) + rd("b2")  # (M, 1)
        out_ref[...] = _sigmoid(logits)

    return kernel


# ---------------------------------------------------------------------------
# Wrapper (jitted; weight packing happens once, outside this path)
# ---------------------------------------------------------------------------
@functools.partial(jax.jit, static_argnames=("num_layers", "hidden_size"))
def discriminator_forward(s, a, w_slab, *, num_layers: int, hidden_size: int):
    """s, a: (T, B, input_size) float32; w_slab from pack_params. Returns (T, B, 1)."""
    T, B, I = s.shape
    H = hidden_size

    # Pad batch (sublane) dim to a multiple of 8 so every vector op / store is full-tile.
    Bp = _round_up(max(B, 8), 8)
    if Bp != B:
        s = jnp.pad(s, ((0, 0), (0, Bp - B), (0, 0)))
        a = jnp.pad(a, ((0, 0), (0, Bp - B), (0, 0)))

    layout, _ = _slab_layout(num_layers, H, I)
    kernel = make_discriminator_kernel(num_layers, H, T, Bp, I, layout)

    # Single gridless invocation: exactly 3 operands (s, a, packed weights), all in VMEM.
    # TODO(synk): for large B add a leading "parallel" batch grid axis (v7x megacore) and
    # chunk the time axis with pltpu.emit_pipeline once (T*Bp) activations outgrow VMEM.
    out = pl.pallas_call(
        kernel,
        out_shape=jax.ShapeDtypeStruct((T * Bp, 1), jnp.float32),
        scratch_shapes=[pltpu.VMEM((T * Bp, H), jnp.float32)],
    )(s, a, w_slab)
    return out.reshape(T, Bp, 1)[:, :B, :]


# ---------------------------------------------------------------------------
# Pure-JAX reference (mirrors torch.nn.GRU + Linear semantics)
# ---------------------------------------------------------------------------
def reference_forward(s, a, params, *, num_layers: int, hidden_size: int):
    T, B, I = s.shape
    H = hidden_size
    h = jnp.zeros((num_layers, B, H), jnp.float32)
    outs = []
    for t in range(T):
        x = s[t]
        h_list = []
        for layer in range(num_layers):
            wih = params[f"wih_l{layer}"]
            whh = params[f"whh_l{layer}"]
            bih = params[f"bih_l{layer}"]
            bhh = params[f"bhh_l{layer}"]
            h_prev = h[layer]
            gi = x @ wih + bih
            gh = h_prev @ whh + bhh
            r = jax.nn.sigmoid(gi[:, 0:H] + gh[:, 0:H])
            z = jax.nn.sigmoid(gi[:, H:2 * H] + gh[:, H:2 * H])
            n = jnp.tanh(gi[:, 2 * H:3 * H] + r * gh[:, 2 * H:3 * H])
            h_new = (1.0 - z) * n + z * h_prev
            h_list.append(h_new)
            x = h_new
        h = jnp.stack(h_list, axis=0)
        p = jnp.concatenate([x, a[t]], axis=1)
        d1 = jnp.maximum(p @ params["w1"] + params["b1"], 0.0)
        outs.append(jax.nn.sigmoid(d1 @ params["w2"] + params["b2"]))
    return jnp.stack(outs, axis=0)


# ---------------------------------------------------------------------------
# Deterministic parameter construction (PyTorch-style uniform init)
# ---------------------------------------------------------------------------
def init_params(key, *, input_size: int, hidden_size: int, num_layers: int):
    H = hidden_size
    params = {}
    bound_gru = 1.0 / np.sqrt(H)

    def uni(key, shape, bound):
        return jax.random.uniform(key, shape, jnp.float32, -bound, bound)

    for layer in range(num_layers):
        in_dim = input_size if layer == 0 else H
        key, k1, k2, k3, k4 = jax.random.split(key, 5)
        # Stored transposed: (in, 3H) / (H, 3H); gate order r|z|n along the 3H axis.
        params[f"wih_l{layer}"] = uni(k1, (in_dim, 3 * H), bound_gru)
        params[f"whh_l{layer}"] = uni(k2, (H, 3 * H), bound_gru)
        params[f"bih_l{layer}"] = uni(k3, (1, 3 * H), bound_gru)
        params[f"bhh_l{layer}"] = uni(k4, (1, 3 * H), bound_gru)

    d1_in = H + input_size
    key, k1, k2, k3, k4 = jax.random.split(key, 5)
    params["w1"] = uni(k1, (d1_in, H), 1.0 / np.sqrt(d1_in))
    params["b1"] = uni(k2, (1, H), 1.0 / np.sqrt(d1_in))
    params["w2"] = uni(k3, (H, 1), 1.0 / np.sqrt(H))
    params["b2"] = uni(k4, (1, 1), 1.0 / np.sqrt(H))
    return params


# ---------------------------------------------------------------------------
if __name__ == "__main__":
    # Module config: one_hot=True, number_of_actions=10 -> input_size = 54 + 10 = 64
    one_hot = True
    number_of_actions = 10
    input_size = HUMAN_SIZE + number_of_actions if one_hot else HUMAN_SIZE
    hidden_size = 32
    num_layers = 2
    batch_size = 2
    seq_len = 8

    key = jax.random.PRNGKey(0)
    key, ks, ka, kp = jax.random.split(key, 4)
    s = jax.random.normal(ks, (seq_len, batch_size, input_size), jnp.float32)
    a = jax.random.normal(ka, (seq_len, batch_size, input_size), jnp.float32)
    params = init_params(kp, input_size=input_size, hidden_size=hidden_size,
                         num_layers=num_layers)

    # Pack weights ONCE (hoisted out of the per-call path).
    w_slab = pack_params(params, num_layers=num_layers, hidden_size=hidden_size,
                         input_size=input_size)

    prob = jax.block_until_ready(
        discriminator_forward(s, a, w_slab,
                              num_layers=num_layers, hidden_size=hidden_size))

    ref = reference_forward(s, a, params,
                            num_layers=num_layers, hidden_size=hidden_size)
    # Slightly relaxed rtol: kernel uses the tanh-form sigmoid and fused-gate matmul
    # summation order (ulp-level differences vs. the reference).
    np.testing.assert_allclose(np.asarray(prob), np.asarray(ref),
                               rtol=1e-4, atol=1e-5)

    assert prob.shape == (seq_len, batch_size, 1)
    print("KERNEL_OK")
</pallas_src>

<mosaic_0001>
module attributes {stable_mosaic.version = 11 : i64} {
  func.func @kernel(%arg0: memref<8x8x64xf32, #tpu.memory_space<vmem>>, %arg1: memref<8x8x64xf32, #tpu.memory_space<vmem>>, %arg2: memref<312x96xf32, #tpu.memory_space<vmem>>, %arg3: memref<64x1xf32, #tpu.memory_space<vmem>>, %arg4: memref<64x32xf32, #tpu.memory_space<vmem>>) attributes {dimension_semantics = [], scalar_prefetch = 0 : i64, scratch_operands = 1 : i64, tpu.core_type = #tpu.core_type<tc>} {
    %c0 = arith.constant 0 : index
    %c0_0 = arith.constant 0 : index
    %0 = vector.load %arg2[%c0, %c0_0] : memref<312x96xf32, #tpu.memory_space<vmem>>, vector<64x96xf32>
    %c64 = arith.constant 64 : index
    %c0_1 = arith.constant 0 : index
    %1 = vector.load %arg2[%c64, %c0_1] : memref<312x96xf32, #tpu.memory_space<vmem>>, vector<32x96xf32>
    %c96 = arith.constant 96 : index
    %c0_2 = arith.constant 0 : index
    %2 = vector.load %arg2[%c96, %c0_2] : memref<312x96xf32, #tpu.memory_space<vmem>>, vector<1x96xf32>
    %c104 = arith.constant 104 : index
    %c0_3 = arith.constant 0 : index
    %3 = vector.load %arg2[%c104, %c0_3] : memref<312x96xf32, #tpu.memory_space<vmem>>, vector<1x96xf32>
    %4 = vector.shape_cast %3 : vector<1x96xf32> to vector<1x96xf32>
    %5 = vector.broadcast %4 : vector<1x96xf32> to vector<8x96xf32>
    %c0_4 = arith.constant 0 : index
    %c0_5 = arith.constant 0 : index
    %c0_6 = arith.constant 0 : index
    %6 = vector.load %arg0[%c0_4, %c0_5, %c0_6] : memref<8x8x64xf32, #tpu.memory_space<vmem>>, vector<8x8x64xf32>
    %7 = vector.shape_cast %6 : vector<8x8x64xf32> to vector<64x64xf32>
    %cst = arith.constant dense<0.000000e+00> : vector<64x96xf32>
    %8 = tpu.matmul %7, %0, %cst {dimension_numbers = #tpu.dot_dimension_numbers<[1], [0], [0], [1], [0, 0, 1, 1], [], []>} : vector<64x64xf32>, vector<64x96xf32>, vector<64x96xf32> -> vector<64x96xf32>
    %9 = vector.broadcast %2 : vector<1x96xf32> to vector<64x96xf32>
    %10 = arith.addf %8, %9 : vector<64x96xf32>
    %cst_7 = arith.constant 0.000000e+00 : f32
    %11 = vector.broadcast %cst_7 : f32 to vector<8x32xf32>
    %cst_8 = arith.constant dense<0.000000e+00> : vector<8x96xf32>
    %12 = tpu.matmul %11, %1, %cst_8 {dimension_numbers = #tpu.dot_dimension_numbers<[1], [0], [0], [1], [0, 0, 1, 1], [], []>} : vector<8x32xf32>, vector<32x96xf32>, vector<8x96xf32> -> vector<8x96xf32>
    %13 = arith.addf %12, %5 : vector<8x96xf32>
    %14 = vector.extract_strided_slice %10 {offsets = [0, 0], sizes = [8, 64], strides = [1, 1]} : vector<64x96xf32> to vector<8x64xf32>
    %15 = vector.extract_strided_slice %13 {offsets = [0, 0], sizes = [8, 64], strides = [1, 1]} : vector<8x96xf32> to vector<8x64xf32>
    %16 = arith.addf %14, %15 : vector<8x64xf32>
    %cst_9 = arith.constant 5.000000e-01 : f32
    %17 = vector.broadcast %cst_9 : f32 to vector<8x64xf32>
    %18 = arith.mulf %17, %16 : vector<8x64xf32>
    %19 = math.tanh %18 : vector<8x64xf32>
    %cst_10 = arith.constant 5.000000e-01 : f32
    %20 = vector.broadcast %cst_10 : f32 to vector<8x64xf32>
    %21 = arith.mulf %20, %19 : vector<8x64xf32>
    %cst_11 = arith.constant 5.000000e-01 : f32
    %22 = vector.broadcast %cst_11 : f32 to vector<8x64xf32>
    %23 = arith.addf %21, %22 : vector<8x64xf32>
    %24 = vector.extract_strided_slice %23 {offsets = [0, 0], sizes = [8, 32], strides = [1, 1]} : vector<8x64xf32> to vector<8x32xf32>
    %25 = vector.extract_strided_slice %23 {offsets = [0, 32], sizes = [8, 32], strides = [1, 1]} : vector<8x64xf32> to vector<8x32xf32>
    %26 = vector.extract_strided_slice %10 {offsets = [0, 64], sizes = [8, 32], strides = [1, 1]} : vector<64x96xf32> to vector<8x32xf32>
    %27 = vector.extract_strided_slice %13 {offsets = [0, 64], sizes = [8, 32], strides = [1, 1]} : vector<8x96xf32> to vector<8x32xf32>
    %28 = arith.mulf %24, %27 : vector<8x32xf32>
    %29 = arith.addf %26, %28 : vector<8x32xf32>
    %30 = math.tanh %29 : vector<8x32xf32>
    %cst_12 = arith.constant 1.000000e+00 : f32
    %31 = vector.broadcast %cst_12 : f32 to vector<8x32xf32>
    %32 = arith.subf %31, %25 : vector<8x32xf32>
    %33 = arith.mulf %32, %30 : vector<8x32xf32>
    %34 = arith.mulf %25, %11 : vector<8x32xf32>
    %35 = arith.addf %33, %34 : vector<8x32xf32>
    %c0_13 = arith.constant 0 : index
    %c0_14 = arith.constant 0 : index
    %36 = vector.load %arg4[%c0_13, %c0_14] : memref<64x32xf32, #tpu.memory_space<vmem>>, vector<8x32xf32>
    tpu.vector_store %arg4[%c0_13, %c0_14], %35 {strides = array<i32>} : memref<64x32xf32, #tpu.memory_space<vmem>>, vector<8x32xf32>,
    %cst_15 = arith.constant dense<0.000000e+00> : vector<8x96xf32>
    %37 = tpu.matmul %35, %1, %cst_15 {dimension_numbers = #tpu.dot_dimension_numbers<[1], [0], [0], [1], [0, 0, 1, 1], [], []>} : vector<8x32xf32>, vector<32x96xf32>, vector<8x96xf32> -> vector<8x96xf32>
    %38 = arith.addf %37, %5 : vector<8x96xf32>
    %39 = vector.extract_strided_slice %10 {offsets = [8, 0], sizes = [8, 64], strides = [1, 1]} : vector<64x96xf32> to vector<8x64xf32>
    %40 = vector.extract_strided_slice %38 {offsets = [0, 0], sizes = [8, 64], strides = [1, 1]} : vector<8x96xf32> to vector<8x64xf32>
    %41 = arith.addf %39, %40 : vector<8x64xf32>
    %cst_16 = arith.constant 5.000000e-01 : f32
    %42 = vector.broadcast %cst_16 : f32 to vector<8x64xf32>
    %43 = arith.mulf %42, %41 : vector<8x64xf32>
    %44 = math.tanh %43 : vector<8x64xf32>
    %cst_17 = arith.constant 5.000000e-01 : f32
    %45 = vector.broadcast %cst_17 : f32 to vector<8x64xf32>
    %46 = arith.mulf %45, %44 : vector<8x64xf32>
    %cst_18 = arith.constant 5.000000e-01 : f32
    %47 = vector.broadcast %cst_18 : f32 to vector<8x64xf32>
    %48 = arith.addf %46, %47 : vector<8x64xf32>
    %49 = vector.extract_strided_slice %48 {offsets = [0, 0], sizes = [8, 32], strides = [1, 1]} : vector<8x64xf32> to vector<8x32xf32>
    %50 = vector.extract_strided_slice %48 {offsets = [0, 32], sizes = [8, 32], strides = [1, 1]} : vector<8x64xf32> to vector<8x32xf32>
    %51 = vector.extract_strided_slice %10 {offsets = [8, 64], sizes = [8, 32], strides = [1, 1]} : vector<64x96xf32> to vector<8x32xf32>
    %52 = vector.extract_strided_slice %38 {offsets = [0, 64], sizes = [8, 32], strides = [1, 1]} : vector<8x96xf32> to vector<8x32xf32>
    %53 = arith.mulf %49, %52 : vector<8x32xf32>
    %54 = arith.addf %51, %53 : vector<8x32xf32>
    %55 = math.tanh %54 : vector<8x32xf32>
    %cst_19 = arith.constant 1.000000e+00 : f32
    %56 = vector.broadcast %cst_19 : f32 to vector<8x32xf32>
    %57 = arith.subf %56, %50 : vector<8x32xf32>
    %58 = arith.mulf %57, %55 : vector<8x32xf32>
    %59 = arith.mulf %50, %35 : vector<8x32xf32>
    %60 = arith.addf %58, %59 : vector<8x32xf32>
    %c8 = arith.constant 8 : index
    %c0_20 = arith.constant 0 : index
    %61 = vector.load %arg4[%c8, %c0_20] : memref<64x32xf32, #tpu.memory_space<vmem>>, vector<8x32xf32>
    tpu.vector_store %arg4[%c8, %c0_20], %60 {strides = array<i32>} : memref<64x32xf32, #tpu.memory_space<vmem>>, vector<8x32xf32>,
    %cst_21 = arith.constant dense<0.000000e+00> : vector<8x96xf32>
    %62 = tpu.matmul %60, %1, %cst_21 {dimension_numbers = #tpu.dot_dimension_numbers<[1], [0], [0], [1], [0, 0, 1, 1], [], []>} : vector<8x32xf32>, vector<32x96xf32>, vector<8x96xf32> -> vector<8x96xf32>
    %63 = arith.addf %62, %5 : vector<8x96xf32>
    %64 = vector.extract_strided_slice %10 {offsets = [16, 0], sizes = [8, 64], strides = [1, 1]} : vector<64x96xf32> to vector<8x64xf32>
    %65 = vector.extract_strided_slice %63 {offsets = [0, 0], sizes = [8, 64], strides = [1, 1]} : vector<8x96xf32> to vector<8x64xf32>
    %66 = arith.addf %64, %65 : vector<8x64xf32>
    %cst_22 = arith.constant 5.000000e-01 : f32
    %67 = vector.broadcast %cst_22 : f32 to vector<8x64xf32>
    %68 = arith.mulf %67, %66 : vector<8x64xf32>
    %69 = math.tanh %68 : vector<8x64xf32>
    %cst_23 = arith.constant 5.000000e-01 : f32
    %70 = vector.broadcast %cst_23 : f32 to vector<8x64xf32>
    %71 = arith.mulf %70, %69 : vector<8x64xf32>
    %cst_24 = arith.constant 5.000000e-01 : f32
    %72 = vector.broadcast %cst_24 : f32 to vector<8x64xf32>
    %73 = arith.addf %71, %72 : vector<8x64xf32>
    %74 = vector.extract_strided_slice %73 {offsets = [0, 0], sizes = [8, 32], strides = [1, 1]} : vector<8x64xf32> to vector<8x32xf32>
    %75 = vector.extract_strided_slice %73 {offsets = [0, 32], sizes = [8, 32], strides = [1, 1]} : vector<8x64xf32> to vector<8x32xf32>
    %76 = vector.extract_strided_slice %10 {offsets = [16, 64], sizes = [8, 32], strides = [1, 1]} : vector<64x96xf32> to vector<8x32xf32>
    %77 = vector.extract_strided_slice %63 {offsets = [0, 64], sizes = [8, 32], strides = [1, 1]} : vector<8x96xf32> to vector<8x32xf32>
    %78 = arith.mulf %74, %77 : vector<8x32xf32>
    %79 = arith.addf %76, %78 : vector<8x32xf32>
    %80 = math.tanh %79 : vector<8x32xf32>
    %cst_25 = arith.constant 1.000000e+00 : f32
    %81 = vector.broadcast %cst_25 : f32 to vector<8x32xf32>
    %82 = arith.subf %81, %75 : vector<8x32xf32>
    %83 = arith.mulf %82, %80 : vector<8x32xf32>
    %84 = arith.mulf %75, %60 : vector<8x32xf32>
    %85 = arith.addf %83, %84 : vector<8x32xf32>
    %c16 = arith.constant 16 : index
    %c0_26 = arith.constant 0 : index
    %86 = vector.load %arg4[%c16, %c0_26] : memref<64x32xf32, #tpu.memory_space<vmem>>, vector<8x32xf32>
    tpu.vector_store %arg4[%c16, %c0_26], %85 {strides = array<i32>} : memref<64x32xf32, #tpu.memory_space<vmem>>, vector<8x32xf32>,
    %cst_27 = arith.constant dense<0.000000e+00> : vector<8x96xf32>
    %87 = tpu.matmul %85, %1, %cst_27 {dimension_numbers = #tpu.dot_dimension_numbers<[1], [0], [0], [1], [0, 0, 1, 1], [], []>} : vector<8x32xf32>, vector<32x96xf32>, vector<8x96xf32> -> vector<8x96xf32>
    %88 = arith.addf %87, %5 : vector<8x96xf32>
    %89 = vector.extract_strided_slice %10 {offsets = [24, 0], sizes = [8, 64], strides = [1, 1]} : vector<64x96xf32> to vector<8x64xf32>
    %90 = vector.extract_strided_slice %88 {offsets = [0, 0], sizes = [8, 64], strides = [1, 1]} : vector<8x96xf32> to vector<8x64xf32>
    %91 = arith.addf %89, %90 : vector<8x64xf32>
    %cst_28 = arith.constant 5.000000e-01 : f32
    %92 = vector.broadcast %cst_28 : f32 to vector<8x64xf32>
    %93 = arith.mulf %92, %91 : vector<8x64xf32>
    %94 = math.tanh %93 : vector<8x64xf32>
    %cst_29 = arith.constant 5.000000e-01 : f32
    %95 = vector.broadcast %cst_29 : f32 to vector<8x64xf32>
    %96 = arith.mulf %95, %94 : vector<8x64xf32>
    %cst_30 = arith.constant 5.000000e-01 : f32
    %97 = vector.broadcast %cst_30 : f32 to vector<8x64xf32>
    %98 = arith.addf %96, %97 : vector<8x64xf32>
    %99 = vector.extract_strided_slice %98 {offsets = [0, 0], sizes = [8, 32], strides = [1, 1]} : vector<8x64xf32> to vector<8x32xf32>
    %100 = vector.extract_strided_slice %98 {offsets = [0, 32], sizes = [8, 32], strides = [1, 1]} : vector<8x64xf32> to vector<8x32xf32>
    %101 = vector.extract_strided_slice %10 {offsets = [24, 64], sizes = [8, 32], strides = [1, 1]} : vector<64x96xf32> to vector<8x32xf32>
    %102 = vector.extract_strided_slice %88 {offsets = [0, 64], sizes = [8, 32], strides = [1, 1]} : vector<8x96xf32> to vector<8x32xf32>
    %103 = arith.mulf %99, %102 : vector<8x32xf32>
    %104 = arith.addf %101, %103 : vector<8x32xf32>
    %105 = math.tanh %104 : vector<8x32xf32>
    %cst_31 = arith.constant 1.000000e+00 : f32
    %106 = vector.broadcast %cst_31 : f32 to vector<8x32xf32>
    %107 = arith.subf %106, %100 : vector<8x32xf32>
    %108 = arith.mulf %107, %105 : vector<8x32xf32>
    %109 = arith.mulf %100, %85 : vector<8x32xf32>
    %110 = arith.addf %108, %109 : vector<8x32xf32>
    %c24 = arith.constant 24 : index
    %c0_32 = arith.constant 0 : index
    %111 = vector.load %arg4[%c24, %c0_32] : memref<64x32xf32, #tpu.memory_space<vmem>>, vector<8x32xf32>
    tpu.vector_store %arg4[%c24, %c0_32], %110 {strides = array<i32>} : memref<64x32xf32, #tpu.memory_space<vmem>>, vector<8x32xf32>,
    %cst_33 = arith.constant dense<0.000000e+00> : vector<8x96xf32>
    %112 = tpu.matmul %110, %1, %cst_33 {dimension_numbers = #tpu.dot_dimension_numbers<[1], [0], [0], [1], [0, 0, 1, 1], [], []>} : vector<8x32xf32>, vector<32x96xf32>, vector<8x96xf32> -> vector<8x96xf32>
    %113 = arith.addf %112, %5 : vector<8x96xf32>
    %114 = vector.extract_strided_slice %10 {offsets = [32, 0], sizes = [8, 64], strides = [1, 1]} : vector<64x96xf32> to vector<8x64xf32>
    %115 = vector.extract_strided_slice %113 {offsets = [0, 0], sizes = [8, 64], strides = [1, 1]} : vector<8x96xf32> to vector<8x64xf32>
    %116 = arith.addf %114, %115 : vector<8x64xf32>
    %cst_34 = arith.constant 5.000000e-01 : f32
    %117 = vector.broadcast %cst_34 : f32 to vector<8x64xf32>
    %118 = arith.mulf %117, %116 : vector<8x64xf32>
    %119 = math.tanh %118 : vector<8x64xf32>
    %cst_35 = arith.constant 5.000000e-01 : f32
    %120 = vector.broadcast %cst_35 : f32 to vector<8x64xf32>
    %121 = arith.mulf %120, %119 : vector<8x64xf32>
    %cst_36 = arith.constant 5.000000e-01 : f32
    %122 = vector.broadcast %cst_36 : f32 to vector<8x64xf32>
    %123 = arith.addf %121, %122 : vector<8x64xf32>
    %124 = vector.extract_strided_slice %123 {offsets = [0, 0], sizes = [8, 32], strides = [1, 1]} : vector<8x64xf32> to vector<8x32xf32>
    %125 = vector.extract_strided_slice %123 {offsets = [0, 32], sizes = [8, 32], strides = [1, 1]} : vector<8x64xf32> to vector<8x32xf32>
    %126 = vector.extract_strided_slice %10 {offsets = [32, 64], sizes = [8, 32], strides = [1, 1]} : vector<64x96xf32> to vector<8x32xf32>
    %127 = vector.extract_strided_slice %113 {offsets = [0, 64], sizes = [8, 32], strides = [1, 1]} : vector<8x96xf32> to vector<8x32xf32>
    %128 = arith.mulf %124, %127 : vector<8x32xf32>
    %129 = arith.addf %126, %128 : vector<8x32xf32>
    %130 = math.tanh %129 : vector<8x32xf32>
    %cst_37 = arith.constant 1.000000e+00 : f32
    %131 = vector.broadcast %cst_37 : f32 to vector<8x32xf32>
    %132 = arith.subf %131, %125 : vector<8x32xf32>
    %133 = arith.mulf %132, %130 : vector<8x32xf32>
    %134 = arith.mulf %125, %110 : vector<8x32xf32>
    %135 = arith.addf %133, %134 : vector<8x32xf32>
    %c32 = arith.constant 32 : index
    %c0_38 = arith.constant 0 : index
    %136 = vector.load %arg4[%c32, %c0_38] : memref<64x32xf32, #tpu.memory_space<vmem>>, vector<8x32xf32>
    tpu.vector_store %arg4[%c32, %c0_38], %135 {strides = array<i32>} : memref<64x32xf32, #tpu.memory_space<vmem>>, vector<8x32xf32>,
    %cst_39 = arith.constant dense<0.000000e+00> : vector<8x96xf32>
    %137 = tpu.matmul %135, %1, %cst_39 {dimension_numbers = #tpu.dot_dimension_numbers<[1], [0], [0], [1], [0, 0, 1, 1], [], []>} : vector<8x32xf32>, vector<32x96xf32>, vector<8x96xf32> -> vector<8x96xf32>
    %138 = arith.addf %137, %5 : vector<8x96xf32>
    %139 = vector.extract_strided_slice %10 {offsets = [40, 0], sizes = [8, 64], strides = [1, 1]} : vector<64x96xf32> to vector<8x64xf32>
    %140 = vector.extract_strided_slice %138 {offsets = [0, 0], sizes = [8, 64], strides = [1, 1]} : vector<8x96xf32> to vector<8x64xf32>
    %141 = arith.addf %139, %140 : vector<8x64xf32>
    %cst_40 = arith.constant 5.000000e-01 : f32
    %142 = vector.broadcast %cst_40 : f32 to vector<8x64xf32>
    %143 = arith.mulf %142, %141 : vector<8x64xf32>
    %144 = math.tanh %143 : vector<8x64xf32>
    %cst_41 = arith.constant 5.000000e-01 : f32
    %145 = vector.broadcast %cst_41 : f32 to vector<8x64xf32>
    %146 = arith.mulf %145, %144 : vector<8x64xf32>
    %cst_42 = arith.constant 5.000000e-01 : f32
    %147 = vector.broadcast %cst_42 : f32 to vector<8x64xf32>
    %148 = arith.addf %146, %147 : vector<8x64xf32>
    %149 = vector.extract_strided_slice %148 {offsets = [0, 0], sizes = [8, 32], strides = [1, 1]} : vector<8x64xf32> to vector<8x32xf32>
    %150 = vector.extract_strided_slice %148 {offsets = [0, 32], sizes = [8, 32], strides = [1, 1]} : vector<8x64xf32> to vector<8x32xf32>
    %151 = vector.extract_strided_slice %10 {offsets = [40, 64], sizes = [8, 32], strides = [1, 1]} : vector<64x96xf32> to vector<8x32xf32>
    %152 = vector.extract_strided_slice %138 {offsets = [0, 64], sizes = [8, 32], strides = [1, 1]} : vector<8x96xf32> to vector<8x32xf32>
    %153 = arith.mulf %149, %152 : vector<8x32xf32>
    %154 = arith.addf %151, %153 : vector<8x32xf32>
    %155 = math.tanh %154 : vector<8x32xf32>
    %cst_43 = arith.constant 1.000000e+00 : f32
    %156 = vector.broadcast %cst_43 : f32 to vector<8x32xf32>
    %157 = arith.subf %156, %150 : vector<8x32xf32>
    %158 = arith.mulf %157, %155 : vector<8x32xf32>
    %159 = arith.mulf %150, %135 : vector<8x32xf32>
    %160 = arith.addf %158, %159 : vector<8x32xf32>
    %c40 = arith.constant 40 : index
    %c0_44 = arith.constant 0 : index
    %161 = vector.load %arg4[%c40, %c0_44] : memref<64x32xf32, #tpu.memory_space<vmem>>, vector<8x32xf32>
    tpu.vector_store %arg4[%c40, %c0_44], %160 {strides = array<i32>} : memref<64x32xf32, #tpu.memory_space<vmem>>, vector<8x32xf32>,
    %cst_45 = arith.constant dense<0.000000e+00> : vector<8x96xf32>
    %162 = tpu.matmul %160, %1, %cst_45 {dimension_numbers = #tpu.dot_dimension_numbers<[1], [0], [0], [1], [0, 0, 1, 1], [], []>} : vector<8x32xf32>, vector<32x96xf32>, vector<8x96xf32> -> vector<8x96xf32>
    %163 = arith.addf %162, %5 : vector<8x96xf32>
    %164 = vector.extract_strided_slice %10 {offsets = [48, 0], sizes = [8, 64], strides = [1, 1]} : vector<64x96xf32> to vector<8x64xf32>
    %165 = vector.extract_strided_slice %163 {offsets = [0, 0], sizes = [8, 64], strides = [1, 1]} : vector<8x96xf32> to vector<8x64xf32>
    %166 = arith.addf %164, %165 : vector<8x64xf32>
    %cst_46 = arith.constant 5.000000e-01 : f32
    %167 = vector.broadcast %cst_46 : f32 to vector<8x64xf32>
    %168 = arith.mulf %167, %166 : vector<8x64xf32>
    %169 = math.tanh %168 : vector<8x64xf32>
    %cst_47 = arith.constant 5.000000e-01 : f32
    %170 = vector.broadcast %cst_47 : f32 to vector<8x64xf32>
    %171 = arith.mulf %170, %169 : vector<8x64xf32>
    %cst_48 = arith.constant 5.000000e-01 : f32
    %172 = vector.broadcast %cst_48 : f32 to vector<8x64xf32>
    %173 = arith.addf %171, %172 : vector<8x64xf32>
    %174 = vector.extract_strided_slice %173 {offsets = [0, 0], sizes = [8, 32], strides = [1, 1]} : vector<8x64xf32> to vector<8x32xf32>
    %175 = vector.extract_strided_slice %173 {offsets = [0, 32], sizes = [8, 32], strides = [1, 1]} : vector<8x64xf32> to vector<8x32xf32>
    %176 = vector.extract_strided_slice %10 {offsets = [48, 64], sizes = [8, 32], strides = [1, 1]} : vector<64x96xf32> to vector<8x32xf32>
    %177 = vector.extract_strided_slice %163 {offsets = [0, 64], sizes = [8, 32], strides = [1, 1]} : vector<8x96xf32> to vector<8x32xf32>
    %178 = arith.mulf %174, %177 : vector<8x32xf32>
    %179 = arith.addf %176, %178 : vector<8x32xf32>
    %180 = math.tanh %179 : vector<8x32xf32>
    %cst_49 = arith.constant 1.000000e+00 : f32
    %181 = vector.broadcast %cst_49 : f32 to vector<8x32xf32>
    %182 = arith.subf %181, %175 : vector<8x32xf32>
    %183 = arith.mulf %182, %180 : vector<8x32xf32>
    %184 = arith.mulf %175, %160 : vector<8x32xf32>
    %185 = arith.addf %183, %184 : vector<8x32xf32>
    %c48 = arith.constant 48 : index
    %c0_50 = arith.constant 0 : index
    %186 = vector.load %arg4[%c48, %c0_50] : memref<64x32xf32, #tpu.memory_space<vmem>>, vector<8x32xf32>
    tpu.vector_store %arg4[%c48, %c0_50], %185 {strides = array<i32>} : memref<64x32xf32, #tpu.memory_space<vmem>>, vector<8x32xf32>,
    %cst_51 = arith.constant dense<0.000000e+00> : vector<8x96xf32>
    %187 = tpu.matmul %185, %1, %cst_51 {dimension_numbers = #tpu.dot_dimension_numbers<[1], [0], [0], [1], [0, 0, 1, 1], [], []>} : vector<8x32xf32>, vector<32x96xf32>, vector<8x96xf32> -> vector<8x96xf32>
    %188 = arith.addf %187, %5 : vector<8x96xf32>
    %189 = vector.extract_strided_slice %10 {offsets = [56, 0], sizes = [8, 64], strides = [1, 1]} : vector<64x96xf32> to vector<8x64xf32>
    %190 = vector.extract_strided_slice %188 {offsets = [0, 0], sizes = [8, 64], strides = [1, 1]} : vector<8x96xf32> to vector<8x64xf32>
    %191 = arith.addf %189, %190 : vector<8x64xf32>
    %cst_52 = arith.constant 5.000000e-01 : f32
    %192 = vector.broadcast %cst_52 : f32 to vector<8x64xf32>
    %193 = arith.mulf %192, %191 : vector<8x64xf32>
    %194 = math.tanh %193 : vector<8x64xf32>
    %cst_53 = arith.constant 5.000000e-01 : f32
    %195 = vector.broadcast %cst_53 : f32 to vector<8x64xf32>
    %196 = arith.mulf %195, %194 : vector<8x64xf32>
    %cst_54 = arith.constant 5.000000e-01 : f32
    %197 = vector.broadcast %cst_54 : f32 to vector<8x64xf32>
    %198 = arith.addf %196, %197 : vector<8x64xf32>
    %199 = vector.extract_strided_slice %198 {offsets = [0, 0], sizes = [8, 32], strides = [1, 1]} : vector<8x64xf32> to vector<8x32xf32>
    %200 = vector.extract_strided_slice %198 {offsets = [0, 32], sizes = [8, 32], strides = [1, 1]} : vector<8x64xf32> to vector<8x32xf32>
    %201 = vector.extract_strided_slice %10 {offsets = [56, 64], sizes = [8, 32], strides = [1, 1]} : vector<64x96xf32> to vector<8x32xf32>
    %202 = vector.extract_strided_slice %188 {offsets = [0, 64], sizes = [8, 32], strides = [1, 1]} : vector<8x96xf32> to vector<8x32xf32>
    %203 = arith.mulf %199, %202 : vector<8x32xf32>
    %204 = arith.addf %201, %203 : vector<8x32xf32>
    %205 = math.tanh %204 : vector<8x32xf32>
    %cst_55 = arith.constant 1.000000e+00 : f32
    %206 = vector.broadcast %cst_55 : f32 to vector<8x32xf32>
    %207 = arith.subf %206, %200 : vector<8x32xf32>
    %208 = arith.mulf %207, %205 : vector<8x32xf32>
    %209 = arith.mulf %200, %185 : vector<8x32xf32>
    %210 = arith.addf %208, %209 : vector<8x32xf32>
    %c56 = arith.constant 56 : index
    %c0_56 = arith.constant 0 : index
    %211 = vector.load %arg4[%c56, %c0_56] : memref<64x32xf32, #tpu.memory_space<vmem>>, vector<8x32xf32>
    tpu.vector_store %arg4[%c56, %c0_56], %210 {strides = array<i32>} : memref<64x32xf32, #tpu.memory_space<vmem>>, vector<8x32xf32>,
    %c112 = arith.constant 112 : index
    %c0_57 = arith.constant 0 : index
    %212 = vector.load %arg2[%c112, %c0_57] : memref<312x96xf32, #tpu.memory_space<vmem>>, vector<32x96xf32>
    %c144 = arith.constant 144 : index
    %c0_58 = arith.constant 0 : index
    %213 = vector.load %arg2[%c144, %c0_58] : memref<312x96xf32, #tpu.memory_space<vmem>>, vector<32x96xf32>
    %c176 = arith.constant 176 : index
    %c0_59 = arith.constant 0 : index
    %214 = vector.load %arg2[%c176, %c0_59] : memref<312x96xf32, #tpu.memory_space<vmem>>, vector<1x96xf32>
    %c184 = arith.constant 184 : index
    %c0_60 = arith.constant 0 : index
    %215 = vector.load %arg2[%c184, %c0_60] : memref<312x96xf32, #tpu.memory_space<vmem>>, vector<1x96xf32>
    %216 = vector.shape_cast %215 : vector<1x96xf32> to vector<1x96xf32>
    %217 = vector.broadcast %216 : vector<1x96xf32> to vector<8x96xf32>
    %c0_61 = arith.constant 0 : index
    %c0_62 = arith.constant 0 : index
    %218 = vector.load %arg4[%c0_61, %c0_62] : memref<64x32xf32, #tpu.memory_space<vmem>>, vector<64x32xf32>
    %cst_63 = arith.constant dense<0.000000e+00> : vector<64x96xf32>
    %219 = tpu.matmul %218, %212, %cst_63 {dimension_numbers = #tpu.dot_dimension_numbers<[1], [0], [0], [1], [0, 0, 1, 1], [], []>} : vector<64x32xf32>, vector<32x96xf32>, vector<64x96xf32> -> vector<64x96xf32>
    %220 = vector.broadcast %214 : vector<1x96xf32> to vector<64x96xf32>
    %221 = arith.addf %219, %220 : vector<64x96xf32>
    %cst_64 = arith.constant 0.000000e+00 : f32
    %222 = vector.broadcast %cst_64 : f32 to vector<8x32xf32>
    %cst_65 = arith.constant dense<0.000000e+00> : vector<8x96xf32>
    %223 = tpu.matmul %222, %213, %cst_65 {dimension_numbers = #tpu.dot_dimension_numbers<[1], [0], [0], [1], [0, 0, 1, 1], [], []>} : vector<8x32xf32>, vector<32x96xf32>, vector<8x96xf32> -> vector<8x96xf32>
    %224 = arith.addf %223, %217 : vector<8x96xf32>
    %225 = vector.extract_strided_slice %221 {offsets = [0, 0], sizes = [8, 64], strides = [1, 1]} : vector<64x96xf32> to vector<8x64xf32>
    %226 = vector.extract_strided_slice %224 {offsets = [0, 0], sizes = [8, 64], strides = [1, 1]} : vector<8x96xf32> to vector<8x64xf32>
    %227 = arith.addf %225, %226 : vector<8x64xf32>
    %cst_66 = arith.constant 5.000000e-01 : f32
    %228 = vector.broadcast %cst_66 : f32 to vector<8x64xf32>
    %229 = arith.mulf %228, %227 : vector<8x64xf32>
    %230 = math.tanh %229 : vector<8x64xf32>
    %cst_67 = arith.constant 5.000000e-01 : f32
    %231 = vector.broadcast %cst_67 : f32 to vector<8x64xf32>
    %232 = arith.mulf %231, %230 : vector<8x64xf32>
    %cst_68 = arith.constant 5.000000e-01 : f32
    %233 = vector.broadcast %cst_68 : f32 to vector<8x64xf32>
    %234 = arith.addf %232, %233 : vector<8x64xf32>
    %235 = vector.extract_strided_slice %234 {offsets = [0, 0], sizes = [8, 32], strides = [1, 1]} : vector<8x64xf32> to vector<8x32xf32>
    %236 = vector.extract_strided_slice %234 {offsets = [0, 32], sizes = [8, 32], strides = [1, 1]} : vector<8x64xf32> to vector<8x32xf32>
    %237 = vector.extract_strided_slice %221 {offsets = [0, 64], sizes = [8, 32], strides = [1, 1]} : vector<64x96xf32> to vector<8x32xf32>
    %238 = vector.extract_strided_slice %224 {offsets = [0, 64], sizes = [8, 32], strides = [1, 1]} : vector<8x96xf32> to vector<8x32xf32>
    %239 = arith.mulf %235, %238 : vector<8x32xf32>
    %240 = arith.addf %237, %239 : vector<8x32xf32>
    %241 = math.tanh %240 : vector<8x32xf32>
    %cst_69 = arith.constant 1.000000e+00 : f32
    %242 = vector.broadcast %cst_69 : f32 to vector<8x32xf32>
    %243 = arith.subf %242, %236 : vector<8x32xf32>
    %244 = arith.mulf %243, %241 : vector<8x32xf32>
    %245 = arith.mulf %236, %222 : vector<8x32xf32>
    %246 = arith.addf %244, %245 : vector<8x32xf32>
    %c0_70 = arith.constant 0 : index
    %c0_71 = arith.constant 0 : index
    %247 = vector.load %arg4[%c0_70, %c0_71] : memref<64x32xf32, #tpu.memory_space<vmem>>, vector<8x32xf32>
    tpu.vector_store %arg4[%c0_70, %c0_71], %246 {strides = array<i32>} : memref<64x32xf32, #tpu.memory_space<vmem>>, vector<8x32xf32>,
    %cst_72 = arith.constant dense<0.000000e+00> : vector<8x96xf32>
    %248 = tpu.matmul %246, %213, %cst_72 {dimension_numbers = #tpu.dot_dimension_numbers<[1], [0], [0], [1], [0, 0, 1, 1], [], []>} : vector<8x32xf32>, vector<32x96xf32>, vector<8x96xf32> -> vector<8x96xf32>
    %249 = arith.addf %248, %217 : vector<8x96xf32>
    %250 = vector.extract_strided_slice %221 {offsets = [8, 0], sizes = [8, 64], strides = [1, 1]} : vector<64x96xf32> to vector<8x64xf32>
    %251 = vector.extract_strided_slice %249 {offsets = [0, 0], sizes = [8, 64], strides = [1, 1]} : vector<8x96xf32> to vector<8x64xf32>
    %252 = arith.addf %250, %251 : vector<8x64xf32>
    %cst_73 = arith.constant 5.000000e-01 : f32
    %253 = vector.broadcast %cst_73 : f32 to vector<8x64xf32>
    %254 = arith.mulf %253, %252 : vector<8x64xf32>
    %255 = math.tanh %254 : vector<8x64xf32>
    %cst_74 = arith.constant 5.000000e-01 : f32
    %256 = vector.broadcast %cst_74 : f32 to vector<8x64xf32>
    %257 = arith.mulf %256, %255 : vector<8x64xf32>
    %cst_75 = arith.constant 5.000000e-01 : f32
    %258 = vector.broadcast %cst_75 : f32 to vector<8x64xf32>
    %259 = arith.addf %257, %258 : vector<8x64xf32>
    %260 = vector.extract_strided_slice %259 {offsets = [0, 0], sizes = [8, 32], strides = [1, 1]} : vector<8x64xf32> to vector<8x32xf32>
    %261 = vector.extract_strided_slice %259 {offsets = [0, 32], sizes = [8, 32], strides = [1, 1]} : vector<8x64xf32> to vector<8x32xf32>
    %262 = vector.extract_strided_slice %221 {offsets = [8, 64], sizes = [8, 32], strides = [1, 1]} : vector<64x96xf32> to vector<8x32xf32>
    %263 = vector.extract_strided_slice %249 {offsets = [0, 64], sizes = [8, 32], strides = [1, 1]} : vector<8x96xf32> to vector<8x32xf32>
    %264 = arith.mulf %260, %263 : vector<8x32xf32>
    %265 = arith.addf %262, %264 : vector<8x32xf32>
    %266 = math.tanh %265 : vector<8x32xf32>
    %cst_76 = arith.constant 1.000000e+00 : f32
    %267 = vector.broadcast %cst_76 : f32 to vector<8x32xf32>
    %268 = arith.subf %267, %261 : vector<8x32xf32>
    %269 = arith.mulf %268, %266 : vector<8x32xf32>
    %270 = arith.mulf %261, %246 : vector<8x32xf32>
    %271 = arith.addf %269, %270 : vector<8x32xf32>
    %c8_77 = arith.constant 8 : index
    %c0_78 = arith.constant 0 : index
    %272 = vector.load %arg4[%c8_77, %c0_78] : memref<64x32xf32, #tpu.memory_space<vmem>>, vector<8x32xf32>
    tpu.vector_store %arg4[%c8_77, %c0_78], %271 {strides = array<i32>} : memref<64x32xf32, #tpu.memory_space<vmem>>, vector<8x32xf32>,
    %cst_79 = arith.constant dense<0.000000e+00> : vector<8x96xf32>
    %273 = tpu.matmul %271, %213, %cst_79 {dimension_numbers = #tpu.dot_dimension_numbers<[1], [0], [0], [1], [0, 0, 1, 1], [], []>} : vector<8x32xf32>, vector<32x96xf32>, vector<8x96xf32> -> vector<8x96xf32>
    %274 = arith.addf %273, %217 : vector<8x96xf32>
    %275 = vector.extract_strided_slice %221 {offsets = [16, 0], sizes = [8, 64], strides = [1, 1]} : vector<64x96xf32> to vector<8x64xf32>
    %276 = vector.extract_strided_slice %274 {offsets = [0, 0], sizes = [8, 64], strides = [1, 1]} : vector<8x96xf32> to vector<8x64xf32>
    %277 = arith.addf %275, %276 : vector<8x64xf32>
    %cst_80 = arith.constant 5.000000e-01 : f32
    %278 = vector.broadcast %cst_80 : f32 to vector<8x64xf32>
    %279 = arith.mulf %278, %277 : vector<8x64xf32>
    %280 = math.tanh %279 : vector<8x64xf32>
    %cst_81 = arith.constant 5.000000e-01 : f32
    %281 = vector.broadcast %cst_81 : f32 to vector<8x64xf32>
    %282 = arith.mulf %281, %280 : vector<8x64xf32>
    %cst_82 = arith.constant 5.000000e-01 : f32
    %283 = vector.broadcast %cst_82 : f32 to vector<8x64xf32>
    %284 = arith.addf %282, %283 : vector<8x64xf32>
    %285 = vector.extract_strided_slice %284 {offsets = [0, 0], sizes = [8, 32], strides = [1, 1]} : vector<8x64xf32> to vector<8x32xf32>
    %286 = vector.extract_strided_slice %284 {offsets = [0, 32], sizes = [8, 32], strides = [1, 1]} : vector<8x64xf32> to vector<8x32xf32>
    %287 = vector.extract_strided_slice %221 {offsets = [16, 64], sizes = [8, 32], strides = [1, 1]} : vector<64x96xf32> to vector<8x32xf32>
    %288 = vector.extract_strided_slice %274 {offsets = [0, 64], sizes = [8, 32], strides = [1, 1]} : vector<8x96xf32> to vector<8x32xf32>
    %289 = arith.mulf %285, %288 : vector<8x32xf32>
    %290 = arith.addf %287, %289 : vector<8x32xf32>
    %291 = math.tanh %290 : vector<8x32xf32>
    %cst_83 = arith.constant 1.000000e+00 : f32
    %292 = vector.broadcast %cst_83 : f32 to vector<8x32xf32>
    %293 = arith.subf %292, %286 : vector<8x32xf32>
    %294 = arith.mulf %293, %291 : vector<8x32xf32>
    %295 = arith.mulf %286, %271 : vector<8x32xf32>
    %296 = arith.addf %294, %295 : vector<8x32xf32>
    %c16_84 = arith.constant 16 : index
    %c0_85 = arith.constant 0 : index
    %297 = vector.load %arg4[%c16_84, %c0_85] : memref<64x32xf32, #tpu.memory_space<vmem>>, vector<8x32xf32>
    tpu.vector_store %arg4[%c16_84, %c0_85], %296 {strides = array<i32>} : memref<64x32xf32, #tpu.memory_space<vmem>>, vector<8x32xf32>,
    %cst_86 = arith.constant dense<0.000000e+00> : vector<8x96xf32>
    %298 = tpu.matmul %296, %213, %cst_86 {dimension_numbers = #tpu.dot_dimension_numbers<[1], [0], [0], [1], [0, 0, 1, 1], [], []>} : vector<8x32xf32>, vector<32x96xf32>, vector<8x96xf32> -> vector<8x96xf32>
    %299 = arith.addf %298, %217 : vector<8x96xf32>
    %300 = vector.extract_strided_slice %221 {offsets = [24, 0], sizes = [8, 64], strides = [1, 1]} : vector<64x96xf32> to vector<8x64xf32>
    %301 = vector.extract_strided_slice %299 {offsets = [0, 0], sizes = [8, 64], strides = [1, 1]} : vector<8x96xf32> to vector<8x64xf32>
    %302 = arith.addf %300, %301 : vector<8x64xf32>
    %cst_87 = arith.constant 5.000000e-01 : f32
    %303 = vector.broadcast %cst_87 : f32 to vector<8x64xf32>
    %304 = arith.mulf %303, %302 : vector<8x64xf32>
    %305 = math.tanh %304 : vector<8x64xf32>
    %cst_88 = arith.constant 5.000000e-01 : f32
    %306 = vector.broadcast %cst_88 : f32 to vector<8x64xf32>
    %307 = arith.mulf %306, %305 : vector<8x64xf32>
    %cst_89 = arith.constant 5.000000e-01 : f32
    %308 = vector.broadcast %cst_89 : f32 to vector<8x64xf32>
    %309 = arith.addf %307, %308 : vector<8x64xf32>
    %310 = vector.extract_strided_slice %309 {offsets = [0, 0], sizes = [8, 32], strides = [1, 1]} : vector<8x64xf32> to vector<8x32xf32>
    %311 = vector.extract_strided_slice %309 {offsets = [0, 32], sizes = [8, 32], strides = [1, 1]} : vector<8x64xf32> to vector<8x32xf32>
    %312 = vector.extract_strided_slice %221 {offsets = [24, 64], sizes = [8, 32], strides = [1, 1]} : vector<64x96xf32> to vector<8x32xf32>
    %313 = vector.extract_strided_slice %299 {offsets = [0, 64], sizes = [8, 32], strides = [1, 1]} : vector<8x96xf32> to vector<8x32xf32>
    %314 = arith.mulf %310, %313 : vector<8x32xf32>
    %315 = arith.addf %312, %314 : vector<8x32xf32>
    %316 = math.tanh %315 : vector<8x32xf32>
    %cst_90 = arith.constant 1.000000e+00 : f32
    %317 = vector.broadcast %cst_90 : f32 to vector<8x32xf32>
    %318 = arith.subf %317, %311 : vector<8x32xf32>
    %319 = arith.mulf %318, %316 : vector<8x32xf32>
    %320 = arith.mulf %311, %296 : vector<8x32xf32>
    %321 = arith.addf %319, %320 : vector<8x32xf32>
    %c24_91 = arith.constant 24 : index
    %c0_92 = arith.constant 0 : index
    %322 = vector.load %arg4[%c24_91, %c0_92] : memref<64x32xf32, #tpu.memory_space<vmem>>, vector<8x32xf32>
    tpu.vector_store %arg4[%c24_91, %c0_92], %321 {strides = array<i32>} : memref<64x32xf32, #tpu.memory_space<vmem>>, vector<8x32xf32>,
    %cst_93 = arith.constant dense<0.000000e+00> : vector<8x96xf32>
    %323 = tpu.matmul %321, %213, %cst_93 {dimension_numbers = #tpu.dot_dimension_numbers<[1], [0], [0], [1], [0, 0, 1, 1], [], []>} : vector<8x32xf32>, vector<32x96xf32>, vector<8x96xf32> -> vector<8x96xf32>
    %324 = arith.addf %323, %217 : vector<8x96xf32>
    %325 = vector.extract_strided_slice %221 {offsets = [32, 0], sizes = [8, 64], strides = [1, 1]} : vector<64x96xf32> to vector<8x64xf32>
    %326 = vector.extract_strided_slice %324 {offsets = [0, 0], sizes = [8, 64], strides = [1, 1]} : vector<8x96xf32> to vector<8x64xf32>
    %327 = arith.addf %325, %326 : vector<8x64xf32>
    %cst_94 = arith.constant 5.000000e-01 : f32
    %328 = vector.broadcast %cst_94 : f32 to vector<8x64xf32>
    %329 = arith.mulf %328, %327 : vector<8x64xf32>
    %330 = math.tanh %329 : vector<8x64xf32>
    %cst_95 = arith.constant 5.000000e-01 : f32
    %331 = vector.broadcast %cst_95 : f32 to vector<8x64xf32>
    %332 = arith.mulf %331, %330 : vector<8x64xf32>
    %cst_96 = arith.constant 5.000000e-01 : f32
    %333 = vector.broadcast %cst_96 : f32 to vector<8x64xf32>
    %334 = arith.addf %332, %333 : vector<8x64xf32>
    %335 = vector.extract_strided_slice %334 {offsets = [0, 0], sizes = [8, 32], strides = [1, 1]} : vector<8x64xf32> to vector<8x32xf32>
    %336 = vector.extract_strided_slice %334 {offsets = [0, 32], sizes = [8, 32], strides = [1, 1]} : vector<8x64xf32> to vector<8x32xf32>
    %337 = vector.extract_strided_slice %221 {offsets = [32, 64], sizes = [8, 32], strides = [1, 1]} : vector<64x96xf32> to vector<8x32xf32>
    %338 = vector.extract_strided_slice %324 {offsets = [0, 64], sizes = [8, 32], strides = [1, 1]} : vector<8x96xf32> to vector<8x32xf32>
    %339 = arith.mulf %335, %338 : vector<8x32xf32>
    %340 = arith.addf %337, %339 : vector<8x32xf32>
    %341 = math.tanh %340 : vector<8x32xf32>
    %cst_97 = arith.constant 1.000000e+00 : f32
    %342 = vector.broadcast %cst_97 : f32 to vector<8x32xf32>
    %343 = arith.subf %342, %336 : vector<8x32xf32>
    %344 = arith.mulf %343, %341 : vector<8x32xf32>
    %345 = arith.mulf %336, %321 : vector<8x32xf32>
    %346 = arith.addf %344, %345 : vector<8x32xf32>
    %c32_98 = arith.constant 32 : index
    %c0_99 = arith.constant 0 : index
    %347 = vector.load %arg4[%c32_98, %c0_99] : memref<64x32xf32, #tpu.memory_space<vmem>>, vector<8x32xf32>
    tpu.vector_store %arg4[%c32_98, %c0_99], %346 {strides = array<i32>} : memref<64x32xf32, #tpu.memory_space<vmem>>, vector<8x32xf32>,
    %cst_100 = arith.constant dense<0.000000e+00> : vector<8x96xf32>
    %348 = tpu.matmul %346, %213, %cst_100 {dimension_numbers = #tpu.dot_dimension_numbers<[1], [0], [0], [1], [0, 0, 1, 1], [], []>} : vector<8x32xf32>, vector<32x96xf32>, vector<8x96xf32> -> vector<8x96xf32>
    %349 = arith.addf %348, %217 : vector<8x96xf32>
    %350 = vector.extract_strided_slice %221 {offsets = [40, 0], sizes = [8, 64], strides = [1, 1]} : vector<64x96xf32> to vector<8x64xf32>
    %351 = vector.extract_strided_slice %349 {offsets = [0, 0], sizes = [8, 64], strides = [1, 1]} : vector<8x96xf32> to vector<8x64xf32>
    %352 = arith.addf %350, %351 : vector<8x64xf32>
    %cst_101 = arith.constant 5.000000e-01 : f32
    %353 = vector.broadcast %cst_101 : f32 to vector<8x64xf32>
    %354 = arith.mulf %353, %352 : vector<8x64xf32>
    %355 = math.tanh %354 : vector<8x64xf32>
    %cst_102 = arith.constant 5.000000e-01 : f32
    %356 = vector.broadcast %cst_102 : f32 to vector<8x64xf32>
    %357 = arith.mulf %356, %355 : vector<8x64xf32>
    %cst_103 = arith.constant 5.000000e-01 : f32
    %358 = vector.broadcast %cst_103 : f32 to vector<8x64xf32>
    %359 = arith.addf %357, %358 : vector<8x64xf32>
    %360 = vector.extract_strided_slice %359 {offsets = [0, 0], sizes = [8, 32], strides = [1, 1]} : vector<8x64xf32> to vector<8x32xf32>
    %361 = vector.extract_strided_slice %359 {offsets = [0, 32], sizes = [8, 32], strides = [1, 1]} : vector<8x64xf32> to vector<8x32xf32>
    %362 = vector.extract_strided_slice %221 {offsets = [40, 64], sizes = [8, 32], strides = [1, 1]} : vector<64x96xf32> to vector<8x32xf32>
    %363 = vector.extract_strided_slice %349 {offsets = [0, 64], sizes = [8, 32], strides = [1, 1]} : vector<8x96xf32> to vector<8x32xf32>
    %364 = arith.mulf %360, %363 : vector<8x32xf32>
    %365 = arith.addf %362, %364 : vector<8x32xf32>
    %366 = math.tanh %365 : vector<8x32xf32>
    %cst_104 = arith.constant 1.000000e+00 : f32
    %367 = vector.broadcast %cst_104 : f32 to vector<8x32xf32>
    %368 = arith.subf %367, %361 : vector<8x32xf32>
    %369 = arith.mulf %368, %366 : vector<8x32xf32>
    %370 = arith.mulf %361, %346 : vector<8x32xf32>
    %371 = arith.addf %369, %370 : vector<8x32xf32>
    %c40_105 = arith.constant 40 : index
    %c0_106 = arith.constant 0 : index
    %372 = vector.load %arg4[%c40_105, %c0_106] : memref<64x32xf32, #tpu.memory_space<vmem>>, vector<8x32xf32>
    tpu.vector_store %arg4[%c40_105, %c0_106], %371 {strides = array<i32>} : memref<64x32xf32, #tpu.memory_space<vmem>>, vector<8x32xf32>,
    %cst_107 = arith.constant dense<0.000000e+00> : vector<8x96xf32>
    %373 = tpu.matmul %371, %213, %cst_107 {dimension_numbers = #tpu.dot_dimension_numbers<[1], [0], [0], [1], [0, 0, 1, 1], [], []>} : vector<8x32xf32>, vector<32x96xf32>, vector<8x96xf32> -> vector<8x96xf32>
    %374 = arith.addf %373, %217 : vector<8x96xf32>
    %375 = vector.extract_strided_slice %221 {offsets = [48, 0], sizes = [8, 64], strides = [1, 1]} : vector<64x96xf32> to vector<8x64xf32>
    %376 = vector.extract_strided_slice %374 {offsets = [0, 0], sizes = [8, 64], strides = [1, 1]} : vector<8x96xf32> to vector<8x64xf32>
    %377 = arith.addf %375, %376 : vector<8x64xf32>
    %cst_108 = arith.constant 5.000000e-01 : f32
    %378 = vector.broadcast %cst_108 : f32 to vector<8x64xf32>
    %379 = arith.mulf %378, %377 : vector<8x64xf32>
    %380 = math.tanh %379 : vector<8x64xf32>
    %cst_109 = arith.constant 5.000000e-01 : f32
    %381 = vector.broadcast %cst_109 : f32 to vector<8x64xf32>
    %382 = arith.mulf %381, %380 : vector<8x64xf32>
    %cst_110 = arith.constant 5.000000e-01 : f32
    %383 = vector.broadcast %cst_110 : f32 to vector<8x64xf32>
    %384 = arith.addf %382, %383 : vector<8x64xf32>
    %385 = vector.extract_strided_slice %384 {offsets = [0, 0], sizes = [8, 32], strides = [1, 1]} : vector<8x64xf32> to vector<8x32xf32>
    %386 = vector.extract_strided_slice %384 {offsets = [0, 32], sizes = [8, 32], strides = [1, 1]} : vector<8x64xf32> to vector<8x32xf32>
    %387 = vector.extract_strided_slice %221 {offsets = [48, 64], sizes = [8, 32], strides = [1, 1]} : vector<64x96xf32> to vector<8x32xf32>
    %388 = vector.extract_strided_slice %374 {offsets = [0, 64], sizes = [8, 32], strides = [1, 1]} : vector<8x96xf32> to vector<8x32xf32>
    %389 = arith.mulf %385, %388 : vector<8x32xf32>
    %390 = arith.addf %387, %389 : vector<8x32xf32>
    %391 = math.tanh %390 : vector<8x32xf32>
    %cst_111 = arith.constant 1.000000e+00 : f32
    %392 = vector.broadcast %cst_111 : f32 to vector<8x32xf32>
    %393 = arith.subf %392, %386 : vector<8x32xf32>
    %394 = arith.mulf %393, %391 : vector<8x32xf32>
    %395 = arith.mulf %386, %371 : vector<8x32xf32>
    %396 = arith.addf %394, %395 : vector<8x32xf32>
    %c48_112 = arith.constant 48 : index
    %c0_113 = arith.constant 0 : index
    %397 = vector.load %arg4[%c48_112, %c0_113] : memref<64x32xf32, #tpu.memory_space<vmem>>, vector<8x32xf32>
    tpu.vector_store %arg4[%c48_112, %c0_113], %396 {strides = array<i32>} : memref<64x32xf32, #tpu.memory_space<vmem>>, vector<8x32xf32>,
    %cst_114 = arith.constant dense<0.000000e+00> : vector<8x96xf32>
    %398 = tpu.matmul %396, %213, %cst_114 {dimension_numbers = #tpu.dot_dimension_numbers<[1], [0], [0], [1], [0, 0, 1, 1], [], []>} : vector<8x32xf32>, vector<32x96xf32>, vector<8x96xf32> -> vector<8x96xf32>
    %399 = arith.addf %398, %217 : vector<8x96xf32>
    %400 = vector.extract_strided_slice %221 {offsets = [56, 0], sizes = [8, 64], strides = [1, 1]} : vector<64x96xf32> to vector<8x64xf32>
    %401 = vector.extract_strided_slice %399 {offsets = [0, 0], sizes = [8, 64], strides = [1, 1]} : vector<8x96xf32> to vector<8x64xf32>
    %402 = arith.addf %400, %401 : vector<8x64xf32>
    %cst_115 = arith.constant 5.000000e-01 : f32
    %403 = vector.broadcast %cst_115 : f32 to vector<8x64xf32>
    %404 = arith.mulf %403, %402 : vector<8x64xf32>
    %405 = math.tanh %404 : vector<8x64xf32>
    %cst_116 = arith.constant 5.000000e-01 : f32
    %406 = vector.broadcast %cst_116 : f32 to vector<8x64xf32>
    %407 = arith.mulf %406, %405 : vector<8x64xf32>
    %cst_117 = arith.constant 5.000000e-01 : f32
    %408 = vector.broadcast %cst_117 : f32 to vector<8x64xf32>
    %409 = arith.addf %407, %408 : vector<8x64xf32>
    %410 = vector.extract_strided_slice %409 {offsets = [0, 0], sizes = [8, 32], strides = [1, 1]} : vector<8x64xf32> to vector<8x32xf32>
    %411 = vector.extract_strided_slice %409 {offsets = [0, 32], sizes = [8, 32], strides = [1, 1]} : vector<8x64xf32> to vector<8x32xf32>
    %412 = vector.extract_strided_slice %221 {offsets = [56, 64], sizes = [8, 32], strides = [1, 1]} : vector<64x96xf32> to vector<8x32xf32>
    %413 = vector.extract_strided_slice %399 {offsets = [0, 64], sizes = [8, 32], strides = [1, 1]} : vector<8x96xf32> to vector<8x32xf32>
    %414 = arith.mulf %410, %413 : vector<8x32xf32>
    %415 = arith.addf %412, %414 : vector<8x32xf32>
    %416 = math.tanh %415 : vector<8x32xf32>
    %cst_118 = arith.constant 1.000000e+00 : f32
    %417 = vector.broadcast %cst_118 : f32 to vector<8x32xf32>
    %418 = arith.subf %417, %411 : vector<8x32xf32>
    %419 = arith.mulf %418, %416 : vector<8x32xf32>
    %420 = arith.mulf %411, %396 : vector<8x32xf32>
    %421 = arith.addf %419, %420 : vector<8x32xf32>
    %c56_119 = arith.constant 56 : index
    %c0_120 = arith.constant 0 : index
    %422 = vector.load %arg4[%c56_119, %c0_120] : memref<64x32xf32, #tpu.memory_space<vmem>>, vector<8x32xf32>
    tpu.vector_store %arg4[%c56_119, %c0_120], %421 {strides = array<i32>} : memref<64x32xf32, #tpu.memory_space<vmem>>, vector<8x32xf32>,
    %c0_121 = arith.constant 0 : index
    %c0_122 = arith.constant 0 : index
    %c0_123 = arith.constant 0 : index
    %423 = vector.load %arg1[%c0_121, %c0_122, %c0_123] : memref<8x8x64xf32, #tpu.memory_space<vmem>>, vector<8x8x64xf32>
    %424 = vector.shape_cast %423 : vector<8x8x64xf32> to vector<64x64xf32>
    %c0_124 = arith.constant 0 : index
    %c0_125 = arith.constant 0 : index
    %425 = vector.load %arg4[%c0_124, %c0_125] : memref<64x32xf32, #tpu.memory_space<vmem>>, vector<64x32xf32>
    %c192 = arith.constant 192 : index
    %c0_126 = arith.constant 0 : index
    %426 = vector.load %arg2[%c192, %c0_126] : memref<312x96xf32, #tpu.memory_space<vmem>>, vector<32x32xf32>
    %cst_127 = arith.constant dense<0.000000e+00> : vector<64x32xf32>
    %427 = tpu.matmul %425, %426, %cst_127 {dimension_numbers = #tpu.dot_dimension_numbers<[1], [0], [0], [1], [0, 0, 1, 1], [], []>} : vector<64x32xf32>, vector<32x32xf32>, vector<64x32xf32> -> vector<64x32xf32>
    %c224 = arith.constant 224 : index
    %c0_128 = arith.constant 0 : index
    %428 = vector.load %arg2[%c224, %c0_128] : memref<312x96xf32, #tpu.memory_space<vmem>>, vector<64x32xf32>
    %cst_129 = arith.constant dense<0.000000e+00> : vector<64x32xf32>
    %429 = tpu.matmul %424, %428, %cst_129 {dimension_numbers = #tpu.dot_dimension_numbers<[1], [0], [0], [1], [0, 0, 1, 1], [], []>} : vector<64x64xf32>, vector<64x32xf32>, vector<64x32xf32> -> vector<64x32xf32>
    %430 = arith.addf %427, %429 : vector<64x32xf32>
    %c288 = arith.constant 288 : index
    %c0_130 = arith.constant 0 : index
    %431 = vector.load %arg2[%c288, %c0_130] : memref<312x96xf32, #tpu.memory_space<vmem>>, vector<1x32xf32>
    %432 = vector.broadcast %431 : vector<1x32xf32> to vector<64x32xf32>
    %433 = arith.addf %430, %432 : vector<64x32xf32>
    %cst_131 = arith.constant 0.000000e+00 : f32
    %434 = vector.broadcast %cst_131 : f32 to vector<64x32xf32>
    %435 = arith.maximumf %433, %434 : vector<64x32xf32>
    %c296 = arith.constant 296 : index
    %c0_132 = arith.constant 0 : index
    %436 = vector.load %arg2[%c296, %c0_132] : memref<312x96xf32, #tpu.memory_space<vmem>>, vector<1x32xf32>
    %437 = vector.broadcast %436 : vector<1x32xf32> to vector<64x32xf32>
    %438 = arith.mulf %435, %437 : vector<64x32xf32>
    %cst_133 = arith.constant dense<0.000000e+00> : vector<64xf32>
    %439 = vector.multi_reduction <add>, %438, %cst_133 [1] : vector<64x32xf32> to vector<64xf32>
    %440 = vector.shape_cast %439 : vector<64xf32> to vector<64x1xf32>
    %c304 = arith.constant 304 : index
    %c0_134 = arith.constant 0 : index
    %441 = vector.load %arg2[%c304, %c0_134] : memref<312x96xf32, #tpu.memory_space<vmem>>, vector<1x1xf32>
    %442 = vector.broadcast %441 : vector<1x1xf32> to vector<64x1xf32>
    %443 = arith.addf %440, %442 : vector<64x1xf32>
    %cst_135 = arith.constant 5.000000e-01 : f32
    %444 = vector.broadcast %cst_135 : f32 to vector<64x1xf32>
    %445 = arith.mulf %444, %443 : vector<64x1xf32>
    %446 = math.tanh %445 : vector<64x1xf32>
    %cst_136 = arith.constant 5.000000e-01 : f32
    %447 = vector.broadcast %cst_136 : f32 to vector<64x1xf32>
    %448 = arith.mulf %447, %446 : vector<64x1xf32>
    %cst_137 = arith.constant 5.000000e-01 : f32
    %449 = vector.broadcast %cst_137 : f32 to vector<64x1xf32>
    %450 = arith.addf %448, %449 : vector<64x1xf32>
    %c0_138 = arith.constant 0 : index
    %c0_139 = arith.constant 0 : index
    %451 = vector.load %arg3[%c0_138, %c0_139] : memref<64x1xf32, #tpu.memory_space<vmem>>, vector<64x1xf32>
    tpu.vector_store %arg3[%c0_138, %c0_139], %450 {strides = array<i32>} : memref<64x1xf32, #tpu.memory_space<vmem>>, vector<64x1xf32>,
    return
  }
}

</mosaic_0001>

<llo_original>
// kernel: discriminator_forward.1
$region0: #{discriminator_forward.1}
  #allocation0 [shape = 'u32[]', space=smem, size = 0x4, offset = 0x4, fixed_abs, tag = 'smem constant byte address 0x4 - core index']
  #allocation1 [shape = 'u32[144,128]{1,0:T(1,128)}', space=vmem, size = 0x12000, scoped, tag = 'internal scratch']
  #allocation2 [shape = 'f32[64,32]{1,0:T(8,128)}', space=vmem, size = 0x8000, scoped, tag = 'scratch operand']
  %s0 = inlined_call_operand.vmem [shape: f32[8,8,64], index: 0, kind: input, shape index: {}]
  %s1 = inlined_call_operand.vmem [shape: f32[8,8,64], index: 1, kind: input, shape index: {}]
  %s2 = inlined_call_operand.vmem [shape: f32[312,96], index: 2, kind: input, shape index: {}]
  %s3 = inlined_call_operand.vmem [shape: f32[64,1], index: 3, kind: output, shape index: {}]
  %s4 = sld [smem:[#allocation0]]
  $region22: #{discriminator_forward.1} parent=0
    _
  %s6 = ssub.s32 1, %s4
  %s7 = scalar_select 0, %s6, %s4
  // Predicated region
  $region2: #{discriminator_forward.1} parent=0 // pred_check
    _
  $region3: #{discriminator_forward.1} parent=0 // pred_check_branch
    %9 = sbr.rel (0) target = $region5
  $region4: #{discriminator_forward.1} parent=0 // pred_region
    _
  $region5: #{discriminator_forward.1} parent=0 // pred_fallthru
    _
  // Predicated region
  $region6: #{discriminator_forward.1} parent=0 // pred_check
    _
  $region7: #{discriminator_forward.1} parent=0 // pred_check_branch
    %11 = sbr.rel (0) target = $region9
  $region8: #{discriminator_forward.1} parent=0 // pred_region
    _
  $region9: #{discriminator_forward.1} parent=0 // pred_fallthru
    _
  // Predicated region
  $region10: #{discriminator_forward.1} parent=0 // pred_check
    _
  $region11: #{discriminator_forward.1} parent=0 // pred_check_branch
    %13 = sbr.rel (0) target = $region13
  $region12: #{discriminator_forward.1} parent=0 // pred_region
    _
  $region13: #{discriminator_forward.1} parent=0 // pred_fallthru
    _
  %v14 = vld [vmem:[%s2] sm:$0xff]
  %v15 = vld [vmem:[%s2 + $0x8] sm:$0xff]
  %v16 = vld [vmem:[%s2 + $0x10] sm:$0xff]
  %v17 = vld [vmem:[%s2 + $0x18] sm:$0xff]
  %v18 = vld [vmem:[%s2 + $0x20] sm:$0xff]
  %v19 = vld [vmem:[%s2 + $0x28] sm:$0xff]
  %v20 = vld [vmem:[%s2 + $0x30] sm:$0xff]
  %v21 = vld [vmem:[%s2 + $0x38] sm:$0xff]
  %v22 = vld [vmem:[%s2 + $0x40] sm:$0xff]
  %v23 = vld [vmem:[%s2 + $0x48] sm:$0xff]
  %v24 = vld [vmem:[%s2 + $0x50] sm:$0xff]
  %v25 = vld [vmem:[%s2 + $0x58] sm:$0xff]
  %v26 = vld [vmem:[%s2 + $0x60] sm:$0x1]
  %v27 = vld [vmem:[%s2 + $0x68] sm:$0x1]
  %v28 = vlaneseq
  %v29 = vshrl.u32 %v28, 7
  %v30 = vsub.s32 0, %v29
  %v31 = vrot.slane %v27, %v30
  %v32 = vld [vmem:[%s0] sm:$0xff]
  %v33 = vld [vmem:[%s0 + $0x8] sm:$0xff]
  %v34 = vld [vmem:[%s0 + $0x10] sm:$0xff]
  %v35 = vld [vmem:[%s0 + $0x18] sm:$0xff]
  %v36 = vld [vmem:[%s0 + $0x20] sm:$0xff]
  %v37 = vld [vmem:[%s0 + $0x28] sm:$0xff]
  %v38 = vld [vmem:[%s0 + $0x30] sm:$0xff]
  %v39 = vld [vmem:[%s0 + $0x38] sm:$0xff]
  %v40 = vlaneseq
  %v41 = vshrl.u32 %v40, 7
  %v42 = vsub.s32 0, %v41
  %v43 = vrot.slane %v26, %v42
  %vm44 = vcmask 523264
  %v46 = vsel %vm44, %v32, 0
  %v49 = vsel %vm44, %v33, 0
  %v52 = vsel %vm44, %v34, 0
  %v55 = vsel %vm44, %v35, 0
  %v58 = vsel %vm44, %v36, 0
  %v61 = vsel %vm44, %v37, 0
  %v64 = vsel %vm44, %v38, 0
  %v67 = vsel %vm44, %v39, 0
  %69 = vmatprep.subr.mxu0 0.0
  %70 = vmatpush1.msra.mxu0 %v14
  %71 = vmatprep.subr.mxu0 0.0
  %72 = vmatpush1.msra.mxu0 %v15
  %73 = vmatprep.subr.mxu0 0.0
  %74 = vmatpush1.msra.mxu0 %v16
  %75 = vmatprep.subr.mxu0 0.0
  %76 = vmatpush1.msra.mxu0 %v17
  %77 = vmatprep.subr.mxu0 0.0
  %78 = vmatpush1.msra.mxu0 %v18
  %79 = vmatprep.subr.mxu0 0.0
  %80 = vmatpush1.msra.mxu0 %v19
  %81 = vmatprep.subr.mxu0 0.0
  %82 = vmatpush1.msra.mxu0 %v20
  %83 = vmatprep.subr.mxu0 0.0
  %84 = vmatpush1.msra.mxu0 %v21
  %85 = vmatprep.subr.mxu0 0.0
  %86 = vmatpush1.msra.mxu0 0.0
  %87 = vmatprep.subr.mxu0 0.0
  %88 = vmatpush1.msra.mxu0 0.0
  %89 = vmatprep.subr.mxu0 0.0
  %90 = vmatpush1.msra.mxu0 0.0
  %91 = vmatprep.subr.mxu0 0.0
  %92 = vmatpush1.msra.mxu0 0.0
  %93 = vmatprep.subr.mxu0 0.0
  %94 = vmatpush1.msra.mxu0 0.0
  %95 = vmatprep.subr.mxu0 0.0
  %96 = vmatpush1.msra.mxu0 0.0
  %97 = vmatprep.subr.mxu0 0.0
  %98 = vmatpush1.msra.mxu0 0.0
  %99 = vmatprep.subr.mxu0 0.0
  %100 = vmatpush1.msra.mxu0 0.0
  %101 = vmatprep.subr.mxu0 0.0
  %102 = vmatpush1.msra.mxu0 0.0
  %103 = vmatprep.subr.mxu0 0.0
  %104 = vmatpush1.msra.mxu0 0.0
  %105 = vmatprep.subr.mxu0 0.0
  %106 = vmatpush1.msra.mxu0 0.0
  %107 = vmatprep.subr.mxu0 0.0
  %108 = vmatpush1.msra.mxu0 0.0
  %109 = vmatprep.subr.mxu0 0.0
  %110 = vmatpush1.msra.mxu0 0.0
  %111 = vmatprep.subr.mxu0 0.0
  %112 = vmatpush1.msra.mxu0 0.0
  %113 = vmatprep.subr.mxu0 0.0
  %114 = vmatpush1.msra.mxu0 0.0
  %115 = vmatprep.subr.mxu0 0.0
  %116 = vmatpush1.msra.mxu0 0.0
  %117 = vmatprep.subr.mxu0 0.0
  %118 = vmatpush1.msra.mxu0 0.0
  %119 = vmatprep.subr.mxu0 0.0
  %120 = vmatpush1.msra.mxu0 0.0
  %121 = vmatprep.subr.mxu0 0.0
  %122 = vmatpush1.msra.mxu0 0.0
  %123 = vmatprep.subr.mxu0 0.0
  %124 = vmatpush1.msra.mxu0 0.0
  %125 = vmatprep.subr.mxu0 0.0
  %126 = vmatpush1.msra.mxu0 0.0
  %127 = vmatprep.subr.mxu0 0.0
  %128 = vmatpush1.msra.mxu0 0.0
  %129 = vmatprep.subr.mxu0 0.0
  %130 = vmatpush1.msra.mxu0 0.0
  %131 = vmatprep.subr.mxu0 0.0
  %132 = vmatpush1.msra.mxu0 0.0
  %133 = vmatprep.mubr.f32.mxu0 0.0
  %134 = vmatmul.mubr.f32.gmra.mrb[0].mxu0 %v46
  %v135 = vpop.f32.mrb[0].mxu0
  %v136 = vadd.f32 %v43, %v135
  %v137 = vpop.f32.mrb[0].mxu0
  %138 = vmatprep.mubr.f32.mxu0 0.0
  %139 = vmatmul.mubr.f32.gmra.mrb[0].mxu0 %v49
  %v140 = vpop.f32.mrb[0].mxu0
  %v141 = vadd.f32 %v43, %v140
  %v142 = vpop.f32.mrb[0].mxu0
  %143 = vmatprep.mubr.f32.mxu0 0.0
  %144 = vmatmul.mubr.f32.gmra.mrb[0].mxu0 %v52
  %v145 = vpop.f32.mrb[0].mxu0
  %v146 = vadd.f32 %v43, %v145
  %v147 = vpop.f32.mrb[0].mxu0
  %148 = vmatprep.mubr.f32.mxu0 0.0
  %149 = vmatmul.mubr.f32.gmra.mrb[0].mxu0 %v55
  %v150 = vpop.f32.mrb[0].mxu0
  %v151 = vadd.f32 %v43, %v150
  %v152 = vpop.f32.mrb[0].mxu0
  %153 = vmatprep.mubr.f32.mxu0 0.0
  %154 = vmatmul.mubr.f32.gmra.mrb[0].mxu0 %v58
  %v155 = vpop.f32.mrb[0].mxu0
  %v156 = vadd.f32 %v43, %v155
  %v157 = vpop.f32.mrb[0].mxu0
  %158 = vmatprep.mubr.f32.mxu0 0.0
  %159 = vmatmul.mubr.f32.gmra.mrb[0].mxu0 %v61
  %v160 = vpop.f32.mrb[0].mxu0
  %v161 = vadd.f32 %v43, %v160
  %v162 = vpop.f32.mrb[0].mxu0
  %163 = vmatprep.mubr.f32.mxu0 0.0
  %164 = vmatmul.mubr.f32.gmra.mrb[0].mxu0 %v64
  %v165 = vpop.f32.mrb[0].mxu0
  %v166 = vadd.f32 %v43, %v165
  %v167 = vpop.f32.mrb[0].mxu0
  %168 = vmatprep.mubr.f32.mxu0 0.0
  %169 = vmatmul.mubr.f32.gmra.mrb[0].mxu0 %v67
  %v170 = vpop.f32.mrb[0].mxu0
  %v171 = vadd.f32 %v43, %v170
  %v172 = vpop.f32.mrb[0].mxu0
  %173 = vdwg.mxu0
  %vm174 = vcmask 261120
  %v176 = vsel %vm174, 0.0, 0
  %178 = vmatprep.subr.mxu0 0.0
  %179 = vmatpush1.msra.mxu0 %v22
  %180 = vmatprep.subr.mxu0 0.0
  %181 = vmatpush1.msra.mxu0 %v23
  %182 = vmatprep.subr.mxu0 0.0
  %183 = vmatpush1.msra.mxu0 %v24
  %184 = vmatprep.subr.mxu0 0.0
  %185 = vmatpush1.msra.mxu0 %v25
  %186 = vmatprep.subr.mxu0 0.0
  %187 = vmatpush1.msra.mxu0 0.0
  %188 = vmatprep.subr.mxu0 0.0
  %189 = vmatpush1.msra.mxu0 0.0
  %190 = vmatprep.subr.mxu0 0.0
  %191 = vmatpush1.msra.mxu0 0.0
  %192 = vmatprep.subr.mxu0 0.0
  %193 = vmatpush1.msra.mxu0 0.0
  %194 = vmatprep.subr.mxu0 0.0
  %195 = vmatpush1.msra.mxu0 0.0
  %196 = vmatprep.subr.mxu0 0.0
  %197 = vmatpush1.msra.mxu0 0.0
  %198 = vmatprep.subr.mxu0 0.0
  %199 = vmatpush1.msra.mxu0 0.0
  %200 = vmatprep.subr.mxu0 0.0
  %201 = vmatpush1.msra.mxu0 0.0
  %202 = vmatprep.subr.mxu0 0.0
  %203 = vmatpush1.msra.mxu0 0.0
  %204 = vmatprep.subr.mxu0 0.0
  %205 = vmatpush1.msra.mxu0 0.0
  %206 = vmatprep.subr.mxu0 0.0
  %207 = vmatpush1.msra.mxu0 0.0
  %208 = vmatprep.subr.mxu0 0.0
  %209 = vmatpush1.msra.mxu0 0.0
  %210 = vmatprep.subr.mxu0 0.0
  %211 = vmatpush1.msra.mxu0 0.0
  %212 = vmatprep.subr.mxu0 0.0
  %213 = vmatpush1.msra.mxu0 0.0
  %214 = vmatprep.subr.mxu0 0.0
  %215 = vmatpush1.msra.mxu0 0.0
  %216 = vmatprep.subr.mxu0 0.0
  %217 = vmatpush1.msra.mxu0 0.0
  %218 = vmatprep.subr.mxu0 0.0
  %219 = vmatpush1.msra.mxu0 0.0
  %220 = vmatprep.subr.mxu0 0.0
  %221 = vmatpush1.msra.mxu0 0.0
  %222 = vmatprep.subr.mxu0 0.0
  %223 = vmatpush1.msra.mxu0 0.0
  %224 = vmatprep.subr.mxu0 0.0
  %225 = vmatpush1.msra.mxu0 0.0
  %226 = vmatprep.subr.mxu0 0.0
  %227 = vmatpush1.msra.mxu0 0.0
  %228 = vmatprep.subr.mxu0 0.0
  %229 = vmatpush1.msra.mxu0 0.0
  %230 = vmatprep.subr.mxu0 0.0
  %231 = vmatpush1.msra.mxu0 0.0
  %232 = vmatprep.subr.mxu0 0.0
  %233 = vmatpush1.msra.mxu0 0.0
  %234 = vmatprep.subr.mxu0 0.0
  %235 = vmatpush1.msra.mxu0 0.0
  %236 = vmatprep.subr.mxu0 0.0
  %237 = vmatpush1.msra.mxu0 0.0
  %238 = vmatprep.subr.mxu0 0.0
  %239 = vmatpush1.msra.mxu0 0.0
  %240 = vmatprep.subr.mxu0 0.0
  %241 = vmatpush1.msra.mxu0 0.0
  %242 = vmatprep.mubr.f32.mxu0 0.0
  %243 = vmatmul.mubr.f32.gmra.mrb[0].mxu0 %v176
  %v244 = vpop.f32.mrb[0].mxu0
  %v245 = vadd.f32 %v31, %v244
  %v246 = vpop.f32.mrb[0].mxu0
  %247 = vdwg.mxu0
  %v248 = vadd.f32 %v136, %v245
  %v249 = vmul.f32 %v248, 0.5
  %v250 = vtanh.pop %v249
  %v251 = vmul.f32 %v250, 0.5
  %v252 = vadd.f32 %v251, 0.5
  %254 = vrot.lane.b32.xlu0 %v245, 64
  %v255 = vpop.permute.xlu0 %254
  %v257 = vmul.f32 %v252, %v255
  %259 = vrot.lane.b32.xlu0 %v257, 64
  %v260 = vpop.permute.xlu0 %259
  %v262 = vadd.f32 %v136, %v260
  %v263 = vtanh.pop %v262
  %v264 = vsub.f32 1.0, %v252
  %266 = vrot.lane.b32.xlu0 %v263, 96
  %v267 = vpop.permute.xlu0 %266
  %v269 = vmul.f32 %v264, %v267
  %v270 = vmul.f32 %v252, 0.0
  %v271 = vadd.f32 %v269, %v270
  %273 = vrot.lane.b32.xlu0 %v271, 96
  %v274 = vpop.permute.xlu0 %273
  %276 = vst.msk [vmem:[#allocation2] sm:$0xff] %vm174, %v274
  %v277 = vsel %vm174, %v274, 0
  %279 = vmatprep.subr.mxu0 0.0
  %280 = vmatpush1.msra.mxu0 %v22
  %281 = vmatprep.subr.mxu0 0.0
  %282 = vmatpush1.msra.mxu0 %v23
  %283 = vmatprep.subr.mxu0 0.0
  %284 = vmatpush1.msra.mxu0 %v24
  %285 = vmatprep.subr.mxu0 0.0
  %286 = vmatpush1.msra.mxu0 %v25
  %287 = vmatprep.subr.mxu0 0.0
  %288 = vmatpush1.msra.mxu0 0.0
  %289 = vmatprep.subr.mxu0 0.0
  %290 = vmatpush1.msra.mxu0 0.0
  %291 = vmatprep.subr.mxu0 0.0
  %292 = vmatpush1.msra.mxu0 0.0
  %293 = vmatprep.subr.mxu0 0.0
  %294 = vmatpush1.msra.mxu0 0.0
  %295 = vmatprep.subr.mxu0 0.0
  %296 = vmatpush1.msra.mxu0 0.0
  %297 = vmatprep.subr.mxu0 0.0
  %298 = vmatpush1.msra.mxu0 0.0
  %299 = vmatprep.subr.mxu0 0.0
  %300 = vmatpush1.msra.mxu0 0.0
  %301 = vmatprep.subr.mxu0 0.0
  %302 = vmatpush1.msra.mxu0 0.0
  %303 = vmatprep.subr.mxu0 0.0
  %304 = vmatpush1.msra.mxu0 0.0
  %305 = vmatprep.subr.mxu0 0.0
  %306 = vmatpush1.msra.mxu0 0.0
  %307 = vmatprep.subr.mxu0 0.0
  %308 = vmatpush1.msra.mxu0 0.0
  %309 = vmatprep.subr.mxu0 0.0
  %310 = vmatpush1.msra.mxu0 0.0
  %311 = vmatprep.subr.mxu0 0.0
  %312 = vmatpush1.msra.mxu0 0.0
  %313 = vmatprep.subr.mxu0 0.0
  %314 = vmatpush1.msra.mxu0 0.0
  %315 = vmatprep.subr.mxu0 0.0
  %316 = vmatpush1.msra.mxu0 0.0
  %317 = vmatprep.subr.mxu0 0.0
  %318 = vmatpush1.msra.mxu0 0.0
  %319 = vmatprep.subr.mxu0 0.0
  %320 = vmatpush1.msra.mxu0 0.0
  %321 = vmatprep.subr.mxu0 0.0
  %322 = vmatpush1.msra.mxu0 0.0
  %323 = vmatprep.subr.mxu0 0.0
  %324 = vmatpush1.msra.mxu0 0.0
  %325 = vmatprep.subr.mxu0 0.0
  %326 = vmatpush1.msra.mxu0 0.0
  %327 = vmatprep.subr.mxu0 0.0
  %328 = vmatpush1.msra.mxu0 0.0
  %329 = vmatprep.subr.mxu0 0.0
  %330 = vmatpush1.msra.mxu0 0.0
  %331 = vmatprep.subr.mxu0 0.0
  %332 = vmatpush1.msra.mxu0 0.0
  %333 = vmatprep.subr.mxu0 0.0
  %334 = vmatpush1.msra.mxu0 0.0
  %335 = vmatprep.subr.mxu0 0.0
  %336 = vmatpush1.msra.mxu0 0.0
  %337 = vmatprep.subr.mxu0 0.0
  %338 = vmatpush1.msra.mxu0 0.0
  %339 = vmatprep.subr.mxu0 0.0
  %340 = vmatpush1.msra.mxu0 0.0
  %341 = vmatprep.subr.mxu0 0.0
  %342 = vmatpush1.msra.mxu0 0.0
  %343 = vmatprep.mubr.f32.mxu0 0.0
  %344 = vmatmul.mubr.f32.gmra.mrb[0].mxu0 %v277
  %v345 = vpop.f32.mrb[0].mxu0
  %v346 = vadd.f32 %v31, %v345
  %v347 = vpop.f32.mrb[0].mxu0
  %348 = vdwg.mxu0
  %v349 = vadd.f32 %v141, %v346
  %v350 = vmul.f32 %v349, 0.5
  %v351 = vtanh.pop %v350
  %v352 = vmul.f32 %v351, 0.5
  %v353 = vadd.f32 %v352, 0.5
  %355 = vrot.lane.b32.xlu0 %v346, 64
  %v356 = vpop.permute.xlu0 %355
  %v358 = vmul.f32 %v353, %v356
  %360 = vrot.lane.b32.xlu0 %v358, 64
  %v361 = vpop.permute.xlu0 %360
  %v363 = vadd.f32 %v141, %v361
  %v364 = vtanh.pop %v363
  %v365 = vsub.f32 1.0, %v353
  %367 = vrot.lane.b32.xlu0 %v364, 96
  %v368 = vpop.permute.xlu0 %367
  %v370 = vmul.f32 %v365, %v368
  %v371 = vmul.f32 %v353, %v271
  %v372 = vadd.f32 %v370, %v371
  %374 = vrot.lane.b32.xlu0 %v372, 96
  %v375 = vpop.permute.xlu0 %374
  %377 = vst.msk [vmem:[#allocation2 + $0x8] sm:$0xff] %vm174, %v375
  %v378 = vsel %vm174, %v375, 0
  %380 = vmatprep.subr.mxu0 0.0
  %381 = vmatpush1.msra.mxu0 %v22
  %382 = vmatprep.subr.mxu0 0.0
  %383 = vmatpush1.msra.mxu0 %v23
  %384 = vmatprep.subr.mxu0 0.0
  %385 = vmatpush1.msra.mxu0 %v24
  %386 = vmatprep.subr.mxu0 0.0
  %387 = vmatpush1.msra.mxu0 %v25
  %388 = vmatprep.subr.mxu0 0.0
  %389 = vmatpush1.msra.mxu0 0.0
  %390 = vmatprep.subr.mxu0 0.0
  %391 = vmatpush1.msra.mxu0 0.0
  %392 = vmatprep.subr.mxu0 0.0
  %393 = vmatpush1.msra.mxu0 0.0
  %394 = vmatprep.subr.mxu0 0.0
  %395 = vmatpush1.msra.mxu0 0.0
  %396 = vmatprep.subr.mxu0 0.0
  %397 = vmatpush1.msra.mxu0 0.0
  %398 = vmatprep.subr.mxu0 0.0
  %399 = vmatpush1.msra.mxu0 0.0
  %400 = vmatprep.subr.mxu0 0.0
  %401 = vmatpush1.msra.mxu0 0.0
  %402 = vmatprep.subr.mxu0 0.0
  %403 = vmatpush1.msra.mxu0 0.0
  %404 = vmatprep.subr.mxu0 0.0
  %405 = vmatpush1.msra.mxu0 0.0
  %406 = vmatprep.subr.mxu0 0.0
  %407 = vmatpush1.msra.mxu0 0.0
  %408 = vmatprep.subr.mxu0 0.0
  %409 = vmatpush1.msra.mxu0 0.0
  %410 = vmatprep.subr.mxu0 0.0
  %411 = vmatpush1.msra.mxu0 0.0
  %412 = vmatprep.subr.mxu0 0.0
  %413 = vmatpush1.msra.mxu0 0.0
  %414 = vmatprep.subr.mxu0 0.0
  %415 = vmatpush1.msra.mxu0 0.0
  %416 = vmatprep.subr.mxu0 0.0
  %417 = vmatpush1.msra.mxu0 0.0
  %418 = vmatprep.subr.mxu0 0.0
  %419 = vmatpush1.msra.mxu0 0.0
  %420 = vmatprep.subr.mxu0 0.0
  %421 = vmatpush1.msra.mxu0 0.0
  %422 = vmatprep.subr.mxu0 0.0
  %423 = vmatpush1.msra.mxu0 0.0
  %424 = vmatprep.subr.mxu0 0.0
  %425 = vmatpush1.msra.mxu0 0.0
  %426 = vmatprep.subr.mxu0 0.0
  %427 = vmatpush1.msra.mxu0 0.0
  %428 = vmatprep.subr.mxu0 0.0
  %429 = vmatpush1.msra.mxu0 0.0
  %430 = vmatprep.subr.mxu0 0.0
  %431 = vmatpush1.msra.mxu0 0.0
  %432 = vmatprep.subr.mxu0 0.0
  %433 = vmatpush1.msra.mxu0 0.0
  %434 = vmatprep.subr.mxu0 0.0
  %435 = vmatpush1.msra.mxu0 0.0
  %436 = vmatprep.subr.mxu0 0.0
  %437 = vmatpush1.msra.mxu0 0.0
  %438 = vmatprep.subr.mxu0 0.0
  %439 = vmatpush1.msra.mxu0 0.0
  %440 = vmatprep.subr.mxu0 0.0
  %441 = vmatpush1.msra.mxu0 0.0
  %442 = vmatprep.subr.mxu0 0.0
  %443 = vmatpush1.msra.mxu0 0.0
  %444 = vmatprep.mubr.f32.mxu0 0.0
  %445 = vmatmul.mubr.f32.gmra.mrb[0].mxu0 %v378
  %v446 = vpop.f32.mrb[0].mxu0
  %v447 = vadd.f32 %v31, %v446
  %v448 = vpop.f32.mrb[0].mxu0
  %449 = vdwg.mxu0
  %v450 = vadd.f32 %v146, %v447
  %v451 = vmul.f32 %v450, 0.5
  %v452 = vtanh.pop %v451
  %v453 = vmul.f32 %v452, 0.5
  %v454 = vadd.f32 %v453, 0.5
  %456 = vrot.lane.b32.xlu0 %v447, 64
  %v457 = vpop.permute.xlu0 %456
  %v459 = vmul.f32 %v454, %v457
  %461 = vrot.lane.b32.xlu0 %v459, 64
  %v462 = vpop.permute.xlu0 %461
  %v464 = vadd.f32 %v146, %v462
  %v465 = vtanh.pop %v464
  %v466 = vsub.f32 1.0, %v454
  %468 = vrot.lane.b32.xlu0 %v465, 96
  %v469 = vpop.permute.xlu0 %468
  %v471 = vmul.f32 %v466, %v469
  %v472 = vmul.f32 %v454, %v372
  %v473 = vadd.f32 %v471, %v472
  %475 = vrot.lane.b32.xlu0 %v473, 96
  %v476 = vpop.permute.xlu0 %475
  %478 = vst.msk [vmem:[#allocation2 + $0x10] sm:$0xff] %vm174, %v476
  %v479 = vsel %vm174, %v476, 0
  %481 = vmatprep.subr.mxu0 0.0
  %482 = vmatpush1.msra.mxu0 %v22
  %483 = vmatprep.subr.mxu0 0.0
  %484 = vmatpush1.msra.mxu0 %v23
  %485 = vmatprep.subr.mxu0 0.0
  %486 = vmatpush1.msra.mxu0 %v24
  %487 = vmatprep.subr.mxu0 0.0
  %488 = vmatpush1.msra.mxu0 %v25
  %489 = vmatprep.subr.mxu0 0.0
  %490 = vmatpush1.msra.mxu0 0.0
  %491 = vmatprep.subr.mxu0 0.0
  %492 = vmatpush1.msra.mxu0 0.0
  %493 = vmatprep.subr.mxu0 0.0
  %494 = vmatpush1.msra.mxu0 0.0
  %495 = vmatprep.subr.mxu0 0.0
  %496 = vmatpush1.msra.mxu0 0.0
  %497 = vmatprep.subr.mxu0 0.0
  %498 = vmatpush1.msra.mxu0 0.0
  %499 = vmatprep.subr.mxu0 0.0
  %500 = vmatpush1.msra.mxu0 0.0
  %501 = vmatprep.subr.mxu0 0.0
  %502 = vmatpush1.msra.mxu0 0.0
  %503 = vmatprep.subr.mxu0 0.0
  %504 = vmatpush1.msra.mxu0 0.0
  %505 = vmatprep.subr.mxu0 0.0
  %506 = vmatpush1.msra.mxu0 0.0
  %507 = vmatprep.subr.mxu0 0.0
  %508 = vmatpush1.msra.mxu0 0.0
  %509 = vmatprep.subr.mxu0 0.0
  %510 = vmatpush1.msra.mxu0 0.0
  %511 = vmatprep.subr.mxu0 0.0
  %512 = vmatpush1.msra.mxu0 0.0
  %513 = vmatprep.subr.mxu0 0.0
  %514 = vmatpush1.msra.mxu0 0.0
  %515 = vmatprep.subr.mxu0 0.0
  %516 = vmatpush1.msra.mxu0 0.0
  %517 = vmatprep.subr.mxu0 0.0
  %518 = vmatpush1.msra.mxu0 0.0
  %519 = vmatprep.subr.mxu0 0.0
  %520 = vmatpush1.msra.mxu0 0.0
  %521 = vmatprep.subr.mxu0 0.0
  %522 = vmatpush1.msra.mxu0 0.0
  %523 = vmatprep.subr.mxu0 0.0
  %524 = vmatpush1.msra.mxu0 0.0
  %525 = vmatprep.subr.mxu0 0.0
  %526 = vmatpush1.msra.mxu0 0.0
  %527 = vmatprep.subr.mxu0 0.0
  %528 = vmatpush1.msra.mxu0 0.0
  %529 = vmatprep.subr.mxu0 0.0
  %530 = vmatpush1.msra.mxu0 0.0
  %531 = vmatprep.subr.mxu0 0.0
  %532 = vmatpush1.msra.mxu0 0.0
  %533 = vmatprep.subr.mxu0 0.0
  %534 = vmatpush1.msra.mxu0 0.0
  %535 = vmatprep.subr.mxu0 0.0
  %536 = vmatpush1.msra.mxu0 0.0
  %537 = vmatprep.subr.mxu0 0.0
  %538 = vmatpush1.msra.mxu0 0.0
  %539 = vmatprep.subr.mxu0 0.0
  %540 = vmatpush1.msra.mxu0 0.0
  %541 = vmatprep.subr.mxu0 0.0
  %542 = vmatpush1.msra.mxu0 0.0
  %543 = vmatprep.subr.mxu0 0.0
  %544 = vmatpush1.msra.mxu0 0.0
  %545 = vmatprep.mubr.f32.mxu0 0.0
  %546 = vmatmul.mubr.f32.gmra.mrb[0].mxu0 %v479
  %v547 = vpop.f32.mrb[0].mxu0
  %v548 = vadd.f32 %v31, %v547
  %v549 = vpop.f32.mrb[0].mxu0
  %550 = vdwg.mxu0
  %v551 = vadd.f32 %v151, %v548
  %v552 = vmul.f32 %v551, 0.5
  %v553 = vtanh.pop %v552
  %v554 = vmul.f32 %v553, 0.5
  %v555 = vadd.f32 %v554, 0.5
  %557 = vrot.lane.b32.xlu0 %v548, 64
  %v558 = vpop.permute.xlu0 %557
  %v560 = vmul.f32 %v555, %v558
  %562 = vrot.lane.b32.xlu0 %v560, 64
  %v563 = vpop.permute.xlu0 %562
  %v565 = vadd.f32 %v151, %v563
  %v566 = vtanh.pop %v565
  %v567 = vsub.f32 1.0, %v555
  %569 = vrot.lane.b32.xlu0 %v566, 96
  %v570 = vpop.permute.xlu0 %569
  %v572 = vmul.f32 %v567, %v570
  %v573 = vmul.f32 %v555, %v473
  %v574 = vadd.f32 %v572, %v573
  %576 = vrot.lane.b32.xlu0 %v574, 96
  %v577 = vpop.permute.xlu0 %576
  %579 = vst.msk [vmem:[#allocation2 + $0x18] sm:$0xff] %vm174, %v577
  %v580 = vsel %vm174, %v577, 0
  %582 = vmatprep.subr.mxu0 0.0
  %583 = vmatpush1.msra.mxu0 %v22
  %584 = vmatprep.subr.mxu0 0.0
  %585 = vmatpush1.msra.mxu0 %v23
  %586 = vmatprep.subr.mxu0 0.0
  %587 = vmatpush1.msra.mxu0 %v24
  %588 = vmatprep.subr.mxu0 0.0
  %589 = vmatpush1.msra.mxu0 %v25
  %590 = vmatprep.subr.mxu0 0.0
  %591 = vmatpush1.msra.mxu0 0.0
  %592 = vmatprep.subr.mxu0 0.0
  %593 = vmatpush1.msra.mxu0 0.0
  %594 = vmatprep.subr.mxu0 0.0
  %595 = vmatpush1.msra.mxu0 0.0
  %596 = vmatprep.subr.mxu0 0.0
  %597 = vmatpush1.msra.mxu0 0.0
  %598 = vmatprep.subr.mxu0 0.0
  %599 = vmatpush1.msra.mxu0 0.0
  %600 = vmatprep.subr.mxu0 0.0
  %601 = vmatpush1.msra.mxu0 0.0
  %602 = vmatprep.subr.mxu0 0.0
  %603 = vmatpush1.msra.mxu0 0.0
  %604 = vmatprep.subr.mxu0 0.0
  %605 = vmatpush1.msra.mxu0 0.0
  %606 = vmatprep.subr.mxu0 0.0
  %607 = vmatpush1.msra.mxu0 0.0
  %608 = vmatprep.subr.mxu0 0.0
  %609 = vmatpush1.msra.mxu0 0.0
  %610 = vmatprep.subr.mxu0 0.0
  %611 = vmatpush1.msra.mxu0 0.0
  %612 = vmatprep.subr.mxu0 0.0
  %613 = vmatpush1.msra.mxu0 0.0
  %614 = vmatprep.subr.mxu0 0.0
  %615 = vmatpush1.msra.mxu0 0.0
  %616 = vmatprep.subr.mxu0 0.0
  %617 = vmatpush1.msra.mxu0 0.0
  %618 = vmatprep.subr.mxu0 0.0
  %619 = vmatpush1.msra.mxu0 0.0
  %620 = vmatprep.subr.mxu0 0.0
  %621 = vmatpush1.msra.mxu0 0.0
  %622 = vmatprep.subr.mxu0 0.0
  %623 = vmatpush1.msra.mxu0 0.0
  %624 = vmatprep.subr.mxu0 0.0
  %625 = vmatpush1.msra.mxu0 0.0
  %626 = vmatprep.subr.mxu0 0.0
  %627 = vmatpush1.msra.mxu0 0.0
  %628 = vmatprep.subr.mxu0 0.0
  %629 = vmatpush1.msra.mxu0 0.0
  %630 = vmatprep.subr.mxu0 0.0
  %631 = vmatpush1.msra.mxu0 0.0
  %632 = vmatprep.subr.mxu0 0.0
  %633 = vmatpush1.msra.mxu0 0.0
  %634 = vmatprep.subr.mxu0 0.0
  %635 = vmatpush1.msra.mxu0 0.0
  %636 = vmatprep.subr.mxu0 0.0
  %637 = vmatpush1.msra.mxu0 0.0
  %638 = vmatprep.subr.mxu0 0.0
  %639 = vmatpush1.msra.mxu0 0.0
  %640 = vmatprep.subr.mxu0 0.0
  %641 = vmatpush1.msra.mxu0 0.0
  %642 = vmatprep.subr.mxu0 0.0
  %643 = vmatpush1.msra.mxu0 0.0
  %644 = vmatprep.subr.mxu0 0.0
  %645 = vmatpush1.msra.mxu0 0.0
  %646 = vmatprep.mubr.f32.mxu0 0.0
  %647 = vmatmul.mubr.f32.gmra.mrb[0].mxu0 %v580
  %v648 = vpop.f32.mrb[0].mxu0
  %v649 = vadd.f32 %v31, %v648
  %v650 = vpop.f32.mrb[0].mxu0
  %651 = vdwg.mxu0
  %v652 = vadd.f32 %v156, %v649
  %v653 = vmul.f32 %v652, 0.5
  %v654 = vtanh.pop %v653
  %v655 = vmul.f32 %v654, 0.5
  %v656 = vadd.f32 %v655, 0.5
  %658 = vrot.lane.b32.xlu0 %v649, 64
  %v659 = vpop.permute.xlu0 %658
  %v661 = vmul.f32 %v656, %v659
  %663 = vrot.lane.b32.xlu0 %v661, 64
  %v664 = vpop.permute.xlu0 %663
  %v666 = vadd.f32 %v156, %v664
  %v667 = vtanh.pop %v666
  %v668 = vsub.f32 1.0, %v656
  %670 = vrot.lane.b32.xlu0 %v667, 96
  %v671 = vpop.permute.xlu0 %670
  %v673 = vmul.f32 %v668, %v671
  %v674 = vmul.f32 %v656, %v574
  %v675 = vadd.f32 %v673, %v674
  %677 = vrot.lane.b32.xlu0 %v675, 96
  %v678 = vpop.permute.xlu0 %677
  %680 = vst.msk [vmem:[#allocation2 + $0x20] sm:$0xff] %vm174, %v678
  %v681 = vsel %vm174, %v678, 0
  %683 = vmatprep.subr.mxu0 0.0
  %684 = vmatpush1.msra.mxu0 %v22
  %685 = vmatprep.subr.mxu0 0.0
  %686 = vmatpush1.msra.mxu0 %v23
  %687 = vmatprep.subr.mxu0 0.0
  %688 = vmatpush1.msra.mxu0 %v24
  %689 = vmatprep.subr.mxu0 0.0
  %690 = vmatpush1.msra.mxu0 %v25
  %691 = vmatprep.subr.mxu0 0.0
  %692 = vmatpush1.msra.mxu0 0.0
  %693 = vmatprep.subr.mxu0 0.0
  %694 = vmatpush1.msra.mxu0 0.0
  %695 = vmatprep.subr.mxu0 0.0
  %696 = vmatpush1.msra.mxu0 0.0
  %697 = vmatprep.subr.mxu0 0.0
  %698 = vmatpush1.msra.mxu0 0.0
  %699 = vmatprep.subr.mxu0 0.0
  %700 = vmatpush1.msra.mxu0 0.0
  %701 = vmatprep.subr.mxu0 0.0
  %702 = vmatpush1.msra.mxu0 0.0
  %703 = vmatprep.subr.mxu0 0.0
  %704 = vmatpush1.msra.mxu0 0.0
  %705 = vmatprep.subr.mxu0 0.0
  %706 = vmatpush1.msra.mxu0 0.0
  %707 = vmatprep.subr.mxu0 0.0
  %708 = vmatpush1.msra.mxu0 0.0
  %709 = vmatprep.subr.mxu0 0.0
  %710 = vmatpush1.msra.mxu0 0.0
  %711 = vmatprep.subr.mxu0 0.0
  %712 = vmatpush1.msra.mxu0 0.0
  %713 = vmatprep.subr.mxu0 0.0
  %714 = vmatpush1.msra.mxu0 0.0
  %715 = vmatprep.subr.mxu0 0.0
  %716 = vmatpush1.msra.mxu0 0.0
  %717 = vmatprep.subr.mxu0 0.0
  %718 = vmatpush1.msra.mxu0 0.0
  %719 = vmatprep.subr.mxu0 0.0
  %720 = vmatpush1.msra.mxu0 0.0
  %721 = vmatprep.subr.mxu0 0.0
  %722 = vmatpush1.msra.mxu0 0.0
  %723 = vmatprep.subr.mxu0 0.0
  %724 = vmatpush1.msra.mxu0 0.0
  %725 = vmatprep.subr.mxu0 0.0
  %726 = vmatpush1.msra.mxu0 0.0
  %727 = vmatprep.subr.mxu0 0.0
  %728 = vmatpush1.msra.mxu0 0.0
  %729 = vmatprep.subr.mxu0 0.0
  %730 = vmatpush1.msra.mxu0 0.0
  %731 = vmatprep.subr.mxu0 0.0
  %732 = vmatpush1.msra.mxu0 0.0
  %733 = vmatprep.subr.mxu0 0.0
  %734 = vmatpush1.msra.mxu0 0.0
  %735 = vmatprep.subr.mxu0 0.0
  %736 = vmatpush1.msra.mxu0 0.0
  %737 = vmatprep.subr.mxu0 0.0
  %738 = vmatpush1.msra.mxu0 0.0
  %739 = vmatprep.subr.mxu0 0.0
  %740 = vmatpush1.msra.mxu0 0.0
  %741 = vmatprep.subr.mxu0 0.0
  %742 = vmatpush1.msra.mxu0 0.0
  %743 = vmatprep.subr.mxu0 0.0
  %744 = vmatpush1.msra.mxu0 0.0
  %745 = vmatprep.subr.mxu0 0.0
  %746 = vmatpush1.msra.mxu0 0.0
  %747 = vmatprep.mubr.f32.mxu0 0.0
  %748 = vmatmul.mubr.f32.gmra.mrb[0].mxu0 %v681
  %v749 = vpop.f32.mrb[0].mxu0
  %v750 = vadd.f32 %v31, %v749
  %v751 = vpop.f32.mrb[0].mxu0
  %752 = vdwg.mxu0
  %v753 = vadd.f32 %v161, %v750
  %v754 = vmul.f32 %v753, 0.5
  %v755 = vtanh.pop %v754
  %v756 = vmul.f32 %v755, 0.5
  %v757 = vadd.f32 %v756, 0.5
  %759 = vrot.lane.b32.xlu0 %v750, 64
  %v760 = vpop.permute.xlu0 %759
  %v762 = vmul.f32 %v757, %v760
  %764 = vrot.lane.b32.xlu0 %v762, 64
  %v765 = vpop.permute.xlu0 %764
  %v767 = vadd.f32 %v161, %v765
  %v768 = vtanh.pop %v767
  %v769 = vsub.f32 1.0, %v757
  %771 = vrot.lane.b32.xlu0 %v768, 96
  %v772 = vpop.permute.xlu0 %771
  %v774 = vmul.f32 %v769, %v772
  %v775 = vmul.f32 %v757, %v675
  %v776 = vadd.f32 %v774, %v775
  %778 = vrot.lane.b32.xlu0 %v776, 96
  %v779 = vpop.permute.xlu0 %778
  %781 = vst.msk [vmem:[#allocation2 + $0x28] sm:$0xff] %vm174, %v779
  %v782 = vsel %vm174, %v779, 0
  %784 = vmatprep.subr.mxu0 0.0
  %785 = vmatpush1.msra.mxu0 %v22
  %786 = vmatprep.subr.mxu0 0.0
  %787 = vmatpush1.msra.mxu0 %v23
  %788 = vmatprep.subr.mxu0 0.0
  %789 = vmatpush1.msra.mxu0 %v24
  %790 = vmatprep.subr.mxu0 0.0
  %791 = vmatpush1.msra.mxu0 %v25
  %792 = vmatprep.subr.mxu0 0.0
  %793 = vmatpush1.msra.mxu0 0.0
  %794 = vmatprep.subr.mxu0 0.0
  %795 = vmatpush1.msra.mxu0 0.0
  %796 = vmatprep.subr.mxu0 0.0
  %797 = vmatpush1.msra.mxu0 0.0
  %798 = vmatprep.subr.mxu0 0.0
  %799 = vmatpush1.msra.mxu0 0.0
  %800 = vmatprep.subr.mxu0 0.0
  %801 = vmatpush1.msra.mxu0 0.0
  %802 = vmatprep.subr.mxu0 0.0
  %803 = vmatpush1.msra.mxu0 0.0
  %804 = vmatprep.subr.mxu0 0.0
  %805 = vmatpush1.msra.mxu0 0.0
  %806 = vmatprep.subr.mxu0 0.0
  %807 = vmatpush1.msra.mxu0 0.0
  %808 = vmatprep.subr.mxu0 0.0
  %809 = vmatpush1.msra.mxu0 0.0
  %810 = vmatprep.subr.mxu0 0.0
  %811 = vmatpush1.msra.mxu0 0.0
  %812 = vmatprep.subr.mxu0 0.0
  %813 = vmatpush1.msra.mxu0 0.0
  %814 = vmatprep.subr.mxu0 0.0
  %815 = vmatpush1.msra.mxu0 0.0
  %816 = vmatprep.subr.mxu0 0.0
  %817 = vmatpush1.msra.mxu0 0.0
  %818 = vmatprep.subr.mxu0 0.0
  %819 = vmatpush1.msra.mxu0 0.0
  %820 = vmatprep.subr.mxu0 0.0
  %821 = vmatpush1.msra.mxu0 0.0
  %822 = vmatprep.subr.mxu0 0.0
  %823 = vmatpush1.msra.mxu0 0.0
  %824 = vmatprep.subr.mxu0 0.0
  %825 = vmatpush1.msra.mxu0 0.0
  %826 = vmatprep.subr.mxu0 0.0
  %827 = vmatpush1.msra.mxu0 0.0
  %828 = vmatprep.subr.mxu0 0.0
  %829 = vmatpush1.msra.mxu0 0.0
  %830 = vmatprep.subr.mxu0 0.0
  %831 = vmatpush1.msra.mxu0 0.0
  %832 = vmatprep.subr.mxu0 0.0
  %833 = vmatpush1.msra.mxu0 0.0
  %834 = vmatprep.subr.mxu0 0.0
  %835 = vmatpush1.msra.mxu0 0.0
  %836 = vmatprep.subr.mxu0 0.0
  %837 = vmatpush1.msra.mxu0 0.0
  %838 = vmatprep.subr.mxu0 0.0
  %839 = vmatpush1.msra.mxu0 0.0
  %840 = vmatprep.subr.mxu0 0.0
  %841 = vmatpush1.msra.mxu0 0.0
  %842 = vmatprep.subr.mxu0 0.0
  %843 = vmatpush1.msra.mxu0 0.0
  %844 = vmatprep.subr.mxu0 0.0
  %845 = vmatpush1.msra.mxu0 0.0
  %846 = vmatprep.subr.mxu0 0.0
  %847 = vmatpush1.msra.mxu0 0.0
  %848 = vmatprep.mubr.f32.mxu0 0.0
  %849 = vmatmul.mubr.f32.gmra.mrb[0].mxu0 %v782
  %v850 = vpop.f32.mrb[0].mxu0
  %v851 = vadd.f32 %v31, %v850
  %v852 = vpop.f32.mrb[0].mxu0
  %853 = vdwg.mxu0
  %v854 = vadd.f32 %v166, %v851
  %v855 = vmul.f32 %v854, 0.5
  %v856 = vtanh.pop %v855
  %v857 = vmul.f32 %v856, 0.5
  %v858 = vadd.f32 %v857, 0.5
  %860 = vrot.lane.b32.xlu0 %v851, 64
  %v861 = vpop.permute.xlu0 %860
  %v863 = vmul.f32 %v858, %v861
  %865 = vrot.lane.b32.xlu0 %v863, 64
  %v866 = vpop.permute.xlu0 %865
  %v868 = vadd.f32 %v166, %v866
  %v869 = vtanh.pop %v868
  %v870 = vsub.f32 1.0, %v858
  %872 = vrot.lane.b32.xlu0 %v869, 96
  %v873 = vpop.permute.xlu0 %872
  %v875 = vmul.f32 %v870, %v873
  %v876 = vmul.f32 %v858, %v776
  %v877 = vadd.f32 %v875, %v876
  %879 = vrot.lane.b32.xlu0 %v877, 96
  %v880 = vpop.permute.xlu0 %879
  %882 = vst.msk [vmem:[#allocation2 + $0x30] sm:$0xff] %vm174, %v880
  %v883 = vsel %vm174, %v880, 0
  %885 = vmatprep.subr.mxu0 0.0
  %886 = vmatpush1.msra.mxu0 %v22
  %887 = vmatprep.subr.mxu0 0.0
  %888 = vmatpush1.msra.mxu0 %v23
  %889 = vmatprep.subr.mxu0 0.0
  %890 = vmatpush1.msra.mxu0 %v24
  %891 = vmatprep.subr.mxu0 0.0
  %892 = vmatpush1.msra.mxu0 %v25
  %893 = vmatprep.subr.mxu0 0.0
  %894 = vmatpush1.msra.mxu0 0.0
  %895 = vmatprep.subr.mxu0 0.0
  %896 = vmatpush1.msra.mxu0 0.0
  %897 = vmatprep.subr.mxu0 0.0
  %898 = vmatpush1.msra.mxu0 0.0
  %899 = vmatprep.subr.mxu0 0.0
  %900 = vmatpush1.msra.mxu0 0.0
  %901 = vmatprep.subr.mxu0 0.0
  %902 = vmatpush1.msra.mxu0 0.0
  %903 = vmatprep.subr.mxu0 0.0
  %904 = vmatpush1.msra.mxu0 0.0
  %905 = vmatprep.subr.mxu0 0.0
  %906 = vmatpush1.msra.mxu0 0.0
  %907 = vmatprep.subr.mxu0 0.0
  %908 = vmatpush1.msra.mxu0 0.0
  %909 = vmatprep.subr.mxu0 0.0
  %910 = vmatpush1.msra.mxu0 0.0
  %911 = vmatprep.subr.mxu0 0.0
  %912 = vmatpush1.msra.mxu0 0.0
  %913 = vmatprep.subr.mxu0 0.0
  %914 = vmatpush1.msra.mxu0 0.0
  %915 = vmatprep.subr.mxu0 0.0
  %916 = vmatpush1.msra.mxu0 0.0
  %917 = vmatprep.subr.mxu0 0.0
  %918 = vmatpush1.msra.mxu0 0.0
  %919 = vmatprep.subr.mxu0 0.0
  %920 = vmatpush1.msra.mxu0 0.0
  %921 = vmatprep.subr.mxu0 0.0
  %922 = vmatpush1.msra.mxu0 0.0
  %923 = vmatprep.subr.mxu0 0.0
  %924 = vmatpush1.msra.mxu0 0.0
  %925 = vmatprep.subr.mxu0 0.0
  %926 = vmatpush1.msra.mxu0 0.0
  %927 = vmatprep.subr.mxu0 0.0
  %928 = vmatpush1.msra.mxu0 0.0
  %929 = vmatprep.subr.mxu0 0.0
  %930 = vmatpush1.msra.mxu0 0.0
  %931 = vmatprep.subr.mxu0 0.0
  %932 = vmatpush1.msra.mxu0 0.0
  %933 = vmatprep.subr.mxu0 0.0
  %934 = vmatpush1.msra.mxu0 0.0
  %935 = vmatprep.subr.mxu0 0.0
  %936 = vmatpush1.msra.mxu0 0.0
  %937 = vmatprep.subr.mxu0 0.0
  %938 = vmatpush1.msra.mxu0 0.0
  %939 = vmatprep.subr.mxu0 0.0
  %940 = vmatpush1.msra.mxu0 0.0
  %941 = vmatprep.subr.mxu0 0.0
  %942 = vmatpush1.msra.mxu0 0.0
  %943 = vmatprep.subr.mxu0 0.0
  %944 = vmatpush1.msra.mxu0 0.0
  %945 = vmatprep.subr.mxu0 0.0
  %946 = vmatpush1.msra.mxu0 0.0
  %947 = vmatprep.subr.mxu0 0.0
  %948 = vmatpush1.msra.mxu0 0.0
  %949 = vmatprep.mubr.f32.mxu0 0.0
  %950 = vmatmul.mubr.f32.gmra.mrb[0].mxu0 %v883
  %v951 = vpop.f32.mrb[0].mxu0
  %v952 = vadd.f32 %v31, %v951
  %v953 = vpop.f32.mrb[0].mxu0
  %954 = vdwg.mxu0
  %v955 = vadd.f32 %v171, %v952
  %v956 = vmul.f32 %v955, 0.5
  %v957 = vtanh.pop %v956
  %v958 = vmul.f32 %v957, 0.5
  %v959 = vadd.f32 %v958, 0.5
  %961 = vrot.lane.b32.xlu0 %v952, 64
  %v962 = vpop.permute.xlu0 %961
  %v964 = vmul.f32 %v959, %v962
  %966 = vrot.lane.b32.xlu0 %v964, 64
  %v967 = vpop.permute.xlu0 %966
  %v969 = vadd.f32 %v171, %v967
  %v970 = vtanh.pop %v969
  %v971 = vsub.f32 1.0, %v959
  %973 = vrot.lane.b32.xlu0 %v970, 96
  %v974 = vpop.permute.xlu0 %973
  %v976 = vmul.f32 %v971, %v974
  %v977 = vmul.f32 %v959, %v877
  %v978 = vadd.f32 %v976, %v977
  %980 = vrot.lane.b32.xlu0 %v978, 96
  %v981 = vpop.permute.xlu0 %980
  %983 = vst.msk [vmem:[#allocation2 + $0x38] sm:$0xff] %vm174, %v981
  %v984 = vld [vmem:[%s2 + $0x70] sm:$0xff]
  %v985 = vld [vmem:[%s2 + $0x78] sm:$0xff]
  %v986 = vld [vmem:[%s2 + $0x80] sm:$0xff]
  %v987 = vld [vmem:[%s2 + $0x88] sm:$0xff]
  %v988 = vld [vmem:[%s2 + $0x90] sm:$0xff]
  %v989 = vld [vmem:[%s2 + $0x98] sm:$0xff]
  %v990 = vld [vmem:[%s2 + $0xa0] sm:$0xff]
  %v991 = vld [vmem:[%s2 + $0xa8] sm:$0xff]
  %v992 = vld [vmem:[%s2 + $0xb0] sm:$0x1]
  %v993 = vld [vmem:[%s2 + $0xb8] sm:$0x1]
  %v994 = vlaneseq
  %v995 = vshrl.u32 %v994, 7
  %v996 = vsub.s32 0, %v995
  %v997 = vrot.slane %v993, %v996
  %v998 = vld [vmem:[#allocation2] sm:$0xff]
  %v999 = vld [vmem:[#allocation2 + $0x8] sm:$0xff]
  %v1000 = vld [vmem:[#allocation2 + $0x10] sm:$0xff]
  %v1001 = vld [vmem:[#allocation2 + $0x18] sm:$0xff]
  %v1002 = vld [vmem:[#allocation2 + $0x20] sm:$0xff]
  %v1003 = vld [vmem:[#allocation2 + $0x28] sm:$0xff]
  %v1004 = vld [vmem:[#allocation2 + $0x30] sm:$0xff]
  %v1005 = vld [vmem:[#allocation2 + $0x38] sm:$0xff]
  %v1006 = vlaneseq
  %v1007 = vshrl.u32 %v1006, 7
  %v1008 = vsub.s32 0, %v1007
  %v1009 = vrot.slane %v992, %v1008
  %v1011 = vsel %vm174, %v998, 0
  %v1014 = vsel %vm174, %v999, 0
  %v1017 = vsel %vm174, %v1000, 0
  %v1020 = vsel %vm174, %v1001, 0
  %v1023 = vsel %vm174, %v1002, 0
  %v1026 = vsel %vm174, %v1003, 0
  %v1029 = vsel %vm174, %v1004, 0
  %v1032 = vsel %vm174, %v1005, 0
  %1034 = vmatprep.subr.mxu0 0.0
  %1035 = vmatpush1.msra.mxu0 %v984
  %1036 = vmatprep.subr.mxu0 0.0
  %1037 = vmatpush1.msra.mxu0 %v985
  %1038 = vmatprep.subr.mxu0 0.0
  %1039 = vmatpush1.msra.mxu0 %v986
  %1040 = vmatprep.subr.mxu0 0.0
  %1041 = vmatpush1.msra.mxu0 %v987
  %1042 = vmatprep.subr.mxu0 0.0
  %1043 = vmatpush1.msra.mxu0 0.0
  %1044 = vmatprep.subr.mxu0 0.0
  %1045 = vmatpush1.msra.mxu0 0.0
  %1046 = vmatprep.subr.mxu0 0.0
  %1047 = vmatpush1.msra.mxu0 0.0
  %1048 = vmatprep.subr.mxu0 0.0
  %1049 = vmatpush1.msra.mxu0 0.0
  %1050 = vmatprep.subr.mxu0 0.0
  %1051 = vmatpush1.msra.mxu0 0.0
  %1052 = vmatprep.subr.mxu0 0.0
  %1053 = vmatpush1.msra.mxu0 0.0
  %1054 = vmatprep.subr.mxu0 0.0
  %1055 = vmatpush1.msra.mxu0 0.0
  %1056 = vmatprep.subr.mxu0 0.0
  %1057 = vmatpush1.msra.mxu0 0.0
  %1058 = vmatprep.subr.mxu0 0.0
  %1059 = vmatpush1.msra.mxu0 0.0
  %1060 = vmatprep.subr.mxu0 0.0
  %1061 = vmatpush1.msra.mxu0 0.0
  %1062 = vmatprep.subr.mxu0 0.0
  %1063 = vmatpush1.msra.mxu0 0.0
  %1064 = vmatprep.subr.mxu0 0.0
  %1065 = vmatpush1.msra.mxu0 0.0
  %1066 = vmatprep.subr.mxu0 0.0
  %1067 = vmatpush1.msra.mxu0 0.0
  %1068 = vmatprep.subr.mxu0 0.0
  %1069 = vmatpush1.msra.mxu0 0.0
  %1070 = vmatprep.subr.mxu0 0.0
  %1071 = vmatpush1.msra.mxu0 0.0
  %1072 = vmatprep.subr.mxu0 0.0
  %1073 = vmatpush1.msra.mxu0 0.0
  %1074 = vmatprep.subr.mxu0 0.0
  %1075 = vmatpush1.msra.mxu0 0.0
  %1076 = vmatprep.subr.mxu0 0.0
  %1077 = vmatpush1.msra.mxu0 0.0
  %1078 = vmatprep.subr.mxu0 0.0
  %1079 = vmatpush1.msra.mxu0 0.0
  %1080 = vmatprep.subr.mxu0 0.0
  %1081 = vmatpush1.msra.mxu0 0.0
  %1082 = vmatprep.subr.mxu0 0.0
  %1083 = vmatpush1.msra.mxu0 0.0
  %1084 = vmatprep.subr.mxu0 0.0
  %1085 = vmatpush1.msra.mxu0 0.0
  %1086 = vmatprep.subr.mxu0 0.0
  %1087 = vmatpush1.msra.mxu0 0.0
  %1088 = vmatprep.subr.mxu0 0.0
  %1089 = vmatpush1.msra.mxu0 0.0
  %1090 = vmatprep.subr.mxu0 0.0
  %1091 = vmatpush1.msra.mxu0 0.0
  %1092 = vmatprep.subr.mxu0 0.0
  %1093 = vmatpush1.msra.mxu0 0.0
  %1094 = vmatprep.subr.mxu0 0.0
  %1095 = vmatpush1.msra.mxu0 0.0
  %1096 = vmatprep.subr.mxu0 0.0
  %1097 = vmatpush1.msra.mxu0 0.0
  %1098 = vmatprep.mubr.f32.mxu0 0.0
  %1099 = vmatmul.mubr.f32.gmra.mrb[0].mxu0 %v1011
  %v1100 = vpop.f32.mrb[0].mxu0
  %v1101 = vadd.f32 %v1009, %v1100
  %v1102 = vpop.f32.mrb[0].mxu0
  %1103 = vmatprep.mubr.f32.mxu0 0.0
  %1104 = vmatmul.mubr.f32.gmra.mrb[0].mxu0 %v1014
  %v1105 = vpop.f32.mrb[0].mxu0
  %v1106 = vadd.f32 %v1009, %v1105
  %v1107 = vpop.f32.mrb[0].mxu0
  %1108 = vmatprep.mubr.f32.mxu0 0.0
  %1109 = vmatmul.mubr.f32.gmra.mrb[0].mxu0 %v1017
  %v1110 = vpop.f32.mrb[0].mxu0
  %v1111 = vadd.f32 %v1009, %v1110
  %v1112 = vpop.f32.mrb[0].mxu0
  %1113 = vmatprep.mubr.f32.mxu0 0.0
  %1114 = vmatmul.mubr.f32.gmra.mrb[0].mxu0 %v1020
  %v1115 = vpop.f32.mrb[0].mxu0
  %v1116 = vadd.f32 %v1009, %v1115
  %v1117 = vpop.f32.mrb[0].mxu0
  %1118 = vmatprep.mubr.f32.mxu0 0.0
  %1119 = vmatmul.mubr.f32.gmra.mrb[0].mxu0 %v1023
  %v1120 = vpop.f32.mrb[0].mxu0
  %v1121 = vadd.f32 %v1009, %v1120
  %v1122 = vpop.f32.mrb[0].mxu0
  %1123 = vmatprep.mubr.f32.mxu0 0.0
  %1124 = vmatmul.mubr.f32.gmra.mrb[0].mxu0 %v1026
  %v1125 = vpop.f32.mrb[0].mxu0
  %v1126 = vadd.f32 %v1009, %v1125
  %v1127 = vpop.f32.mrb[0].mxu0
  %1128 = vmatprep.mubr.f32.mxu0 0.0
  %1129 = vmatmul.mubr.f32.gmra.mrb[0].mxu0 %v1029
  %v1130 = vpop.f32.mrb[0].mxu0
  %v1131 = vadd.f32 %v1009, %v1130
  %v1132 = vpop.f32.mrb[0].mxu0
  %1133 = vmatprep.mubr.f32.mxu0 0.0
  %1134 = vmatmul.mubr.f32.gmra.mrb[0].mxu0 %v1032
  %v1135 = vpop.f32.mrb[0].mxu0
  %v1136 = vadd.f32 %v1009, %v1135
  %v1137 = vpop.f32.mrb[0].mxu0
  %1138 = vdwg.mxu0
  %1139 = vmatprep.subr.mxu0 0.0
  %1140 = vmatpush1.msra.mxu0 %v988
  %1141 = vmatprep.subr.mxu0 0.0
  %1142 = vmatpush1.msra.mxu0 %v989
  %1143 = vmatprep.subr.mxu0 0.0
  %1144 = vmatpush1.msra.mxu0 %v990
  %1145 = vmatprep.subr.mxu0 0.0
  %1146 = vmatpush1.msra.mxu0 %v991
  %1147 = vmatprep.subr.mxu0 0.0
  %1148 = vmatpush1.msra.mxu0 0.0
  %1149 = vmatprep.subr.mxu0 0.0
  %1150 = vmatpush1.msra.mxu0 0.0
  %1151 = vmatprep.subr.mxu0 0.0
  %1152 = vmatpush1.msra.mxu0 0.0
  %1153 = vmatprep.subr.mxu0 0.0
  %1154 = vmatpush1.msra.mxu0 0.0
  %1155 = vmatprep.subr.mxu0 0.0
  %1156 = vmatpush1.msra.mxu0 0.0
  %1157 = vmatprep.subr.mxu0 0.0
  %1158 = vmatpush1.msra.mxu0 0.0
  %1159 = vmatprep.subr.mxu0 0.0
  %1160 = vmatpush1.msra.mxu0 0.0
  %1161 = vmatprep.subr.mxu0 0.0
  %1162 = vmatpush1.msra.mxu0 0.0
  %1163 = vmatprep.subr.mxu0 0.0
  %1164 = vmatpush1.msra.mxu0 0.0
  %1165 = vmatprep.subr.mxu0 0.0
  %1166 = vmatpush1.msra.mxu0 0.0
  %1167 = vmatprep.subr.mxu0 0.0
  %1168 = vmatpush1.msra.mxu0 0.0
  %1169 = vmatprep.subr.mxu0 0.0
  %1170 = vmatpush1.msra.mxu0 0.0
  %1171 = vmatprep.subr.mxu0 0.0
  %1172 = vmatpush1.msra.mxu0 0.0
  %1173 = vmatprep.subr.mxu0 0.0
  %1174 = vmatpush1.msra.mxu0 0.0
  %1175 = vmatprep.subr.mxu0 0.0
  %1176 = vmatpush1.msra.mxu0 0.0
  %1177 = vmatprep.subr.mxu0 0.0
  %1178 = vmatpush1.msra.mxu0 0.0
  %1179 = vmatprep.subr.mxu0 0.0
  %1180 = vmatpush1.msra.mxu0 0.0
  %1181 = vmatprep.subr.mxu0 0.0
  %1182 = vmatpush1.msra.mxu0 0.0
  %1183 = vmatprep.subr.mxu0 0.0
  %1184 = vmatpush1.msra.mxu0 0.0
  %1185 = vmatprep.subr.mxu0 0.0
  %1186 = vmatpush1.msra.mxu0 0.0
  %1187 = vmatprep.subr.mxu0 0.0
  %1188 = vmatpush1.msra.mxu0 0.0
  %1189 = vmatprep.subr.mxu0 0.0
  %1190 = vmatpush1.msra.mxu0 0.0
  %1191 = vmatprep.subr.mxu0 0.0
  %1192 = vmatpush1.msra.mxu0 0.0
  %1193 = vmatprep.subr.mxu0 0.0
  %1194 = vmatpush1.msra.mxu0 0.0
  %1195 = vmatprep.subr.mxu0 0.0
  %1196 = vmatpush1.msra.mxu0 0.0
  %1197 = vmatprep.subr.mxu0 0.0
  %1198 = vmatpush1.msra.mxu0 0.0
  %1199 = vmatprep.subr.mxu0 0.0
  %1200 = vmatpush1.msra.mxu0 0.0
  %1201 = vmatprep.subr.mxu0 0.0
  %1202 = vmatpush1.msra.mxu0 0.0
  %1203 = vmatprep.mubr.f32.mxu0 0.0
  %1204 = vmatmul.mubr.f32.gmra.mrb[0].mxu0 %v176
  %v1205 = vpop.f32.mrb[0].mxu0
  %v1206 = vadd.f32 %v997, %v1205
  %v1207 = vpop.f32.mrb[0].mxu0
  %1208 = vdwg.mxu0
  %v1209 = vadd.f32 %v1101, %v1206
  %v1210 = vmul.f32 %v1209, 0.5
  %v1211 = vtanh.pop %v1210
  %v1212 = vmul.f32 %v1211, 0.5
  %v1213 = vadd.f32 %v1212, 0.5
  %1215 = vrot.lane.b32.xlu0 %v1206, 64
  %v1216 = vpop.permute.xlu0 %1215
  %v1218 = vmul.f32 %v1213, %v1216
  %1220 = vrot.lane.b32.xlu0 %v1218, 64
  %v1221 = vpop.permute.xlu0 %1220
  %v1223 = vadd.f32 %v1101, %v1221
  %v1224 = vtanh.pop %v1223
  %v1225 = vsub.f32 1.0, %v1213
  %1227 = vrot.lane.b32.xlu0 %v1224, 96
  %v1228 = vpop.permute.xlu0 %1227
  %v1230 = vmul.f32 %v1225, %v1228
  %v1231 = vmul.f32 %v1213, 0.0
  %v1232 = vadd.f32 %v1230, %v1231
  %1234 = vrot.lane.b32.xlu0 %v1232, 96
  %v1235 = vpop.permute.xlu0 %1234
  %1237 = vst.msk [vmem:[#allocation2] sm:$0xff] %vm174, %v1235
  %v1238 = vsel %vm174, %v1235, 0
  %1240 = vmatprep.subr.mxu0 0.0
  %1241 = vmatpush1.msra.mxu0 %v988
  %1242 = vmatprep.subr.mxu0 0.0
  %1243 = vmatpush1.msra.mxu0 %v989
  %1244 = vmatprep.subr.mxu0 0.0
  %1245 = vmatpush1.msra.mxu0 %v990
  %1246 = vmatprep.subr.mxu0 0.0
  %1247 = vmatpush1.msra.mxu0 %v991
  %1248 = vmatprep.subr.mxu0 0.0
  %1249 = vmatpush1.msra.mxu0 0.0
  %1250 = vmatprep.subr.mxu0 0.0
  %1251 = vmatpush1.msra.mxu0 0.0
  %1252 = vmatprep.subr.mxu0 0.0
  %1253 = vmatpush1.msra.mxu0 0.0
  %1254 = vmatprep.subr.mxu0 0.0
  %1255 = vmatpush1.msra.mxu0 0.0
  %1256 = vmatprep.subr.mxu0 0.0
  %1257 = vmatpush1.msra.mxu0 0.0
  %1258 = vmatprep.subr.mxu0 0.0
  %1259 = vmatpush1.msra.mxu0 0.0
  %1260 = vmatprep.subr.mxu0 0.0
  %1261 = vmatpush1.msra.mxu0 0.0
  %1262 = vmatprep.subr.mxu0 0.0
  %1263 = vmatpush1.msra.mxu0 0.0
  %1264 = vmatprep.subr.mxu0 0.0
  %1265 = vmatpush1.msra.mxu0 0.0
  %1266 = vmatprep.subr.mxu0 0.0
  %1267 = vmatpush1.msra.mxu0 0.0
  %1268 = vmatprep.subr.mxu0 0.0
  %1269 = vmatpush1.msra.mxu0 0.0
  %1270 = vmatprep.subr.mxu0 0.0
  %1271 = vmatpush1.msra.mxu0 0.0
  %1272 = vmatprep.subr.mxu0 0.0
  %1273 = vmatpush1.msra.mxu0 0.0
  %1274 = vmatprep.subr.mxu0 0.0
  %1275 = vmatpush1.msra.mxu0 0.0
  %1276 = vmatprep.subr.mxu0 0.0
  %1277 = vmatpush1.msra.mxu0 0.0
  %1278 = vmatprep.subr.mxu0 0.0
  %1279 = vmatpush1.msra.mxu0 0.0
  %1280 = vmatprep.subr.mxu0 0.0
  %1281 = vmatpush1.msra.mxu0 0.0
  %1282 = vmatprep.subr.mxu0 0.0
  %1283 = vmatpush1.msra.mxu0 0.0
  %1284 = vmatprep.subr.mxu0 0.0
  %1285 = vmatpush1.msra.mxu0 0.0
  %1286 = vmatprep.subr.mxu0 0.0
  %1287 = vmatpush1.msra.mxu0 0.0
  %1288 = vmatprep.subr.mxu0 0.0
  %1289 = vmatpush1.msra.mxu0 0.0
  %1290 = vmatprep.subr.mxu0 0.0
  %1291 = vmatpush1.msra.mxu0 0.0
  %1292 = vmatprep.subr.mxu0 0.0
  %1293 = vmatpush1.msra.mxu0 0.0
  %1294 = vmatprep.subr.mxu0 0.0
  %1295 = vmatpush1.msra.mxu0 0.0
  %1296 = vmatprep.subr.mxu0 0.0
  %1297 = vmatpush1.msra.mxu0 0.0
  %1298 = vmatprep.subr.mxu0 0.0
  %1299 = vmatpush1.msra.mxu0 0.0
  %1300 = vmatprep.subr.mxu0 0.0
  %1301 = vmatpush1.msra.mxu0 0.0
  %1302 = vmatprep.subr.mxu0 0.0
  %1303 = vmatpush1.msra.mxu0 0.0
  %1304 = vmatprep.mubr.f32.mxu0 0.0
  %1305 = vmatmul.mubr.f32.gmra.mrb[0].mxu0 %v1238
  %v1306 = vpop.f32.mrb[0].mxu0
  %v1307 = vadd.f32 %v997, %v1306
  %v1308 = vpop.f32.mrb[0].mxu0
  %1309 = vdwg.mxu0
  %v1310 = vadd.f32 %v1106, %v1307
  %v1311 = vmul.f32 %v1310, 0.5
  %v1312 = vtanh.pop %v1311
  %v1313 = vmul.f32 %v1312, 0.5
  %v1314 = vadd.f32 %v1313, 0.5
  %1316 = vrot.lane.b32.xlu0 %v1307, 64
  %v1317 = vpop.permute.xlu0 %1316
  %v1319 = vmul.f32 %v1314, %v1317
  %1321 = vrot.lane.b32.xlu0 %v1319, 64
  %v1322 = vpop.permute.xlu0 %1321
  %v1324 = vadd.f32 %v1106, %v1322
  %v1325 = vtanh.pop %v1324
  %v1326 = vsub.f32 1.0, %v1314
  %1328 = vrot.lane.b32.xlu0 %v1325, 96
  %v1329 = vpop.permute.xlu0 %1328
  %v1331 = vmul.f32 %v1326, %v1329
  %v1332 = vmul.f32 %v1314, %v1232
  %v1333 = vadd.f32 %v1331, %v1332
  %1335 = vrot.lane.b32.xlu0 %v1333, 96
  %v1336 = vpop.permute.xlu0 %1335
  %1338 = vst.msk [vmem:[#allocation2 + $0x8] sm:$0xff] %vm174, %v1336
  %v1339 = vsel %vm174, %v1336, 0
  %1341 = vmatprep.subr.mxu0 0.0
  %1342 = vmatpush1.msra.mxu0 %v988
  %1343 = vmatprep.subr.mxu0 0.0
  %1344 = vmatpush1.msra.mxu0 %v989
  %1345 = vmatprep.subr.mxu0 0.0
  %1346 = vmatpush1.msra.mxu0 %v990
  %1347 = vmatprep.subr.mxu0 0.0
  %1348 = vmatpush1.msra.mxu0 %v991
  %1349 = vmatprep.subr.mxu0 0.0
  %1350 = vmatpush1.msra.mxu0 0.0
  %1351 = vmatprep.subr.mxu0 0.0
  %1352 = vmatpush1.msra.mxu0 0.0
  %1353 = vmatprep.subr.mxu0 0.0
  %1354 = vmatpush1.msra.mxu0 0.0
  %1355 = vmatprep.subr.mxu0 0.0
  %1356 = vmatpush1.msra.mxu0 0.0
  %1357 = vmatprep.subr.mxu0 0.0
  %1358 = vmatpush1.msra.mxu0 0.0
  %1359 = vmatprep.subr.mxu0 0.0
  %1360 = vmatpush1.msra.mxu0 0.0
  %1361 = vmatprep.subr.mxu0 0.0
  %1362 = vmatpush1.msra.mxu0 0.0
  %1363 = vmatprep.subr.mxu0 0.0
  %1364 = vmatpush1.msra.mxu0 0.0
  %1365 = vmatprep.subr.mxu0 0.0
  %1366 = vmatpush1.msra.mxu0 0.0
  %1367 = vmatprep.subr.mxu0 0.0
  %1368 = vmatpush1.msra.mxu0 0.0
  %1369 = vmatprep.subr.mxu0 0.0
  %1370 = vmatpush1.msra.mxu0 0.0
  %1371 = vmatprep.subr.mxu0 0.0
  %1372 = vmatpush1.msra.mxu0 0.0
  %1373 = vmatprep.subr.mxu0 0.0
  %1374 = vmatpush1.msra.mxu0 0.0
  %1375 = vmatprep.subr.mxu0 0.0
  %1376 = vmatpush1.msra.mxu0 0.0
  %1377 = vmatprep.subr.mxu0 0.0
  %1378 = vmatpush1.msra.mxu0 0.0
  %1379 = vmatprep.subr.mxu0 0.0
  %1380 = vmatpush1.msra.mxu0 0.0
  %1381 = vmatprep.subr.mxu0 0.0
  %1382 = vmatpush1.msra.mxu0 0.0
  %1383 = vmatprep.subr.mxu0 0.0
  %1384 = vmatpush1.msra.mxu0 0.0
  %1385 = vmatprep.subr.mxu0 0.0
  %1386 = vmatpush1.msra.mxu0 0.0
  %1387 = vmatprep.subr.mxu0 0.0
  %1388 = vmatpush1.msra.mxu0 0.0
  %1389 = vmatprep.subr.mxu0 0.0
  %1390 = vmatpush1.msra.mxu0 0.0
  %1391 = vmatprep.subr.mxu0 0.0
  %1392 = vmatpush1.msra.mxu0 0.0
  %1393 = vmatprep.subr.mxu0 0.0
  %1394 = vmatpush1.msra.mxu0 0.0
  %1395 = vmatprep.subr.mxu0 0.0
  %1396 = vmatpush1.msra.mxu0 0.0
  %1397 = vmatprep.subr.mxu0 0.0
  %1398 = vmatpush1.msra.mxu0 0.0
  %1399 = vmatprep.subr.mxu0 0.0
  %1400 = vmatpush1.msra.mxu0 0.0
  %1401 = vmatprep.subr.mxu0 0.0
  %1402 = vmatpush1.msra.mxu0 0.0
  %1403 = vmatprep.subr.mxu0 0.0
  %1404 = vmatpush1.msra.mxu0 0.0
  %1405 = vmatprep.mubr.f32.mxu0 0.0
  %1406 = vmatmul.mubr.f32.gmra.mrb[0].mxu0 %v1339
  %v1407 = vpop.f32.mrb[0].mxu0
  %v1408 = vadd.f32 %v997, %v1407
  %v1409 = vpop.f32.mrb[0].mxu0
  %1410 = vdwg.mxu0
  %v1411 = vadd.f32 %v1111, %v1408
  %v1412 = vmul.f32 %v1411, 0.5
  %v1413 = vtanh.pop %v1412
  %v1414 = vmul.f32 %v1413, 0.5
  %v1415 = vadd.f32 %v1414, 0.5
  %1417 = vrot.lane.b32.xlu0 %v1408, 64
  %v1418 = vpop.permute.xlu0 %1417
  %v1420 = vmul.f32 %v1415, %v1418
  %1422 = vrot.lane.b32.xlu0 %v1420, 64
  %v1423 = vpop.permute.xlu0 %1422
  %v1425 = vadd.f32 %v1111, %v1423
  %v1426 = vtanh.pop %v1425
  %v1427 = vsub.f32 1.0, %v1415
  %1429 = vrot.lane.b32.xlu0 %v1426, 96
  %v1430 = vpop.permute.xlu0 %1429
  %v1432 = vmul.f32 %v1427, %v1430
  %v1433 = vmul.f32 %v1415, %v1333
  %v1434 = vadd.f32 %v1432, %v1433
  %1436 = vrot.lane.b32.xlu0 %v1434, 96
  %v1437 = vpop.permute.xlu0 %1436
  %1439 = vst.msk [vmem:[#allocation2 + $0x10] sm:$0xff] %vm174, %v1437
  %v1440 = vsel %vm174, %v1437, 0
  %1442 = vmatprep.subr.mxu0 0.0
  %1443 = vmatpush1.msra.mxu0 %v988
  %1444 = vmatprep.subr.mxu0 0.0
  %1445 = vmatpush1.msra.mxu0 %v989
  %1446 = vmatprep.subr.mxu0 0.0
  %1447 = vmatpush1.msra.mxu0 %v990
  %1448 = vmatprep.subr.mxu0 0.0
  %1449 = vmatpush1.msra.mxu0 %v991
  %1450 = vmatprep.subr.mxu0 0.0
  %1451 = vmatpush1.msra.mxu0 0.0
  %1452 = vmatprep.subr.mxu0 0.0
  %1453 = vmatpush1.msra.mxu0 0.0
  %1454 = vmatprep.subr.mxu0 0.0
  %1455 = vmatpush1.msra.mxu0 0.0
  %1456 = vmatprep.subr.mxu0 0.0
  %1457 = vmatpush1.msra.mxu0 0.0
  %1458 = vmatprep.subr.mxu0 0.0
  %1459 = vmatpush1.msra.mxu0 0.0
  %1460 = vmatprep.subr.mxu0 0.0
  %1461 = vmatpush1.msra.mxu0 0.0
  %1462 = vmatprep.subr.mxu0 0.0
  %1463 = vmatpush1.msra.mxu0 0.0
  %1464 = vmatprep.subr.mxu0 0.0
  %1465 = vmatpush1.msra.mxu0 0.0
  %1466 = vmatprep.subr.mxu0 0.0
  %1467 = vmatpush1.msra.mxu0 0.0
  %1468 = vmatprep.subr.mxu0 0.0
  %1469 = vmatpush1.msra.mxu0 0.0
  %1470 = vmatprep.subr.mxu0 0.0
  %1471 = vmatpush1.msra.mxu0 0.0
  %1472 = vmatprep.subr.mxu0 0.0
  %1473 = vmatpush1.msra.mxu0 0.0
  %1474 = vmatprep.subr.mxu0 0.0
  %1475 = vmatpush1.msra.mxu0 0.0
  %1476 = vmatprep.subr.mxu0 0.0
  %1477 = vmatpush1.msra.mxu0 0.0
  %1478 = vmatprep.subr.mxu0 0.0
  %1479 = vmatpush1.msra.mxu0 0.0
  %1480 = vmatprep.subr.mxu0 0.0
  %1481 = vmatpush1.msra.mxu0 0.0
  %1482 = vmatprep.subr.mxu0 0.0
  %1483 = vmatpush1.msra.mxu0 0.0
  %1484 = vmatprep.subr.mxu0 0.0
  %1485 = vmatpush1.msra.mxu0 0.0
  %1486 = vmatprep.subr.mxu0 0.0
  %1487 = vmatpush1.msra.mxu0 0.0
  %1488 = vmatprep.subr.mxu0 0.0
  %1489 = vmatpush1.msra.mxu0 0.0
  %1490 = vmatprep.subr.mxu0 0.0
  %1491 = vmatpush1.msra.mxu0 0.0
  %1492 = vmatprep.subr.mxu0 0.0
  %1493 = vmatpush1.msra.mxu0 0.0
  %1494 = vmatprep.subr.mxu0 0.0
  %1495 = vmatpush1.msra.mxu0 0.0
  %1496 = vmatprep.subr.mxu0 0.0
  %1497 = vmatpush1.msra.mxu0 0.0
  %1498 = vmatprep.subr.mxu0 0.0
  %1499 = vmatpush1.msra.mxu0 0.0
  %1500 = vmatprep.subr.mxu0 0.0
  %1501 = vmatpush1.msra.mxu0 0.0
  %1502 = vmatprep.subr.mxu0 0.0
  %1503 = vmatpush1.msra.mxu0 0.0
  %1504 = vmatprep.subr.mxu0 0.0
  %1505 = vmatpush1.msra.mxu0 0.0
  %1506 = vmatprep.mubr.f32.mxu0 0.0
  %1507 = vmatmul.mubr.f32.gmra.mrb[0].mxu0 %v1440
  %v1508 = vpop.f32.mrb[0].mxu0
  %v1509 = vadd.f32 %v997, %v1508
  %v1510 = vpop.f32.mrb[0].mxu0
  %1511 = vdwg.mxu0
  %v1512 = vadd.f32 %v1116, %v1509
  %v1513 = vmul.f32 %v1512, 0.5
  %v1514 = vtanh.pop %v1513
  %v1515 = vmul.f32 %v1514, 0.5
  %v1516 = vadd.f32 %v1515, 0.5
  %1518 = vrot.lane.b32.xlu0 %v1509, 64
  %v1519 = vpop.permute.xlu0 %1518
  %v1521 = vmul.f32 %v1516, %v1519
  %1523 = vrot.lane.b32.xlu0 %v1521, 64
  %v1524 = vpop.permute.xlu0 %1523
  %v1526 = vadd.f32 %v1116, %v1524
  %v1527 = vtanh.pop %v1526
  %v1528 = vsub.f32 1.0, %v1516
  %1530 = vrot.lane.b32.xlu0 %v1527, 96
  %v1531 = vpop.permute.xlu0 %1530
  %v1533 = vmul.f32 %v1528, %v1531
  %v1534 = vmul.f32 %v1516, %v1434
  %v1535 = vadd.f32 %v1533, %v1534
  %1537 = vrot.lane.b32.xlu0 %v1535, 96
  %v1538 = vpop.permute.xlu0 %1537
  %1540 = vst.msk [vmem:[#allocation2 + $0x18] sm:$0xff] %vm174, %v1538
  %v1541 = vsel %vm174, %v1538, 0
  %1543 = vmatprep.subr.mxu0 0.0
  %1544 = vmatpush1.msra.mxu0 %v988
  %1545 = vmatprep.subr.mxu0 0.0
  %1546 = vmatpush1.msra.mxu0 %v989
  %1547 = vmatprep.subr.mxu0 0.0
  %1548 = vmatpush1.msra.mxu0 %v990
  %1549 = vmatprep.subr.mxu0 0.0
  %1550 = vmatpush1.msra.mxu0 %v991
  %1551 = vmatprep.subr.mxu0 0.0
  %1552 = vmatpush1.msra.mxu0 0.0
  %1553 = vmatprep.subr.mxu0 0.0
  %1554 = vmatpush1.msra.mxu0 0.0
  %1555 = vmatprep.subr.mxu0 0.0
  %1556 = vmatpush1.msra.mxu0 0.0
  %1557 = vmatprep.subr.mxu0 0.0
  %1558 = vmatpush1.msra.mxu0 0.0
  %1559 = vmatprep.subr.mxu0 0.0
  %1560 = vmatpush1.msra.mxu0 0.0
  %1561 = vmatprep.subr.mxu0 0.0
  %1562 = vmatpush1.msra.mxu0 0.0
  %1563 = vmatprep.subr.mxu0 0.0
  %1564 = vmatpush1.msra.mxu0 0.0
  %1565 = vmatprep.subr.mxu0 0.0
  %1566 = vmatpush1.msra.mxu0 0.0
  %1567 = vmatprep.subr.mxu0 0.0
  %1568 = vmatpush1.msra.mxu0 0.0
  %1569 = vmatprep.subr.mxu0 0.0
  %1570 = vmatpush1.msra.mxu0 0.0
  %1571 = vmatprep.subr.mxu0 0.0
  %1572 = vmatpush1.msra.mxu0 0.0
  %1573 = vmatprep.subr.mxu0 0.0
  %1574 = vmatpush1.msra.mxu0 0.0
  %1575 = vmatprep.subr.mxu0 0.0
  %1576 = vmatpush1.msra.mxu0 0.0
  %1577 = vmatprep.subr.mxu0 0.0
  %1578 = vmatpush1.msra.mxu0 0.0
  %1579 = vmatprep.subr.mxu0 0.0
  %1580 = vmatpush1.msra.mxu0 0.0
  %1581 = vmatprep.subr.mxu0 0.0
  %1582 = vmatpush1.msra.mxu0 0.0
  %1583 = vmatprep.subr.mxu0 0.0
  %1584 = vmatpush1.msra.mxu0 0.0
  %1585 = vmatprep.subr.mxu0 0.0
  %1586 = vmatpush1.msra.mxu0 0.0
  %1587 = vmatprep.subr.mxu0 0.0
  %1588 = vmatpush1.msra.mxu0 0.0
  %1589 = vmatprep.subr.mxu0 0.0
  %1590 = vmatpush1.msra.mxu0 0.0
  %1591 = vmatprep.subr.mxu0 0.0
  %1592 = vmatpush1.msra.mxu0 0.0
  %1593 = vmatprep.subr.mxu0 0.0
  %1594 = vmatpush1.msra.mxu0 0.0
  %1595 = vmatprep.subr.mxu0 0.0
  %1596 = vmatpush1.msra.mxu0 0.0
  %1597 = vmatprep.subr.mxu0 0.0
  %1598 = vmatpush1.msra.mxu0 0.0
  %1599 = vmatprep.subr.mxu0 0.0
  %1600 = vmatpush1.msra.mxu0 0.0
  %1601 = vmatprep.subr.mxu0 0.0
  %1602 = vmatpush1.msra.mxu0 0.0
  %1603 = vmatprep.subr.mxu0 0.0
  %1604 = vmatpush1.msra.mxu0 0.0
  %1605 = vmatprep.subr.mxu0 0.0
  %1606 = vmatpush1.msra.mxu0 0.0
  %1607 = vmatprep.mubr.f32.mxu0 0.0
  %1608 = vmatmul.mubr.f32.gmra.mrb[0].mxu0 %v1541
  %v1609 = vpop.f32.mrb[0].mxu0
  %v1610 = vadd.f32 %v997, %v1609
  %v1611 = vpop.f32.mrb[0].mxu0
  %1612 = vdwg.mxu0
  %v1613 = vadd.f32 %v1121, %v1610
  %v1614 = vmul.f32 %v1613, 0.5
  %v1615 = vtanh.pop %v1614
  %v1616 = vmul.f32 %v1615, 0.5
  %v1617 = vadd.f32 %v1616, 0.5
  %1619 = vrot.lane.b32.xlu0 %v1610, 64
  %v1620 = vpop.permute.xlu0 %1619
  %v1622 = vmul.f32 %v1617, %v1620
  %1624 = vrot.lane.b32.xlu0 %v1622, 64
  %v1625 = vpop.permute.xlu0 %1624
  %v1627 = vadd.f32 %v1121, %v1625
  %v1628 = vtanh.pop %v1627
  %v1629 = vsub.f32 1.0, %v1617
  %1631 = vrot.lane.b32.xlu0 %v1628, 96
  %v1632 = vpop.permute.xlu0 %1631
  %v1634 = vmul.f32 %v1629, %v1632
  %v1635 = vmul.f32 %v1617, %v1535
  %v1636 = vadd.f32 %v1634, %v1635
  %1638 = vrot.lane.b32.xlu0 %v1636, 96
  %v1639 = vpop.permute.xlu0 %1638
  %1641 = vst.msk [vmem:[#allocation2 + $0x20] sm:$0xff] %vm174, %v1639
  %v1642 = vsel %vm174, %v1639, 0
  %1644 = vmatprep.subr.mxu0 0.0
  %1645 = vmatpush1.msra.mxu0 %v988
  %1646 = vmatprep.subr.mxu0 0.0
  %1647 = vmatpush1.msra.mxu0 %v989
  %1648 = vmatprep.subr.mxu0 0.0
  %1649 = vmatpush1.msra.mxu0 %v990
  %1650 = vmatprep.subr.mxu0 0.0
  %1651 = vmatpush1.msra.mxu0 %v991
  %1652 = vmatprep.subr.mxu0 0.0
  %1653 = vmatpush1.msra.mxu0 0.0
  %1654 = vmatprep.subr.mxu0 0.0
  %1655 = vmatpush1.msra.mxu0 0.0
  %1656 = vmatprep.subr.mxu0 0.0
  %1657 = vmatpush1.msra.mxu0 0.0
  %1658 = vmatprep.subr.mxu0 0.0
  %1659 = vmatpush1.msra.mxu0 0.0
  %1660 = vmatprep.subr.mxu0 0.0
  %1661 = vmatpush1.msra.mxu0 0.0
  %1662 = vmatprep.subr.mxu0 0.0
  %1663 = vmatpush1.msra.mxu0 0.0
  %1664 = vmatprep.subr.mxu0 0.0
  %1665 = vmatpush1.msra.mxu0 0.0
  %1666 = vmatprep.subr.mxu0 0.0
  %1667 = vmatpush1.msra.mxu0 0.0
  %1668 = vmatprep.subr.mxu0 0.0
  %1669 = vmatpush1.msra.mxu0 0.0
  %1670 = vmatprep.subr.mxu0 0.0
  %1671 = vmatpush1.msra.mxu0 0.0
  %1672 = vmatprep.subr.mxu0 0.0
  %1673 = vmatpush1.msra.mxu0 0.0
  %1674 = vmatprep.subr.mxu0 0.0
  %1675 = vmatpush1.msra.mxu0 0.0
  %1676 = vmatprep.subr.mxu0 0.0
  %1677 = vmatpush1.msra.mxu0 0.0
  %1678 = vmatprep.subr.mxu0 0.0
  %1679 = vmatpush1.msra.mxu0 0.0
  %1680 = vmatprep.subr.mxu0 0.0
  %1681 = vmatpush1.msra.mxu0 0.0
  %1682 = vmatprep.subr.mxu0 0.0
  %1683 = vmatpush1.msra.mxu0 0.0
  %1684 = vmatprep.subr.mxu0 0.0
  %1685 = vmatpush1.msra.mxu0 0.0
  %1686 = vmatprep.subr.mxu0 0.0
  %1687 = vmatpush1.msra.mxu0 0.0
  %1688 = vmatprep.subr.mxu0 0.0
  %1689 = vmatpush1.msra.mxu0 0.0
  %1690 = vmatprep.subr.mxu0 0.0
  %1691 = vmatpush1.msra.mxu0 0.0
  %1692 = vmatprep.subr.mxu0 0.0
  %1693 = vmatpush1.msra.mxu0 0.0
  %1694 = vmatprep.subr.mxu0 0.0
  %1695 = vmatpush1.msra.mxu0 0.0
  %1696 = vmatprep.subr.mxu0 0.0
  %1697 = vmatpush1.msra.mxu0 0.0
  %1698 = vmatprep.subr.mxu0 0.0
  %1699 = vmatpush1.msra.mxu0 0.0
  %1700 = vmatprep.subr.mxu0 0.0
  %1701 = vmatpush1.msra.mxu0 0.0
  %1702 = vmatprep.subr.mxu0 0.0
  %1703 = vmatpush1.msra.mxu0 0.0
  %1704 = vmatprep.subr.mxu0 0.0
  %1705 = vmatpush1.msra.mxu0 0.0
  %1706 = vmatprep.subr.mxu0 0.0
  %1707 = vmatpush1.msra.mxu0 0.0
  %1708 = vmatprep.mubr.f32.mxu0 0.0
  %1709 = vmatmul.mubr.f32.gmra.mrb[0].mxu0 %v1642
  %v1710 = vpop.f32.mrb[0].mxu0
  %v1711 = vadd.f32 %v997, %v1710
  %v1712 = vpop.f32.mrb[0].mxu0
  %1713 = vdwg.mxu0
  %v1714 = vadd.f32 %v1126, %v1711
  %v1715 = vmul.f32 %v1714, 0.5
  %v1716 = vtanh.pop %v1715
  %v1717 = vmul.f32 %v1716, 0.5
  %v1718 = vadd.f32 %v1717, 0.5
  %1720 = vrot.lane.b32.xlu0 %v1711, 64
  %v1721 = vpop.permute.xlu0 %1720
  %v1723 = vmul.f32 %v1718, %v1721
  %1725 = vrot.lane.b32.xlu0 %v1723, 64
  %v1726 = vpop.permute.xlu0 %1725
  %v1728 = vadd.f32 %v1126, %v1726
  %v1729 = vtanh.pop %v1728
  %v1730 = vsub.f32 1.0, %v1718
  %1732 = vrot.lane.b32.xlu0 %v1729, 96
  %v1733 = vpop.permute.xlu0 %1732
  %v1735 = vmul.f32 %v1730, %v1733
  %v1736 = vmul.f32 %v1718, %v1636
  %v1737 = vadd.f32 %v1735, %v1736
  %1739 = vrot.lane.b32.xlu0 %v1737, 96
  %v1740 = vpop.permute.xlu0 %1739
  %1742 = vst.msk [vmem:[#allocation2 + $0x28] sm:$0xff] %vm174, %v1740
  %v1743 = vsel %vm174, %v1740, 0
  %1745 = vmatprep.subr.mxu0 0.0
  %1746 = vmatpush1.msra.mxu0 %v988
  %1747 = vmatprep.subr.mxu0 0.0
  %1748 = vmatpush1.msra.mxu0 %v989
  %1749 = vmatprep.subr.mxu0 0.0
  %1750 = vmatpush1.msra.mxu0 %v990
  %1751 = vmatprep.subr.mxu0 0.0
  %1752 = vmatpush1.msra.mxu0 %v991
  %1753 = vmatprep.subr.mxu0 0.0
  %1754 = vmatpush1.msra.mxu0 0.0
  %1755 = vmatprep.subr.mxu0 0.0
  %1756 = vmatpush1.msra.mxu0 0.0
  %1757 = vmatprep.subr.mxu0 0.0
  %1758 = vmatpush1.msra.mxu0 0.0
  %1759 = vmatprep.subr.mxu0 0.0
  %1760 = vmatpush1.msra.mxu0 0.0
  %1761 = vmatprep.subr.mxu0 0.0
  %1762 = vmatpush1.msra.mxu0 0.0
  %1763 = vmatprep.subr.mxu0 0.0
  %1764 = vmatpush1.msra.mxu0 0.0
  %1765 = vmatprep.subr.mxu0 0.0
  %1766 = vmatpush1.msra.mxu0 0.0
  %1767 = vmatprep.subr.mxu0 0.0
  %1768 = vmatpush1.msra.mxu0 0.0
  %1769 = vmatprep.subr.mxu0 0.0
  %1770 = vmatpush1.msra.mxu0 0.0
  %1771 = vmatprep.subr.mxu0 0.0
  %1772 = vmatpush1.msra.mxu0 0.0
  %1773 = vmatprep.subr.mxu0 0.0
  %1774 = vmatpush1.msra.mxu0 0.0
  %1775 = vmatprep.subr.mxu0 0.0
  %1776 = vmatpush1.msra.mxu0 0.0
  %1777 = vmatprep.subr.mxu0 0.0
  %1778 = vmatpush1.msra.mxu0 0.0
  %1779 = vmatprep.subr.mxu0 0.0
  %1780 = vmatpush1.msra.mxu0 0.0
  %1781 = vmatprep.subr.mxu0 0.0
  %1782 = vmatpush1.msra.mxu0 0.0
  %1783 = vmatprep.subr.mxu0 0.0
  %1784 = vmatpush1.msra.mxu0 0.0
  %1785 = vmatprep.subr.mxu0 0.0
  %1786 = vmatpush1.msra.mxu0 0.0
  %1787 = vmatprep.subr.mxu0 0.0
  %1788 = vmatpush1.msra.mxu0 0.0
  %1789 = vmatprep.subr.mxu0 0.0
  %1790 = vmatpush1.msra.mxu0 0.0
  %1791 = vmatprep.subr.mxu0 0.0
  %1792 = vmatpush1.msra.mxu0 0.0
  %1793 = vmatprep.subr.mxu0 0.0
  %1794 = vmatpush1.msra.mxu0 0.0
  %1795 = vmatprep.subr.mxu0 0.0
  %1796 = vmatpush1.msra.mxu0 0.0
  %1797 = vmatprep.subr.mxu0 0.0
  %1798 = vmatpush1.msra.mxu0 0.0
  %1799 = vmatprep.subr.mxu0 0.0
  %1800 = vmatpush1.msra.mxu0 0.0
  %1801 = vmatprep.subr.mxu0 0.0
  %1802 = vmatpush1.msra.mxu0 0.0
  %1803 = vmatprep.subr.mxu0 0.0
  %1804 = vmatpush1.msra.mxu0 0.0
  %1805 = vmatprep.subr.mxu0 0.0
  %1806 = vmatpush1.msra.mxu0 0.0
  %1807 = vmatprep.subr.mxu0 0.0
  %1808 = vmatpush1.msra.mxu0 0.0
  %1809 = vmatprep.mubr.f32.mxu0 0.0
  %1810 = vmatmul.mubr.f32.gmra.mrb[0].mxu0 %v1743
  %v1811 = vpop.f32.mrb[0].mxu0
  %v1812 = vadd.f32 %v997, %v1811
  %v1813 = vpop.f32.mrb[0].mxu0
  %1814 = vdwg.mxu0
  %v1815 = vadd.f32 %v1131, %v1812
  %v1816 = vmul.f32 %v1815, 0.5
  %v1817 = vtanh.pop %v1816
  %v1818 = vmul.f32 %v1817, 0.5
  %v1819 = vadd.f32 %v1818, 0.5
  %1821 = vrot.lane.b32.xlu0 %v1812, 64
  %v1822 = vpop.permute.xlu0 %1821
  %v1824 = vmul.f32 %v1819, %v1822
  %1826 = vrot.lane.b32.xlu0 %v1824, 64
  %v1827 = vpop.permute.xlu0 %1826
  %v1829 = vadd.f32 %v1131, %v1827
  %v1830 = vtanh.pop %v1829
  %v1831 = vsub.f32 1.0, %v1819
  %1833 = vrot.lane.b32.xlu0 %v1830, 96
  %v1834 = vpop.permute.xlu0 %1833
  %v1836 = vmul.f32 %v1831, %v1834
  %v1837 = vmul.f32 %v1819, %v1737
  %v1838 = vadd.f32 %v1836, %v1837
  %1840 = vrot.lane.b32.xlu0 %v1838, 96
  %v1841 = vpop.permute.xlu0 %1840
  %1843 = vst.msk [vmem:[#allocation2 + $0x30] sm:$0xff] %vm174, %v1841
  %v1844 = vsel %vm174, %v1841, 0
  %1846 = vmatprep.subr.mxu0 0.0
  %1847 = vmatpush1.msra.mxu0 %v988
  %1848 = vmatprep.subr.mxu0 0.0
  %1849 = vmatpush1.msra.mxu0 %v989
  %1850 = vmatprep.subr.mxu0 0.0
  %1851 = vmatpush1.msra.mxu0 %v990
  %1852 = vmatprep.subr.mxu0 0.0
  %1853 = vmatpush1.msra.mxu0 %v991
  %1854 = vmatprep.subr.mxu0 0.0
  %1855 = vmatpush1.msra.mxu0 0.0
  %1856 = vmatprep.subr.mxu0 0.0
  %1857 = vmatpush1.msra.mxu0 0.0
  %1858 = vmatprep.subr.mxu0 0.0
  %1859 = vmatpush1.msra.mxu0 0.0
  %1860 = vmatprep.subr.mxu0 0.0
  %1861 = vmatpush1.msra.mxu0 0.0
  %1862 = vmatprep.subr.mxu0 0.0
  %1863 = vmatpush1.msra.mxu0 0.0
  %1864 = vmatprep.subr.mxu0 0.0
  %1865 = vmatpush1.msra.mxu0 0.0
  %1866 = vmatprep.subr.mxu0 0.0
  %1867 = vmatpush1.msra.mxu0 0.0
  %1868 = vmatprep.subr.mxu0 0.0
  %1869 = vmatpush1.msra.mxu0 0.0
  %1870 = vmatprep.subr.mxu0 0.0
  %1871 = vmatpush1.msra.mxu0 0.0
  %1872 = vmatprep.subr.mxu0 0.0
  %1873 = vmatpush1.msra.mxu0 0.0
  %1874 = vmatprep.subr.mxu0 0.0
  %1875 = vmatpush1.msra.mxu0 0.0
  %1876 = vmatprep.subr.mxu0 0.0
  %1877 = vmatpush1.msra.mxu0 0.0
  %1878 = vmatprep.subr.mxu0 0.0
  %1879 = vmatpush1.msra.mxu0 0.0
  %1880 = vmatprep.subr.mxu0 0.0
  %1881 = vmatpush1.msra.mxu0 0.0
  %1882 = vmatprep.subr.mxu0 0.0
  %1883 = vmatpush1.msra.mxu0 0.0
  %1884 = vmatprep.subr.mxu0 0.0
  %1885 = vmatpush1.msra.mxu0 0.0
  %1886 = vmatprep.subr.mxu0 0.0
  %1887 = vmatpush1.msra.mxu0 0.0
  %1888 = vmatprep.subr.mxu0 0.0
  %1889 = vmatpush1.msra.mxu0 0.0
  %1890 = vmatprep.subr.mxu0 0.0
  %1891 = vmatpush1.msra.mxu0 0.0
  %1892 = vmatprep.subr.mxu0 0.0
  %1893 = vmatpush1.msra.mxu0 0.0
  %1894 = vmatprep.subr.mxu0 0.0
  %1895 = vmatpush1.msra.mxu0 0.0
  %1896 = vmatprep.subr.mxu0 0.0
  %1897 = vmatpush1.msra.mxu0 0.0
  %1898 = vmatprep.subr.mxu0 0.0
  %1899 = vmatpush1.msra.mxu0 0.0
  %1900 = vmatprep.subr.mxu0 0.0
  %1901 = vmatpush1.msra.mxu0 0.0
  %1902 = vmatprep.subr.mxu0 0.0
  %1903 = vmatpush1.msra.mxu0 0.0
  %1904 = vmatprep.subr.mxu0 0.0
  %1905 = vmatpush1.msra.mxu0 0.0
  %1906 = vmatprep.subr.mxu0 0.0
  %1907 = vmatpush1.msra.mxu0 0.0
  %1908 = vmatprep.subr.mxu0 0.0
  %1909 = vmatpush1.msra.mxu0 0.0
  %1910 = vmatprep.mubr.f32.mxu0 0.0
  %1911 = vmatmul.mubr.f32.gmra.mrb[0].mxu0 %v1844
  %v1912 = vpop.f32.mrb[0].mxu0
  %v1913 = vadd.f32 %v997, %v1912
  %v1914 = vpop.f32.mrb[0].mxu0
  %1915 = vdwg.mxu0
  %v1916 = vadd.f32 %v1136, %v1913
  %v1917 = vmul.f32 %v1916, 0.5
  %v1918 = vtanh.pop %v1917
  %v1919 = vmul.f32 %v1918, 0.5
  %v1920 = vadd.f32 %v1919, 0.5
  %1922 = vrot.lane.b32.xlu0 %v1913, 64
  %v1923 = vpop.permute.xlu0 %1922
  %v1925 = vmul.f32 %v1920, %v1923
  %1927 = vrot.lane.b32.xlu0 %v1925, 64
  %v1928 = vpop.permute.xlu0 %1927
  %v1930 = vadd.f32 %v1136, %v1928
  %v1931 = vtanh.pop %v1930
  %v1932 = vsub.f32 1.0, %v1920
  %1934 = vrot.lane.b32.xlu0 %v1931, 96
  %v1935 = vpop.permute.xlu0 %1934
  %v1937 = vmul.f32 %v1932, %v1935
  %v1938 = vmul.f32 %v1920, %v1838
  %v1939 = vadd.f32 %v1937, %v1938
  %1941 = vrot.lane.b32.xlu0 %v1939, 96
  %v1942 = vpop.permute.xlu0 %1941
  %1944 = vst.msk [vmem:[#allocation2 + $0x38] sm:$0xff] %vm174, %v1942
  %v1945 = vld [vmem:[%s1] sm:$0xff]
  %v1946 = vld [vmem:[%s1 + $0x8] sm:$0xff]
  %v1947 = vld [vmem:[%s1 + $0x10] sm:$0xff]
  %v1948 = vld [vmem:[%s1 + $0x18] sm:$0xff]
  %v1949 = vld [vmem:[%s1 + $0x20] sm:$0xff]
  %v1950 = vld [vmem:[%s1 + $0x28] sm:$0xff]
  %v1951 = vld [vmem:[%s1 + $0x30] sm:$0xff]
  %v1952 = vld [vmem:[%s1 + $0x38] sm:$0xff]
  %v1953 = vld [vmem:[#allocation2] sm:$0xff]
  %v1954 = vld [vmem:[#allocation2 + $0x8] sm:$0xff]
  %v1955 = vld [vmem:[#allocation2 + $0x10] sm:$0xff]
  %v1956 = vld [vmem:[#allocation2 + $0x18] sm:$0xff]
  %v1957 = vld [vmem:[#allocation2 + $0x20] sm:$0xff]
  %v1958 = vld [vmem:[#allocation2 + $0x28] sm:$0xff]
  %v1959 = vld [vmem:[#allocation2 + $0x30] sm:$0xff]
  %v1960 = vld [vmem:[#allocation2 + $0x38] sm:$0xff]
  %v1961 = vld [vmem:[%s2 + $0xc0] sm:$0xff]
  %v1962 = vld [vmem:[%s2 + $0xc8] sm:$0xff]
  %v1963 = vld [vmem:[%s2 + $0xd0] sm:$0xff]
  %v1964 = vld [vmem:[%s2 + $0xd8] sm:$0xff]
  %v1965 = vld [vmem:[%s2 + $0xe0] sm:$0xff]
  %v1966 = vld [vmem:[%s2 + $0xe8] sm:$0xff]
  %v1967 = vld [vmem:[%s2 + $0xf0] sm:$0xff]
  %v1968 = vld [vmem:[%s2 + $0xf8] sm:$0xff]
  %v1969 = vld [vmem:[%s2 + $0x100] sm:$0xff]
  %v1970 = vld [vmem:[%s2 + $0x108] sm:$0xff]
  %v1971 = vld [vmem:[%s2 + $0x110] sm:$0xff]
  %v1972 = vld [vmem:[%s2 + $0x118] sm:$0xff]
  %v1974 = vsel %vm44, %v1945, 0
  %v1977 = vsel %vm44, %v1946, 0
  %v1980 = vsel %vm44, %v1947, 0
  %v1983 = vsel %vm44, %v1948, 0
  %v1986 = vsel %vm44, %v1949, 0
  %v1989 = vsel %vm44, %v1950, 0
  %v1992 = vsel %vm44, %v1951, 0
  %v1995 = vsel %vm44, %v1952, 0
  %1997 = vmatprep.subr.mxu0 0.0
  %1998 = vmatpush1.msra.mxu0 %v1965
  %1999 = vmatprep.subr.mxu0 0.0
  %2000 = vmatpush1.msra.mxu0 %v1966
  %2001 = vmatprep.subr.mxu0 0.0
  %2002 = vmatpush1.msra.mxu0 %v1967
  %2003 = vmatprep.subr.mxu0 0.0
  %2004 = vmatpush1.msra.mxu0 %v1968
  %2005 = vmatprep.subr.mxu0 0.0
  %2006 = vmatpush1.msra.mxu0 %v1969
  %2007 = vmatprep.subr.mxu0 0.0
  %2008 = vmatpush1.msra.mxu0 %v1970
  %2009 = vmatprep.subr.mxu0 0.0
  %2010 = vmatpush1.msra.mxu0 %v1971
  %2011 = vmatprep.subr.mxu0 0.0
  %2012 = vmatpush1.msra.mxu0 %v1972
  %2013 = vmatprep.subr.mxu0 0.0
  %2014 = vmatpush1.msra.mxu0 0.0
  %2015 = vmatprep.subr.mxu0 0.0
  %2016 = vmatpush1.msra.mxu0 0.0
  %2017 = vmatprep.subr.mxu0 0.0
  %2018 = vmatpush1.msra.mxu0 0.0
  %2019 = vmatprep.subr.mxu0 0.0
  %2020 = vmatpush1.msra.mxu0 0.0
  %2021 = vmatprep.subr.mxu0 0.0
  %2022 = vmatpush1.msra.mxu0 0.0
  %2023 = vmatprep.subr.mxu0 0.0
  %2024 = vmatpush1.msra.mxu0 0.0
  %2025 = vmatprep.subr.mxu0 0.0
  %2026 = vmatpush1.msra.mxu0 0.0
  %2027 = vmatprep.subr.mxu0 0.0
  %2028 = vmatpush1.msra.mxu0 0.0
  %2029 = vmatprep.subr.mxu0 0.0
  %2030 = vmatpush1.msra.mxu0 0.0
  %2031 = vmatprep.subr.mxu0 0.0
  %2032 = vmatpush1.msra.mxu0 0.0
  %2033 = vmatprep.subr.mxu0 0.0
  %2034 = vmatpush1.msra.mxu0 0.0
  %2035 = vmatprep.subr.mxu0 0.0
  %2036 = vmatpush1.msra.mxu0 0.0
  %2037 = vmatprep.subr.mxu0 0.0
  %2038 = vmatpush1.msra.mxu0 0.0
  %2039 = vmatprep.subr.mxu0 0.0
  %2040 = vmatpush1.msra.mxu0 0.0
  %2041 = vmatprep.subr.mxu0 0.0
  %2042 = vmatpush1.msra.mxu0 0.0
  %2043 = vmatprep.subr.mxu0 0.0
  %2044 = vmatpush1.msra.mxu0 0.0
  %2045 = vmatprep.subr.mxu0 0.0
  %2046 = vmatpush1.msra.mxu0 0.0
  %2047 = vmatprep.subr.mxu0 0.0
  %2048 = vmatpush1.msra.mxu0 0.0
  %2049 = vmatprep.subr.mxu0 0.0
  %2050 = vmatpush1.msra.mxu0 0.0
  %2051 = vmatprep.subr.mxu0 0.0
  %2052 = vmatpush1.msra.mxu0 0.0
  %2053 = vmatprep.subr.mxu0 0.0
  %2054 = vmatpush1.msra.mxu0 0.0
  %2055 = vmatprep.subr.mxu0 0.0
  %2056 = vmatpush1.msra.mxu0 0.0
  %2057 = vmatprep.subr.mxu0 0.0
  %2058 = vmatpush1.msra.mxu0 0.0
  %2059 = vmatprep.subr.mxu0 0.0
  %2060 = vmatpush1.msra.mxu0 0.0
  %2061 = vmatprep.mubr.f32.mxu0 0.0
  %2062 = vmatmul.mubr.f32.gmra.mrb[0].mxu0 %v1974
  %v2063 = vpop.f32.mrb[0].mxu0
  %v2064 = vadd.f32 0.0, %v2063
  %v2065 = vpop.f32.mrb[0].mxu0
  %2066 = vmatprep.mubr.f32.mxu0 0.0
  %2067 = vmatmul.mubr.f32.gmra.mrb[0].mxu0 %v1977
  %v2068 = vpop.f32.mrb[0].mxu0
  %v2069 = vadd.f32 0.0, %v2068
  %v2070 = vpop.f32.mrb[0].mxu0
  %2071 = vmatprep.mubr.f32.mxu0 0.0
  %2072 = vmatmul.mubr.f32.gmra.mrb[0].mxu0 %v1980
  %v2073 = vpop.f32.mrb[0].mxu0
  %v2074 = vadd.f32 0.0, %v2073
  %v2075 = vpop.f32.mrb[0].mxu0
  %2076 = vmatprep.mubr.f32.mxu0 0.0
  %2077 = vmatmul.mubr.f32.gmra.mrb[0].mxu0 %v1983
  %v2078 = vpop.f32.mrb[0].mxu0
  %v2079 = vadd.f32 0.0, %v2078
  %v2080 = vpop.f32.mrb[0].mxu0
  %2081 = vmatprep.mubr.f32.mxu0 0.0
  %2082 = vmatmul.mubr.f32.gmra.mrb[0].mxu0 %v1986
  %v2083 = vpop.f32.mrb[0].mxu0
  %v2084 = vadd.f32 0.0, %v2083
  %v2085 = vpop.f32.mrb[0].mxu0
  %2086 = vmatprep.mubr.f32.mxu0 0.0
  %2087 = vmatmul.mubr.f32.gmra.mrb[0].mxu0 %v1989
  %v2088 = vpop.f32.mrb[0].mxu0
  %v2089 = vadd.f32 0.0, %v2088
  %v2090 = vpop.f32.mrb[0].mxu0
  %2091 = vmatprep.mubr.f32.mxu0 0.0
  %2092 = vmatmul.mubr.f32.gmra.mrb[0].mxu0 %v1992
  %v2093 = vpop.f32.mrb[0].mxu0
  %v2094 = vadd.f32 0.0, %v2093
  %v2095 = vpop.f32.mrb[0].mxu0
  %2096 = vmatprep.mubr.f32.mxu0 0.0
  %2097 = vmatmul.mubr.f32.gmra.mrb[0].mxu0 %v1995
  %v2098 = vpop.f32.mrb[0].mxu0
  %v2099 = vadd.f32 0.0, %v2098
  %v2100 = vpop.f32.mrb[0].mxu0
  %2101 = vdwg.mxu0
  %v2103 = vsel %vm174, %v1953, 0
  %v2106 = vsel %vm174, %v1954, 0
  %v2109 = vsel %vm174, %v1955, 0
  %v2112 = vsel %vm174, %v1956, 0
  %v2115 = vsel %vm174, %v1957, 0
  %v2118 = vsel %vm174, %v1958, 0
  %v2121 = vsel %vm174, %v1959, 0
  %v2124 = vsel %vm174, %v1960, 0
  %2126 = vmatprep.subr.mxu0 0.0
  %2127 = vmatpush1.msra.mxu0 %v1961
  %2128 = vmatprep.subr.mxu0 0.0
  %2129 = vmatpush1.msra.mxu0 %v1962
  %2130 = vmatprep.subr.mxu0 0.0
  %2131 = vmatpush1.msra.mxu0 %v1963
  %2132 = vmatprep.subr.mxu0 0.0
  %2133 = vmatpush1.msra.mxu0 %v1964
  %2134 = vmatprep.subr.mxu0 0.0
  %2135 = vmatpush1.msra.mxu0 0.0
  %2136 = vmatprep.subr.mxu0 0.0
  %2137 = vmatpush1.msra.mxu0 0.0
  %2138 = vmatprep.subr.mxu0 0.0
  %2139 = vmatpush1.msra.mxu0 0.0
  %2140 = vmatprep.subr.mxu0 0.0
  %2141 = vmatpush1.msra.mxu0 0.0
  %2142 = vmatprep.subr.mxu0 0.0
  %2143 = vmatpush1.msra.mxu0 0.0
  %2144 = vmatprep.subr.mxu0 0.0
  %2145 = vmatpush1.msra.mxu0 0.0
  %2146 = vmatprep.subr.mxu0 0.0
  %2147 = vmatpush1.msra.mxu0 0.0
  %2148 = vmatprep.subr.mxu0 0.0
  %2149 = vmatpush1.msra.mxu0 0.0
  %2150 = vmatprep.subr.mxu0 0.0
  %2151 = vmatpush1.msra.mxu0 0.0
  %2152 = vmatprep.subr.mxu0 0.0
  %2153 = vmatpush1.msra.mxu0 0.0
  %2154 = vmatprep.subr.mxu0 0.0
  %2155 = vmatpush1.msra.mxu0 0.0
  %2156 = vmatprep.subr.mxu0 0.0
  %2157 = vmatpush1.msra.mxu0 0.0
  %2158 = vmatprep.subr.mxu0 0.0
  %2159 = vmatpush1.msra.mxu0 0.0
  %2160 = vmatprep.subr.mxu0 0.0
  %2161 = vmatpush1.msra.mxu0 0.0
  %2162 = vmatprep.subr.mxu0 0.0
  %2163 = vmatpush1.msra.mxu0 0.0
  %2164 = vmatprep.subr.mxu0 0.0
  %2165 = vmatpush1.msra.mxu0 0.0
  %2166 = vmatprep.subr.mxu0 0.0
  %2167 = vmatpush1.msra.mxu0 0.0
  %2168 = vmatprep.subr.mxu0 0.0
  %2169 = vmatpush1.msra.mxu0 0.0
  %2170 = vmatprep.subr.mxu0 0.0
  %2171 = vmatpush1.msra.mxu0 0.0
  %2172 = vmatprep.subr.mxu0 0.0
  %2173 = vmatpush1.msra.mxu0 0.0
  %2174 = vmatprep.subr.mxu0 0.0
  %2175 = vmatpush1.msra.mxu0 0.0
  %2176 = vmatprep.subr.mxu0 0.0
  %2177 = vmatpush1.msra.mxu0 0.0
  %2178 = vmatprep.subr.mxu0 0.0
  %2179 = vmatpush1.msra.mxu0 0.0
  %2180 = vmatprep.subr.mxu0 0.0
  %2181 = vmatpush1.msra.mxu0 0.0
  %2182 = vmatprep.subr.mxu0 0.0
  %2183 = vmatpush1.msra.mxu0 0.0
  %2184 = vmatprep.subr.mxu0 0.0
  %2185 = vmatpush1.msra.mxu0 0.0
  %2186 = vmatprep.subr.mxu0 0.0
  %2187 = vmatpush1.msra.mxu0 0.0
  %2188 = vmatprep.subr.mxu0 0.0
  %2189 = vmatpush1.msra.mxu0 0.0
  %2190 = vmatprep.mubr.f32.mxu0 0.0
  %2191 = vmatmul.mubr.f32.gmra.mrb[0].mxu0 %v2103
  %v2192 = vpop.f32.mrb[0].mxu0
  %v2193 = vadd.f32 %v2064, %v2192
  %v2194 = vpop.f32.mrb[0].mxu0
  %2195 = vmatprep.mubr.f32.mxu0 0.0
  %2196 = vmatmul.mubr.f32.gmra.mrb[0].mxu0 %v2106
  %v2197 = vpop.f32.mrb[0].mxu0
  %v2198 = vadd.f32 %v2069, %v2197
  %v2199 = vpop.f32.mrb[0].mxu0
  %2200 = vmatprep.mubr.f32.mxu0 0.0
  %2201 = vmatmul.mubr.f32.gmra.mrb[0].mxu0 %v2109
  %v2202 = vpop.f32.mrb[0].mxu0
  %v2203 = vadd.f32 %v2074, %v2202
  %v2204 = vpop.f32.mrb[0].mxu0
  %2205 = vmatprep.mubr.f32.mxu0 0.0
  %2206 = vmatmul.mubr.f32.gmra.mrb[0].mxu0 %v2112
  %v2207 = vpop.f32.mrb[0].mxu0
  %v2208 = vadd.f32 %v2079, %v2207
  %v2209 = vpop.f32.mrb[0].mxu0
  %2210 = vmatprep.mubr.f32.mxu0 0.0
  %2211 = vmatmul.mubr.f32.gmra.mrb[0].mxu0 %v2115
  %v2212 = vpop.f32.mrb[0].mxu0
  %v2213 = vadd.f32 %v2084, %v2212
  %v2214 = vpop.f32.mrb[0].mxu0
  %2215 = vmatprep.mubr.f32.mxu0 0.0
  %2216 = vmatmul.mubr.f32.gmra.mrb[0].mxu0 %v2118
  %v2217 = vpop.f32.mrb[0].mxu0
  %v2218 = vadd.f32 %v2089, %v2217
  %v2219 = vpop.f32.mrb[0].mxu0
  %2220 = vmatprep.mubr.f32.mxu0 0.0
  %2221 = vmatmul.mubr.f32.gmra.mrb[0].mxu0 %v2121
  %v2222 = vpop.f32.mrb[0].mxu0
  %v2223 = vadd.f32 %v2094, %v2222
  %v2224 = vpop.f32.mrb[0].mxu0
  %2225 = vmatprep.mubr.f32.mxu0 0.0
  %2226 = vmatmul.mubr.f32.gmra.mrb[0].mxu0 %v2124
  %v2227 = vpop.f32.mrb[0].mxu0
  %v2228 = vadd.f32 %v2099, %v2227
  %v2229 = vpop.f32.mrb[0].mxu0
  %2230 = vdwg.mxu0
  %v2231 = vld [vmem:[%s2 + $0x120] sm:$0x1]
  %v2232 = vlaneseq
  %v2233 = vshrl.u32 %v2232, 7
  %v2234 = vsub.s32 0, %v2233
  %v2235 = vrot.slane %v2231, %v2234
  %v2236 = vadd.f32 %v2193, %v2235
  %v2237 = vadd.f32 %v2198, %v2235
  %v2238 = vadd.f32 %v2203, %v2235
  %v2239 = vadd.f32 %v2208, %v2235
  %v2240 = vadd.f32 %v2213, %v2235
  %v2241 = vadd.f32 %v2218, %v2235
  %v2242 = vadd.f32 %v2223, %v2235
  %v2243 = vadd.f32 %v2228, %v2235
  %v2244 = vmax.f32 %v2236, 0.0
  %v2245 = vmax.f32 %v2237, 0.0
  %v2246 = vmax.f32 %v2238, 0.0
  %v2247 = vmax.f32 %v2239, 0.0
  %v2248 = vmax.f32 %v2240, 0.0
  %v2249 = vmax.f32 %v2241, 0.0
  %v2250 = vmax.f32 %v2242, 0.0
  %v2251 = vmax.f32 %v2243, 0.0
  %v2252 = vld [vmem:[%s2 + $0x128] sm:$0x1]
  %v2253 = vlaneseq
  %v2254 = vshrl.u32 %v2253, 7
  %v2255 = vsub.s32 0, %v2254
  %v2256 = vrot.slane %v2252, %v2255
  %v2257 = vmul.f32 %v2244, %v2256
  %v2258 = vmul.f32 %v2245, %v2256
  %v2259 = vmul.f32 %v2246, %v2256
  %v2260 = vmul.f32 %v2247, %v2256
  %v2261 = vmul.f32 %v2248, %v2256
  %v2262 = vmul.f32 %v2249, %v2256
  %v2263 = vmul.f32 %v2250, %v2256
  %v2264 = vmul.f32 %v2251, %v2256
  %v2265 = vsel %vm174, %v2257, 0.0
  %2266 = vadd.xlane.f32.xlu0 %v2265
  %v2267 = vpop.xlane.xlu0 %2266
  %v2268 = vsel %vm174, %v2258, 0.0
  %2269 = vadd.xlane.f32.xlu0 %v2268
  %v2270 = vpop.xlane.xlu0 %2269
  %v2271 = vsel %vm174, %v2259, 0.0
  %2272 = vadd.xlane.f32.xlu0 %v2271
  %v2273 = vpop.xlane.xlu0 %2272
  %v2274 = vsel %vm174, %v2260, 0.0
  %2275 = vadd.xlane.f32.xlu0 %v2274
  %v2276 = vpop.xlane.xlu0 %2275
  %v2277 = vsel %vm174, %v2261, 0.0
  %2278 = vadd.xlane.f32.xlu0 %v2277
  %v2279 = vpop.xlane.xlu0 %2278
  %v2280 = vsel %vm174, %v2262, 0.0
  %2281 = vadd.xlane.f32.xlu0 %v2280
  %v2282 = vpop.xlane.xlu0 %2281
  %v2283 = vsel %vm174, %v2263, 0.0
  %2284 = vadd.xlane.f32.xlu0 %v2283
  %v2285 = vpop.xlane.xlu0 %2284
  %v2286 = vsel %vm174, %v2264, 0.0
  %2287 = vadd.xlane.f32.xlu0 %v2286
  %v2288 = vpop.xlane.xlu0 %2287
  %v2289 = vld [vmem:[%s2 + $0x130] sm:$0x1]
  %v2290 = vlaneseq
  %v2291 = vshrl.u32 %v2290, 7
  %v2292 = vsub.s32 0, %v2291
  %v2293 = vrot.slane %v2289, %v2292
  %v2294 = vadd.f32 %v2267, %v2293
  %v2295 = vadd.f32 %v2270, %v2293
  %v2296 = vadd.f32 %v2273, %v2293
  %v2297 = vadd.f32 %v2276, %v2293
  %v2298 = vadd.f32 %v2279, %v2293
  %v2299 = vadd.f32 %v2282, %v2293
  %v2300 = vadd.f32 %v2285, %v2293
  %v2301 = vadd.f32 %v2288, %v2293
  %v2302 = vmul.f32 %v2294, 0.5
  %v2303 = vmul.f32 %v2295, 0.5
  %v2304 = vmul.f32 %v2296, 0.5
  %v2305 = vmul.f32 %v2297, 0.5
  %v2306 = vmul.f32 %v2298, 0.5
  %v2307 = vmul.f32 %v2299, 0.5
  %v2308 = vmul.f32 %v2300, 0.5
  %v2309 = vmul.f32 %v2301, 0.5
  %v2310 = vtanh.pop %v2302
  %v2311 = vtanh.pop %v2303
  %v2312 = vtanh.pop %v2304
  %v2313 = vtanh.pop %v2305
  %v2314 = vtanh.pop %v2306
  %v2315 = vtanh.pop %v2307
  %v2316 = vtanh.pop %v2308
  %v2317 = vtanh.pop %v2309
  %v2318 = vmul.f32 %v2310, 0.5
  %v2319 = vmul.f32 %v2311, 0.5
  %v2320 = vmul.f32 %v2312, 0.5
  %v2321 = vmul.f32 %v2313, 0.5
  %v2322 = vmul.f32 %v2314, 0.5
  %v2323 = vmul.f32 %v2315, 0.5
  %v2324 = vmul.f32 %v2316, 0.5
  %v2325 = vmul.f32 %v2317, 0.5
  %v2326 = vadd.f32 %v2318, 0.5
  %v2327 = vadd.f32 %v2319, 0.5
  %v2328 = vadd.f32 %v2320, 0.5
  %v2329 = vadd.f32 %v2321, 0.5
  %v2330 = vadd.f32 %v2322, 0.5
  %v2331 = vadd.f32 %v2323, 0.5
  %v2332 = vadd.f32 %v2324, 0.5
  %v2333 = vadd.f32 %v2325, 0.5
  %vm2334 = vcmask 7168
  %2335 = vst.msk [vmem:[%s3] sm:$0xff] %vm2334, %v2326
  %2336 = vst.msk [vmem:[%s3 + $0x8] sm:$0xff] %vm2334, %v2327
  %2337 = vst.msk [vmem:[%s3 + $0x10] sm:$0xff] %vm2334, %v2328
  %2338 = vst.msk [vmem:[%s3 + $0x18] sm:$0xff] %vm2334, %v2329
  %2339 = vst.msk [vmem:[%s3 + $0x20] sm:$0xff] %vm2334, %v2330
  %2340 = vst.msk [vmem:[%s3 + $0x28] sm:$0xff] %vm2334, %v2331
  %2341 = vst.msk [vmem:[%s3 + $0x30] sm:$0xff] %vm2334, %v2332
  %2342 = vst.msk [vmem:[%s3 + $0x38] sm:$0xff] %vm2334, %v2333
  // Predicated region
  $region14: #{discriminator_forward.1} parent=0 // pred_check
    _
  $region15: #{discriminator_forward.1} parent=0 // pred_check_branch
    %2344 = sbr.rel (0) target = $region17
  $region16: #{discriminator_forward.1} parent=0 // pred_region
    _
  $region17: #{discriminator_forward.1} parent=0 // pred_fallthru
    _
  // Predicated region
  $region18: #{discriminator_forward.1} parent=0 // pred_check
    _
  $region19: #{discriminator_forward.1} parent=0 // pred_check_branch
    %2346 = sbr.rel (0) target = $region21
  $region20: #{discriminator_forward.1} parent=0 // pred_region
    _
  $region21: #{discriminator_forward.1} parent=0 // pred_fallthru
    _

</llo_original>
